<compile_context>
chip_gen: v7x
topology: tpu7x:2x2x1
jax: 0.10.0
libtpu: 0.0.40
codegen_flags: <defaults>
</compile_context>

<pallas_src>
import functools

import jax
import jax.numpy as jnp
import numpy as np
from jax.experimental import pallas as pl
from jax.experimental.pallas import tpu as pltpu


# ----------------------------- tiling helpers -----------------------------

def _pick_tile(dim, cap, align):
    """Largest tile <= cap that divides dim and is a multiple of `align`;
    falls back to the full dim (always legal per Mosaic's block rule)."""
    if dim <= cap:
        return dim
    t = (cap // align) * align
    while t >= align:
        if dim % t == 0:
            return t
        t -= align
    return dim


def _pick_batch_block(N, L, row_cap=512):
    """Number of whole batches per SDPA grid step (rows = nb*L, sublane aligned)."""
    max_nb = max(1, min(N, row_cap // max(L, 1)))
    for nb in range(max_nb, 0, -1):
        if N % nb == 0 and (nb * L) % 8 == 0:
            return nb
    return N  # full-dim block (always legal)


# ----------------------------- kernel 1: tiled matmul + bias -----------------------------

def _matmul_bias_kernel(x_ref, w_ref, b_ref, o_ref, acc_ref, *, relu):
    @pl.when(pl.program_id(2) == 0)
    def _init():
        acc_ref[...] = jnp.zeros_like(acc_ref)

    acc_ref[...] += jnp.dot(x_ref[...], w_ref[...],
                            preferred_element_type=jnp.float32)

    @pl.when(pl.program_id(2) == pl.num_programs(2) - 1)
    def _finish():
        y = acc_ref[...] + b_ref[...]
        if relu:
            y = jnp.maximum(y, 0.0)
        o_ref[...] = y.astype(o_ref.dtype)


def matmul_bias(x, w, b, *, relu=False, tm_cap=256, tn_cap=256, tk_cap=512):
    """y = x @ w + b (optionally ReLU). x:(M,K) w:(K,N) b:(N,). Tiled & pipelined."""
    M, K = x.shape
    N = w.shape[1]
    tm = _pick_tile(M, tm_cap, 8)
    tn = _pick_tile(N, tn_cap, 128)
    tk = _pick_tile(K, tk_cap, 128)
    grid = (M // tm, N // tn, K // tk)
    return pl.pallas_call(
        functools.partial(_matmul_bias_kernel, relu=relu),
        out_shape=jax.ShapeDtypeStruct((M, N), jnp.float32),
        grid=grid,
        in_specs=[
            pl.BlockSpec((tm, tk), lambda i, j, k: (i, k)),
            pl.BlockSpec((tk, tn), lambda i, j, k: (k, j)),
            pl.BlockSpec((1, tn), lambda i, j, k: (0, j)),
        ],
        out_specs=pl.BlockSpec((tm, tn), lambda i, j, k: (i, j)),
        scratch_shapes=[pltpu.VMEM((tm, tn), jnp.float32)],
        compiler_params=pltpu.CompilerParams(
            dimension_semantics=("parallel", "parallel", "arbitrary")),
    )(x, w, b.reshape(1, N))


# --------------- kernel 2: SDPA + head-merge + out_proj + residual + LayerNorm1 ---------------

def _sdpa_outproj_ln_kernel(qkv_ref, res_ref, w_ref, b_ref, g_ref, beta_ref,
                            attn_ref, y_ref, hbuf_ref,
                            *, scale, L, H, D, E, nb, eps):
    # Per-(batch, head) attention; merged heads land in VMEM scratch (never HBM).
    for b in range(nb):
        rows = pl.ds(b * L, L)
        for h in range(H):
            q = qkv_ref[rows, pl.ds(h * D, D)] * scale            # (L, D)
            k = qkv_ref[rows, pl.ds(E + h * D, D)]                # (L, D)
            v = qkv_ref[rows, pl.ds(2 * E + h * D, D)]            # (L, D)
            s = jax.lax.dot_general(q, k, (((1,), (1,)), ((), ())),
                                    preferred_element_type=jnp.float32)   # q k^T, no transpose copy
            s = s - jnp.max(s, axis=-1, keepdims=True)
            p = jnp.exp(s)
            denom = jnp.sum(p, axis=-1, keepdims=True)            # (L, 1)
            o = jnp.dot(p, v, preferred_element_type=jnp.float32)  # (L, D)
            # normalize AFTER PV: L*D elementwise; reciprocal on EUP slot
            hbuf_ref[rows, pl.ds(h * D, D)] = o * pl.reciprocal(denom)

    # one lane-dense (rows, E) @ (E, E) out-projection on the merged heads
    a = jnp.dot(hbuf_ref[...], w_ref[...],
                preferred_element_type=jnp.float32) + b_ref[...]
    attn_ref[...] = a.astype(attn_ref.dtype)                      # needed again by the 2nd residual

    z = a + res_ref[...]
    mean = jnp.mean(z, axis=-1, keepdims=True)
    var = jnp.mean((z - mean) ** 2, axis=-1, keepdims=True)       # biased, like torch LN
    zn = (z - mean) * jax.lax.rsqrt(var + eps)
    y_ref[...] = (zn * g_ref[...] + beta_ref[...]).astype(y_ref.dtype)


def sdpa_outproj_add_ln(qkv, res, w, bias, gamma, beta, *, L, H, D, eps=1e-5):
    """qkv:(N*L, 3E) batch-major, res:(N*L, E).  Returns (attn_output, LN1(attn+res))."""
    M, threeE = qkv.shape
    E = threeE // 3
    N = M // L
    nb = _pick_batch_block(N, L)
    rows = nb * L
    scale = 1.0 / float(np.sqrt(D))
    row = lambda i: (i, 0)
    const = lambda i: (0, 0)
    return pl.pallas_call(
        functools.partial(_sdpa_outproj_ln_kernel, scale=scale,
                          L=L, H=H, D=D, E=E, nb=nb, eps=eps),
        out_shape=(jax.ShapeDtypeStruct((M, E), jnp.float32),
                   jax.ShapeDtypeStruct((M, E), jnp.float32)),
        grid=(N // nb,),
        in_specs=[
            pl.BlockSpec((rows, threeE), row),   # qkv (q,k,v sliced in-kernel)
            pl.BlockSpec((rows, E), row),        # residual x
            pl.BlockSpec((E, E), const),         # out_proj weight (in, out)
            pl.BlockSpec((1, E), const),         # out_proj bias
            pl.BlockSpec((1, E), const),         # ln1 gamma
            pl.BlockSpec((1, E), const),         # ln1 beta
        ],
        out_specs=(pl.BlockSpec((rows, E), row), pl.BlockSpec((rows, E), row)),
        scratch_shapes=[pltpu.VMEM((rows, E), jnp.float32)],
        compiler_params=pltpu.CompilerParams(dimension_semantics=("parallel",)),
    )(qkv, res, w, bias.reshape(1, E), gamma.reshape(1, E), beta.reshape(1, E))


# ----------------------------- kernel 3: FFN + Linear + residual + LayerNorm2 -----------------------------

def _ffn_ln_kernel(x_ref, attn_ref, w1_ref, b1_ref, w2_ref, b2_ref,
                   w3_ref, b3_ref, g_ref, beta_ref, o_ref, *, eps):
    h = jnp.dot(x_ref[...], w1_ref[...],
                preferred_element_type=jnp.float32) + b1_ref[...]
    h = jnp.maximum(h, 0.0)
    h = jnp.dot(h, w2_ref[...],
                preferred_element_type=jnp.float32) + b2_ref[...]
    h = jnp.maximum(h, 0.0)
    h = jnp.dot(h, w3_ref[...],
                preferred_element_type=jnp.float32) + b3_ref[...]
    z = h + attn_ref[...]
    mean = jnp.mean(z, axis=-1, keepdims=True)
    var = jnp.mean((z - mean) ** 2, axis=-1, keepdims=True)
    zn = (z - mean) * jax.lax.rsqrt(var + eps)
    o_ref[...] = (zn * g_ref[...] + beta_ref[...]).astype(o_ref.dtype)


def ffn_linear_add_ln(x, attn, w1, b1, w2, b2, w3, b3, gamma, beta,
                      *, eps=1e-5, tm_cap=256):
    M, E = x.shape
    HID = w1.shape[1]
    tm = _pick_tile(M, tm_cap, 8)
    row = lambda i: (i, 0)
    const = lambda i: (0, 0)
    return pl.pallas_call(
        functools.partial(_ffn_ln_kernel, eps=eps),
        out_shape=jax.ShapeDtypeStruct((M, E), jnp.float32),
        grid=(M // tm,),
        in_specs=[
            pl.BlockSpec((tm, E), row),
            pl.BlockSpec((tm, E), row),
            pl.BlockSpec((E, HID), const),
            pl.BlockSpec((1, HID), const),
            pl.BlockSpec((HID, E), const),
            pl.BlockSpec((1, E), const),
            pl.BlockSpec((E, E), const),
            pl.BlockSpec((1, E), const),
            pl.BlockSpec((1, E), const),
            pl.BlockSpec((1, E), const),
        ],
        out_specs=pl.BlockSpec((tm, E), row),
        compiler_params=pltpu.CompilerParams(dimension_semantics=("parallel",)),
    )(x, attn, w1, b1.reshape(1, HID), w2, b2.reshape(1, E),
      w3, b3.reshape(1, E), gamma.reshape(1, E), beta.reshape(1, E))


# ------------------------------ model wrapper ------------------------------

def init_params(key, E, H, hidden):
    """Parameters in PyTorch layout (out_features, in_features)."""
    ks = jax.random.split(key, 10)
    s = 0.05
    return {
        "in_proj_w": jax.random.normal(ks[0], (3 * E, E), jnp.float32) * s,
        "in_proj_b": jax.random.normal(ks[1], (3 * E,), jnp.float32) * s,
        "out_proj_w": jax.random.normal(ks[2], (E, E), jnp.float32) * s,
        "out_proj_b": jax.random.normal(ks[3], (E,), jnp.float32) * s,
        "w1": jax.random.normal(ks[4], (hidden, E), jnp.float32) * s,
        "b1": jax.random.normal(ks[5], (hidden,), jnp.float32) * s,
        "w2": jax.random.normal(ks[6], (E, hidden), jnp.float32) * s,
        "b2": jax.random.normal(ks[7], (E,), jnp.float32) * s,
        "w3": jax.random.normal(ks[8], (E, E), jnp.float32) * s,
        "b3": jax.random.normal(ks[9], (E,), jnp.float32) * s,
        "ln1_g": jnp.ones((E,), jnp.float32),
        "ln1_b": jnp.zeros((E,), jnp.float32),
        "ln2_g": jnp.ones((E,), jnp.float32),
        "ln2_b": jnp.zeros((E,), jnp.float32),
    }


def prepare_params(p):
    """Transpose weights ONCE to (in, out) layout for the kernels."""
    return {
        "w_qkv": jnp.asarray(p["in_proj_w"].T),   # (E, 3E)
        "b_qkv": p["in_proj_b"],
        "w_out": jnp.asarray(p["out_proj_w"].T),  # (E, E)
        "b_out": p["out_proj_b"],
        "w1": jnp.asarray(p["w1"].T), "b1": p["b1"],   # (E, HID)
        "w2": jnp.asarray(p["w2"].T), "b2": p["b2"],   # (HID, E)
        "w3": jnp.asarray(p["w3"].T), "b3": p["b3"],   # (E, E)
        "ln1_g": p["ln1_g"], "ln1_b": p["ln1_b"],
        "ln2_g": p["ln2_g"], "ln2_b": p["ln2_b"],
    }


def sent_mha_attn(x, params, num_heads):
    """x: (L, N, E) float32 -> (L, N, E) float32 (kernel params from prepare_params)."""
    L, N, E = x.shape
    H = num_heads
    D = E // H
    M = L * N

    # batch-major rows: row n*L + l  <->  (l, n).  One cheap XLA transpose in,
    # one out; everything in between is pure Pallas with zero layout glue.
    x_bm = x.transpose(1, 0, 2).reshape(M, E)

    # --- fused in-projection: qkv = x @ W_in^T + b_in  (tiled/pipelined matmul) ---
    qkv = matmul_bias(x_bm, params["w_qkv"], params["b_qkv"])          # (M, 3E)

    # --- SDPA + head merge + out_proj + residual + LayerNorm1 (one fused kernel) ---
    attn, x1 = sdpa_outproj_add_ln(qkv, x_bm, params["w_out"], params["b_out"],
                                   params["ln1_g"], params["ln1_b"],
                                   L=L, H=H, D=D)

    # --- ffnn (Linear+ReLU, Linear+ReLU) + linear + LayerNorm2(h + attn) (one fused kernel) ---
    out_bm = ffn_linear_add_ln(x1, attn,
                               params["w1"], params["b1"],
                               params["w2"], params["b2"],
                               params["w3"], params["b3"],
                               params["ln2_g"], params["ln2_b"])
    return out_bm.reshape(N, L, E).transpose(1, 0, 2)


# ------------------------------ pure-JAX reference ------------------------------

def sent_mha_attn_ref(x, p, num_heads):
    L, N, E = x.shape
    H = num_heads
    D = E // H
    scale = 1.0 / float(np.sqrt(D))
    x2 = x.reshape(L * N, E)
    qkv = x2 @ p["in_proj_w"].T + p["in_proj_b"]
    q, k, v = jnp.split(qkv, 3, axis=-1)
    sh = lambda t: t.reshape(L, N * H, D).transpose(1, 0, 2)
    qh, kh, vh = sh(q), sh(k), sh(v)
    s = jnp.einsum("bld,bmd->blm", qh, kh) * scale
    pmat = jax.nn.softmax(s, axis=-1)
    ah = jnp.einsum("blm,bmd->bld", pmat, vh)
    attn = ah.transpose(1, 0, 2).reshape(L * N, E) @ p["out_proj_w"].T + p["out_proj_b"]

    def ln(t, g, b, eps=1e-5):
        m = jnp.mean(t, axis=-1, keepdims=True)
        var = jnp.mean((t - m) ** 2, axis=-1, keepdims=True)
        return (t - m) / jnp.sqrt(var + eps) * g + b

    x1 = ln(attn + x2, p["ln1_g"], p["ln1_b"])
    h = jax.nn.relu(x1 @ p["w1"].T + p["b1"])
    h = jax.nn.relu(h @ p["w2"].T + p["b2"])
    h = h @ p["w3"].T + p["b3"]
    out = ln(h + attn, p["ln2_g"], p["ln2_b"])
    return out.reshape(L, N, E)


# ----------------------------------- main -----------------------------------

if __name__ == "__main__":
    L, N = 8, 2               # seq_len, batch (small test sizes)
    E, H, HID = 256, 4, 512   # module defaults: lane-dense E, D=64 per head

    key = jax.random.PRNGKey(0)
    kx, kp = jax.random.split(key)
    x = jax.random.normal(kx, (L, N, E), jnp.float32)

    torch_layout_params = init_params(kp, E, H, HID)
    kernel_params = prepare_params(torch_layout_params)   # one-time weight transpose

    fwd = jax.jit(functools.partial(sent_mha_attn, num_heads=H))
    out = jax.block_until_ready(fwd(x, kernel_params))

    ref = sent_mha_attn_ref(x, torch_layout_params, num_heads=H)
    np.testing.assert_allclose(np.asarray(out), np.asarray(ref), rtol=1e-4, atol=1e-4)

    print("KERNEL_OK")
</pallas_src>

<mosaic_0001>
module attributes {stable_mosaic.version = 11 : i64} {
  func.func @_matmul_bias_kernel(%arg0: i32, %arg1: i32, %arg2: i32, %arg3: memref<16x256xf32, #tpu.memory_space<vmem>>, %arg4: memref<256x256xf32, #tpu.memory_space<vmem>>, %arg5: memref<1x256xf32, #tpu.memory_space<vmem>>, %arg6: memref<16x256xf32, #tpu.memory_space<vmem>>, %arg7: memref<16x256xf32, #tpu.memory_space<vmem>>) attributes {dimension_semantics = [#tpu.dimension_semantics<parallel>, #tpu.dimension_semantics<parallel>, #tpu.dimension_semantics<arbitrary>], iteration_bounds = array<i64: 1, 3, 1>, scalar_prefetch = 0 : i64, scratch_operands = 1 : i64, tpu.core_type = #tpu.core_type<tc>, window_params = [{transform_indices = @transform_0, window_bounds = array<i64: 16, 256>}, {transform_indices = @transform_1, window_bounds = array<i64: 256, 256>}, {transform_indices = @transform_2, window_bounds = array<i64: 1, 256>}, {transform_indices = @transform_3, window_bounds = array<i64: 16, 256>}]} {
    %c0_i32 = arith.constant 0 : i32
    %0 = arith.cmpi eq, %arg2, %c0_i32 : i32
    %1 = arith.extui %0 : i1 to i32
    %c0_i32_0 = arith.constant 0 : i32
    %2 = arith.cmpi ne, %1, %c0_i32_0 : i32
    scf.if %2 {
      %cst_10 = arith.constant 0.000000e+00 : f32
      %12 = vector.broadcast %cst_10 : f32 to vector<16x256xf32>
      %c0_11 = arith.constant 0 : index
      %c0_12 = arith.constant 0 : index
      %13 = vector.load %arg7[%c0_11, %c0_12] : memref<16x256xf32, #tpu.memory_space<vmem>>, vector<16x256xf32>
      tpu.vector_store %arg7[%c0_11, %c0_12], %12 {strides = array<i32>} : memref<16x256xf32, #tpu.memory_space<vmem>>, vector<16x256xf32>,
    } else {
    }
    %c0 = arith.constant 0 : index
    %c0_1 = arith.constant 0 : index
    %3 = vector.load %arg7[%c0, %c0_1] : memref<16x256xf32, #tpu.memory_space<vmem>>, vector<16x256xf32>
    %c0_2 = arith.constant 0 : index
    %c0_3 = arith.constant 0 : index
    %4 = vector.load %arg3[%c0_2, %c0_3] : memref<16x256xf32, #tpu.memory_space<vmem>>, vector<16x256xf32>
    %c0_4 = arith.constant 0 : index
    %c0_5 = arith.constant 0 : index
    %5 = vector.load %arg4[%c0_4, %c0_5] : memref<256x256xf32, #tpu.memory_space<vmem>>, vector<256x256xf32>
    %cst = arith.constant dense<0.000000e+00> : vector<16x256xf32>
    %6 = tpu.matmul %4, %5, %cst {dimension_numbers = #tpu.dot_dimension_numbers<[1], [0], [0], [1], [0, 0, 1, 1], [], []>} : vector<16x256xf32>, vector<256x256xf32>, vector<16x256xf32> -> vector<16x256xf32>
    %7 = arith.addf %3, %6 : vector<16x256xf32>
    %c0_6 = arith.constant 0 : index
    %c0_7 = arith.constant 0 : index
    %8 = vector.load %arg7[%c0_6, %c0_7] : memref<16x256xf32, #tpu.memory_space<vmem>>, vector<16x256xf32>
    tpu.vector_store %arg7[%c0_6, %c0_7], %7 {strides = array<i32>} : memref<16x256xf32, #tpu.memory_space<vmem>>, vector<16x256xf32>,
    %c0_i32_8 = arith.constant 0 : i32
    %9 = arith.cmpi eq, %arg2, %c0_i32_8 : i32
    %10 = arith.extui %9 : i1 to i32
    %c0_i32_9 = arith.constant 0 : i32
    %11 = arith.cmpi ne, %10, %c0_i32_9 : i32
    scf.if %11 {
      %c0_10 = arith.constant 0 : index
      %c0_11 = arith.constant 0 : index
      %12 = vector.load %arg7[%c0_10, %c0_11] : memref<16x256xf32, #tpu.memory_space<vmem>>, vector<16x256xf32>
      %c0_12 = arith.constant 0 : index
      %c0_13 = arith.constant 0 : index
      %13 = vector.load %arg5[%c0_12, %c0_13] : memref<1x256xf32, #tpu.memory_space<vmem>>, vector<1x256xf32>
      %14 = vector.broadcast %13 : vector<1x256xf32> to vector<16x256xf32>
      %15 = arith.addf %12, %14 : vector<16x256xf32>
      %c0_14 = arith.constant 0 : index
      %c0_15 = arith.constant 0 : index
      %16 = vector.load %arg6[%c0_14, %c0_15] : memref<16x256xf32, #tpu.memory_space<vmem>>, vector<16x256xf32>
      tpu.vector_store %arg6[%c0_14, %c0_15], %15 {strides = array<i32>} : memref<16x256xf32, #tpu.memory_space<vmem>>, vector<16x256xf32>,
    } else {
    }
    return
  }
  func.func @transform_0(%arg0: i32, %arg1: i32, %arg2: i32) -> (i32, i32) {
    %c0_i32 = arith.constant 0 : i32
    return %arg0, %arg2 : i32, i32
  }
  func.func @transform_1(%arg0: i32, %arg1: i32, %arg2: i32) -> (i32, i32) {
    %c0_i32 = arith.constant 0 : i32
    return %arg2, %arg1 : i32, i32
  }
  func.func @transform_2(%arg0: i32, %arg1: i32, %arg2: i32) -> (i32, i32) {
    %c0_i32 = arith.constant 0 : i32
    %c0_i32_0 = arith.constant 0 : i32
    return %c0_i32, %arg1 : i32, i32
  }
  func.func @transform_3(%arg0: i32, %arg1: i32, %arg2: i32) -> (i32, i32) {
    %c0_i32 = arith.constant 0 : i32
    return %arg0, %arg1 : i32, i32
  }
}

module attributes {stable_mosaic.version = 11 : i64} {
  func.func @_sdpa_outproj_ln_kernel(%arg0: i32, %arg1: memref<16x768xf32, #tpu.memory_space<vmem>>, %arg2: memref<16x256xf32, #tpu.memory_space<vmem>>, %arg3: memref<256x256xf32, #tpu.memory_space<vmem>>, %arg4: memref<1x256xf32, #tpu.memory_space<vmem>>, %arg5: memref<1x256xf32, #tpu.memory_space<vmem>>, %arg6: memref<1x256xf32, #tpu.memory_space<vmem>>, %arg7: memref<16x256xf32, #tpu.memory_space<vmem>>, %arg8: memref<16x256xf32, #tpu.memory_space<vmem>>, %arg9: memref<16x256xf32, #tpu.memory_space<vmem>>) attributes {dimension_semantics = [#tpu.dimension_semantics<parallel>], iteration_bounds = array<i64: 1>, scalar_prefetch = 0 : i64, scratch_operands = 1 : i64, tpu.core_type = #tpu.core_type<tc>, window_params = [{transform_indices = @transform_0, window_bounds = array<i64: 16, 768>}, {transform_indices = @transform_1, window_bounds = array<i64: 16, 256>}, {pipeline_mode = #tpu.pipeline_mode<synchronous>, transform_indices = @transform_2, window_bounds = array<i64: 256, 256>}, {pipeline_mode = #tpu.pipeline_mode<synchronous>, transform_indices = @transform_3, window_bounds = array<i64: 1, 256>}, {pipeline_mode = #tpu.pipeline_mode<synchronous>, transform_indices = @transform_4, window_bounds = array<i64: 1, 256>}, {pipeline_mode = #tpu.pipeline_mode<synchronous>, transform_indices = @transform_5, window_bounds = array<i64: 1, 256>}, {transform_indices = @transform_6, window_bounds = array<i64: 16, 256>}, {transform_indices = @transform_7, window_bounds = array<i64: 16, 256>}]} {
    %c0 = arith.constant 0 : index
    %c0_0 = arith.constant 0 : index
    %0 = vector.load %arg1[%c0, %c0_0] : memref<16x768xf32, #tpu.memory_space<vmem>>, vector<8x64xf32>
    %cst = arith.constant 1.250000e-01 : f32
    %1 = vector.broadcast %cst : f32 to vector<8x64xf32>
    %2 = arith.mulf %0, %1 : vector<8x64xf32>
    %c0_1 = arith.constant 0 : index
    %c256 = arith.constant 256 : index
    %3 = vector.load %arg1[%c0_1, %c256] : memref<16x768xf32, #tpu.memory_space<vmem>>, vector<8x64xf32>
    %c0_2 = arith.constant 0 : index
    %c512 = arith.constant 512 : index
    %4 = vector.load %arg1[%c0_2, %c512] : memref<16x768xf32, #tpu.memory_space<vmem>>, vector<8x64xf32>
    %cst_3 = arith.constant dense<0.000000e+00> : vector<8x8xf32>
    %5 = tpu.matmul %2, %3, %cst_3 {dimension_numbers = #tpu.dot_dimension_numbers<[1], [1], [0], [0], [0, 0, 1, 0], [], []>} : vector<8x64xf32>, vector<8x64xf32>, vector<8x8xf32> -> vector<8x8xf32>
    %cst_4 = arith.constant dense<0xFF800000> : vector<8xf32>
    %6 = vector.multi_reduction <maximumf>, %5, %cst_4 [1] : vector<8x8xf32> to vector<8xf32>
    %7 = vector.shape_cast %6 : vector<8xf32> to vector<8x1xf32>
    %8 = vector.broadcast %7 : vector<8x1xf32> to vector<8x8xf32>
    %9 = arith.subf %5, %8 : vector<8x8xf32>
    %10 = math.exp %9 : vector<8x8xf32>
    %cst_5 = arith.constant dense<0.000000e+00> : vector<8xf32>
    %11 = vector.multi_reduction <add>, %10, %cst_5 [1] : vector<8x8xf32> to vector<8xf32>
    %12 = vector.shape_cast %11 : vector<8xf32> to vector<8x1xf32>
    %cst_6 = arith.constant dense<0.000000e+00> : vector<8x64xf32>
    %13 = tpu.matmul %10, %4, %cst_6 {dimension_numbers = #tpu.dot_dimension_numbers<[1], [0], [0], [1], [0, 0, 1, 1], [], []>} : vector<8x8xf32>, vector<8x64xf32>, vector<8x64xf32> -> vector<8x64xf32>
    %14 = tpu.reciprocal %12 : vector<8x1xf32> -> vector<8x1xf32>
    %15 = vector.broadcast %14 : vector<8x1xf32> to vector<8x64xf32>
    %16 = arith.mulf %13, %15 : vector<8x64xf32>
    %c0_7 = arith.constant 0 : index
    %c0_8 = arith.constant 0 : index
    %17 = vector.load %arg9[%c0_7, %c0_8] : memref<16x256xf32, #tpu.memory_space<vmem>>, vector<8x64xf32>
    tpu.vector_store %arg9[%c0_7, %c0_8], %16 {strides = array<i32>} : memref<16x256xf32, #tpu.memory_space<vmem>>, vector<8x64xf32>,
    %c0_9 = arith.constant 0 : index
    %c64 = arith.constant 64 : index
    %18 = vector.load %arg1[%c0_9, %c64] : memref<16x768xf32, #tpu.memory_space<vmem>>, vector<8x64xf32>
    %cst_10 = arith.constant 1.250000e-01 : f32
    %19 = vector.broadcast %cst_10 : f32 to vector<8x64xf32>
    %20 = arith.mulf %18, %19 : vector<8x64xf32>
    %c0_11 = arith.constant 0 : index
    %c320 = arith.constant 320 : index
    %21 = vector.load %arg1[%c0_11, %c320] : memref<16x768xf32, #tpu.memory_space<vmem>>, vector<8x64xf32>
    %c0_12 = arith.constant 0 : index
    %c576 = arith.constant 576 : index
    %22 = vector.load %arg1[%c0_12, %c576] : memref<16x768xf32, #tpu.memory_space<vmem>>, vector<8x64xf32>
    %cst_13 = arith.constant dense<0.000000e+00> : vector<8x8xf32>
    %23 = tpu.matmul %20, %21, %cst_13 {dimension_numbers = #tpu.dot_dimension_numbers<[1], [1], [0], [0], [0, 0, 1, 0], [], []>} : vector<8x64xf32>, vector<8x64xf32>, vector<8x8xf32> -> vector<8x8xf32>
    %cst_14 = arith.constant dense<0xFF800000> : vector<8xf32>
    %24 = vector.multi_reduction <maximumf>, %23, %cst_14 [1] : vector<8x8xf32> to vector<8xf32>
    %25 = vector.shape_cast %24 : vector<8xf32> to vector<8x1xf32>
    %26 = vector.broadcast %25 : vector<8x1xf32> to vector<8x8xf32>
    %27 = arith.subf %23, %26 : vector<8x8xf32>
    %28 = math.exp %27 : vector<8x8xf32>
    %cst_15 = arith.constant dense<0.000000e+00> : vector<8xf32>
    %29 = vector.multi_reduction <add>, %28, %cst_15 [1] : vector<8x8xf32> to vector<8xf32>
    %30 = vector.shape_cast %29 : vector<8xf32> to vector<8x1xf32>
    %cst_16 = arith.constant dense<0.000000e+00> : vector<8x64xf32>
    %31 = tpu.matmul %28, %22, %cst_16 {dimension_numbers = #tpu.dot_dimension_numbers<[1], [0], [0], [1], [0, 0, 1, 1], [], []>} : vector<8x8xf32>, vector<8x64xf32>, vector<8x64xf32> -> vector<8x64xf32>
    %32 = tpu.reciprocal %30 : vector<8x1xf32> -> vector<8x1xf32>
    %33 = vector.broadcast %32 : vector<8x1xf32> to vector<8x64xf32>
    %34 = arith.mulf %31, %33 : vector<8x64xf32>
    %c0_17 = arith.constant 0 : index
    %c64_18 = arith.constant 64 : index
    %35 = vector.load %arg9[%c0_17, %c64_18] : memref<16x256xf32, #tpu.memory_space<vmem>>, vector<8x64xf32>
    tpu.vector_store %arg9[%c0_17, %c64_18], %34 {strides = array<i32>} : memref<16x256xf32, #tpu.memory_space<vmem>>, vector<8x64xf32>,
    %c0_19 = arith.constant 0 : index
    %c128 = arith.constant 128 : index
    %36 = vector.load %arg1[%c0_19, %c128] : memref<16x768xf32, #tpu.memory_space<vmem>>, vector<8x64xf32>
    %cst_20 = arith.constant 1.250000e-01 : f32
    %37 = vector.broadcast %cst_20 : f32 to vector<8x64xf32>
    %38 = arith.mulf %36, %37 : vector<8x64xf32>
    %c0_21 = arith.constant 0 : index
    %c384 = arith.constant 384 : index
    %39 = vector.load %arg1[%c0_21, %c384] : memref<16x768xf32, #tpu.memory_space<vmem>>, vector<8x64xf32>
    %c0_22 = arith.constant 0 : index
    %c640 = arith.constant 640 : index
    %40 = vector.load %arg1[%c0_22, %c640] : memref<16x768xf32, #tpu.memory_space<vmem>>, vector<8x64xf32>
    %cst_23 = arith.constant dense<0.000000e+00> : vector<8x8xf32>
    %41 = tpu.matmul %38, %39, %cst_23 {dimension_numbers = #tpu.dot_dimension_numbers<[1], [1], [0], [0], [0, 0, 1, 0], [], []>} : vector<8x64xf32>, vector<8x64xf32>, vector<8x8xf32> -> vector<8x8xf32>
    %cst_24 = arith.constant dense<0xFF800000> : vector<8xf32>
    %42 = vector.multi_reduction <maximumf>, %41, %cst_24 [1] : vector<8x8xf32> to vector<8xf32>
    %43 = vector.shape_cast %42 : vector<8xf32> to vector<8x1xf32>
    %44 = vector.broadcast %43 : vector<8x1xf32> to vector<8x8xf32>
    %45 = arith.subf %41, %44 : vector<8x8xf32>
    %46 = math.exp %45 : vector<8x8xf32>
    %cst_25 = arith.constant dense<0.000000e+00> : vector<8xf32>
    %47 = vector.multi_reduction <add>, %46, %cst_25 [1] : vector<8x8xf32> to vector<8xf32>
    %48 = vector.shape_cast %47 : vector<8xf32> to vector<8x1xf32>
    %cst_26 = arith.constant dense<0.000000e+00> : vector<8x64xf32>
    %49 = tpu.matmul %46, %40, %cst_26 {dimension_numbers = #tpu.dot_dimension_numbers<[1], [0], [0], [1], [0, 0, 1, 1], [], []>} : vector<8x8xf32>, vector<8x64xf32>, vector<8x64xf32> -> vector<8x64xf32>
    %50 = tpu.reciprocal %48 : vector<8x1xf32> -> vector<8x1xf32>
    %51 = vector.broadcast %50 : vector<8x1xf32> to vector<8x64xf32>
    %52 = arith.mulf %49, %51 : vector<8x64xf32>
    %c0_27 = arith.constant 0 : index
    %c128_28 = arith.constant 128 : index
    %53 = vector.load %arg9[%c0_27, %c128_28] : memref<16x256xf32, #tpu.memory_space<vmem>>, vector<8x64xf32>
    tpu.vector_store %arg9[%c0_27, %c128_28], %52 {strides = array<i32>} : memref<16x256xf32, #tpu.memory_space<vmem>>, vector<8x64xf32>,
    %c0_29 = arith.constant 0 : index
    %c192 = arith.constant 192 : index
    %54 = vector.load %arg1[%c0_29, %c192] : memref<16x768xf32, #tpu.memory_space<vmem>>, vector<8x64xf32>
    %cst_30 = arith.constant 1.250000e-01 : f32
    %55 = vector.broadcast %cst_30 : f32 to vector<8x64xf32>
    %56 = arith.mulf %54, %55 : vector<8x64xf32>
    %c0_31 = arith.constant 0 : index
    %c448 = arith.constant 448 : index
    %57 = vector.load %arg1[%c0_31, %c448] : memref<16x768xf32, #tpu.memory_space<vmem>>, vector<8x64xf32>
    %c0_32 = arith.constant 0 : index
    %c704 = arith.constant 704 : index
    %58 = vector.load %arg1[%c0_32, %c704] : memref<16x768xf32, #tpu.memory_space<vmem>>, vector<8x64xf32>
    %cst_33 = arith.constant dense<0.000000e+00> : vector<8x8xf32>
    %59 = tpu.matmul %56, %57, %cst_33 {dimension_numbers = #tpu.dot_dimension_numbers<[1], [1], [0], [0], [0, 0, 1, 0], [], []>} : vector<8x64xf32>, vector<8x64xf32>, vector<8x8xf32> -> vector<8x8xf32>
    %cst_34 = arith.constant dense<0xFF800000> : vector<8xf32>
    %60 = vector.multi_reduction <maximumf>, %59, %cst_34 [1] : vector<8x8xf32> to vector<8xf32>
    %61 = vector.shape_cast %60 : vector<8xf32> to vector<8x1xf32>
    %62 = vector.broadcast %61 : vector<8x1xf32> to vector<8x8xf32>
    %63 = arith.subf %59, %62 : vector<8x8xf32>
    %64 = math.exp %63 : vector<8x8xf32>
    %cst_35 = arith.constant dense<0.000000e+00> : vector<8xf32>
    %65 = vector.multi_reduction <add>, %64, %cst_35 [1] : vector<8x8xf32> to vector<8xf32>
    %66 = vector.shape_cast %65 : vector<8xf32> to vector<8x1xf32>
    %cst_36 = arith.constant dense<0.000000e+00> : vector<8x64xf32>
    %67 = tpu.matmul %64, %58, %cst_36 {dimension_numbers = #tpu.dot_dimension_numbers<[1], [0], [0], [1], [0, 0, 1, 1], [], []>} : vector<8x8xf32>, vector<8x64xf32>, vector<8x64xf32> -> vector<8x64xf32>
    %68 = tpu.reciprocal %66 : vector<8x1xf32> -> vector<8x1xf32>
    %69 = vector.broadcast %68 : vector<8x1xf32> to vector<8x64xf32>
    %70 = arith.mulf %67, %69 : vector<8x64xf32>
    %c0_37 = arith.constant 0 : index
    %c192_38 = arith.constant 192 : index
    %71 = vector.load %arg9[%c0_37, %c192_38] : memref<16x256xf32, #tpu.memory_space<vmem>>, vector<8x64xf32>
    tpu.vector_store %arg9[%c0_37, %c192_38], %70 {strides = array<i32>} : memref<16x256xf32, #tpu.memory_space<vmem>>, vector<8x64xf32>,
    %c8 = arith.constant 8 : index
    %c0_39 = arith.constant 0 : index
    %72 = vector.load %arg1[%c8, %c0_39] : memref<16x768xf32, #tpu.memory_space<vmem>>, vector<8x64xf32>
    %cst_40 = arith.constant 1.250000e-01 : f32
    %73 = vector.broadcast %cst_40 : f32 to vector<8x64xf32>
    %74 = arith.mulf %72, %73 : vector<8x64xf32>
    %c8_41 = arith.constant 8 : index
    %c256_42 = arith.constant 256 : index
    %75 = vector.load %arg1[%c8_41, %c256_42] : memref<16x768xf32, #tpu.memory_space<vmem>>, vector<8x64xf32>
    %c8_43 = arith.constant 8 : index
    %c512_44 = arith.constant 512 : index
    %76 = vector.load %arg1[%c8_43, %c512_44] : memref<16x768xf32, #tpu.memory_space<vmem>>, vector<8x64xf32>
    %cst_45 = arith.constant dense<0.000000e+00> : vector<8x8xf32>
    %77 = tpu.matmul %74, %75, %cst_45 {dimension_numbers = #tpu.dot_dimension_numbers<[1], [1], [0], [0], [0, 0, 1, 0], [], []>} : vector<8x64xf32>, vector<8x64xf32>, vector<8x8xf32> -> vector<8x8xf32>
    %cst_46 = arith.constant dense<0xFF800000> : vector<8xf32>
    %78 = vector.multi_reduction <maximumf>, %77, %cst_46 [1] : vector<8x8xf32> to vector<8xf32>
    %79 = vector.shape_cast %78 : vector<8xf32> to vector<8x1xf32>
    %80 = vector.broadcast %79 : vector<8x1xf32> to vector<8x8xf32>
    %81 = arith.subf %77, %80 : vector<8x8xf32>
    %82 = math.exp %81 : vector<8x8xf32>
    %cst_47 = arith.constant dense<0.000000e+00> : vector<8xf32>
    %83 = vector.multi_reduction <add>, %82, %cst_47 [1] : vector<8x8xf32> to vector<8xf32>
    %84 = vector.shape_cast %83 : vector<8xf32> to vector<8x1xf32>
    %cst_48 = arith.constant dense<0.000000e+00> : vector<8x64xf32>
    %85 = tpu.matmul %82, %76, %cst_48 {dimension_numbers = #tpu.dot_dimension_numbers<[1], [0], [0], [1], [0, 0, 1, 1], [], []>} : vector<8x8xf32>, vector<8x64xf32>, vector<8x64xf32> -> vector<8x64xf32>
    %86 = tpu.reciprocal %84 : vector<8x1xf32> -> vector<8x1xf32>
    %87 = vector.broadcast %86 : vector<8x1xf32> to vector<8x64xf32>
    %88 = arith.mulf %85, %87 : vector<8x64xf32>
    %c8_49 = arith.constant 8 : index
    %c0_50 = arith.constant 0 : index
    %89 = vector.load %arg9[%c8_49, %c0_50] : memref<16x256xf32, #tpu.memory_space<vmem>>, vector<8x64xf32>
    tpu.vector_store %arg9[%c8_49, %c0_50], %88 {strides = array<i32>} : memref<16x256xf32, #tpu.memory_space<vmem>>, vector<8x64xf32>,
    %c8_51 = arith.constant 8 : index
    %c64_52 = arith.constant 64 : index
    %90 = vector.load %arg1[%c8_51, %c64_52] : memref<16x768xf32, #tpu.memory_space<vmem>>, vector<8x64xf32>
    %cst_53 = arith.constant 1.250000e-01 : f32
    %91 = vector.broadcast %cst_53 : f32 to vector<8x64xf32>
    %92 = arith.mulf %90, %91 : vector<8x64xf32>
    %c8_54 = arith.constant 8 : index
    %c320_55 = arith.constant 320 : index
    %93 = vector.load %arg1[%c8_54, %c320_55] : memref<16x768xf32, #tpu.memory_space<vmem>>, vector<8x64xf32>
    %c8_56 = arith.constant 8 : index
    %c576_57 = arith.constant 576 : index
    %94 = vector.load %arg1[%c8_56, %c576_57] : memref<16x768xf32, #tpu.memory_space<vmem>>, vector<8x64xf32>
    %cst_58 = arith.constant dense<0.000000e+00> : vector<8x8xf32>
    %95 = tpu.matmul %92, %93, %cst_58 {dimension_numbers = #tpu.dot_dimension_numbers<[1], [1], [0], [0], [0, 0, 1, 0], [], []>} : vector<8x64xf32>, vector<8x64xf32>, vector<8x8xf32> -> vector<8x8xf32>
    %cst_59 = arith.constant dense<0xFF800000> : vector<8xf32>
    %96 = vector.multi_reduction <maximumf>, %95, %cst_59 [1] : vector<8x8xf32> to vector<8xf32>
    %97 = vector.shape_cast %96 : vector<8xf32> to vector<8x1xf32>
    %98 = vector.broadcast %97 : vector<8x1xf32> to vector<8x8xf32>
    %99 = arith.subf %95, %98 : vector<8x8xf32>
    %100 = math.exp %99 : vector<8x8xf32>
    %cst_60 = arith.constant dense<0.000000e+00> : vector<8xf32>
    %101 = vector.multi_reduction <add>, %100, %cst_60 [1] : vector<8x8xf32> to vector<8xf32>
    %102 = vector.shape_cast %101 : vector<8xf32> to vector<8x1xf32>
    %cst_61 = arith.constant dense<0.000000e+00> : vector<8x64xf32>
    %103 = tpu.matmul %100, %94, %cst_61 {dimension_numbers = #tpu.dot_dimension_numbers<[1], [0], [0], [1], [0, 0, 1, 1], [], []>} : vector<8x8xf32>, vector<8x64xf32>, vector<8x64xf32> -> vector<8x64xf32>
    %104 = tpu.reciprocal %102 : vector<8x1xf32> -> vector<8x1xf32>
    %105 = vector.broadcast %104 : vector<8x1xf32> to vector<8x64xf32>
    %106 = arith.mulf %103, %105 : vector<8x64xf32>
    %c8_62 = arith.constant 8 : index
    %c64_63 = arith.constant 64 : index
    %107 = vector.load %arg9[%c8_62, %c64_63] : memref<16x256xf32, #tpu.memory_space<vmem>>, vector<8x64xf32>
    tpu.vector_store %arg9[%c8_62, %c64_63], %106 {strides = array<i32>} : memref<16x256xf32, #tpu.memory_space<vmem>>, vector<8x64xf32>,
    %c8_64 = arith.constant 8 : index
    %c128_65 = arith.constant 128 : index
    %108 = vector.load %arg1[%c8_64, %c128_65] : memref<16x768xf32, #tpu.memory_space<vmem>>, vector<8x64xf32>
    %cst_66 = arith.constant 1.250000e-01 : f32
    %109 = vector.broadcast %cst_66 : f32 to vector<8x64xf32>
    %110 = arith.mulf %108, %109 : vector<8x64xf32>
    %c8_67 = arith.constant 8 : index
    %c384_68 = arith.constant 384 : index
    %111 = vector.load %arg1[%c8_67, %c384_68] : memref<16x768xf32, #tpu.memory_space<vmem>>, vector<8x64xf32>
    %c8_69 = arith.constant 8 : index
    %c640_70 = arith.constant 640 : index
    %112 = vector.load %arg1[%c8_69, %c640_70] : memref<16x768xf32, #tpu.memory_space<vmem>>, vector<8x64xf32>
    %cst_71 = arith.constant dense<0.000000e+00> : vector<8x8xf32>
    %113 = tpu.matmul %110, %111, %cst_71 {dimension_numbers = #tpu.dot_dimension_numbers<[1], [1], [0], [0], [0, 0, 1, 0], [], []>} : vector<8x64xf32>, vector<8x64xf32>, vector<8x8xf32> -> vector<8x8xf32>
    %cst_72 = arith.constant dense<0xFF800000> : vector<8xf32>
    %114 = vector.multi_reduction <maximumf>, %113, %cst_72 [1] : vector<8x8xf32> to vector<8xf32>
    %115 = vector.shape_cast %114 : vector<8xf32> to vector<8x1xf32>
    %116 = vector.broadcast %115 : vector<8x1xf32> to vector<8x8xf32>
    %117 = arith.subf %113, %116 : vector<8x8xf32>
    %118 = math.exp %117 : vector<8x8xf32>
    %cst_73 = arith.constant dense<0.000000e+00> : vector<8xf32>
    %119 = vector.multi_reduction <add>, %118, %cst_73 [1] : vector<8x8xf32> to vector<8xf32>
    %120 = vector.shape_cast %119 : vector<8xf32> to vector<8x1xf32>
    %cst_74 = arith.constant dense<0.000000e+00> : vector<8x64xf32>
    %121 = tpu.matmul %118, %112, %cst_74 {dimension_numbers = #tpu.dot_dimension_numbers<[1], [0], [0], [1], [0, 0, 1, 1], [], []>} : vector<8x8xf32>, vector<8x64xf32>, vector<8x64xf32> -> vector<8x64xf32>
    %122 = tpu.reciprocal %120 : vector<8x1xf32> -> vector<8x1xf32>
    %123 = vector.broadcast %122 : vector<8x1xf32> to vector<8x64xf32>
    %124 = arith.mulf %121, %123 : vector<8x64xf32>
    %c8_75 = arith.constant 8 : index
    %c128_76 = arith.constant 128 : index
    %125 = vector.load %arg9[%c8_75, %c128_76] : memref<16x256xf32, #tpu.memory_space<vmem>>, vector<8x64xf32>
    tpu.vector_store %arg9[%c8_75, %c128_76], %124 {strides = array<i32>} : memref<16x256xf32, #tpu.memory_space<vmem>>, vector<8x64xf32>,
    %c8_77 = arith.constant 8 : index
    %c192_78 = arith.constant 192 : index
    %126 = vector.load %arg1[%c8_77, %c192_78] : memref<16x768xf32, #tpu.memory_space<vmem>>, vector<8x64xf32>
    %cst_79 = arith.constant 1.250000e-01 : f32
    %127 = vector.broadcast %cst_79 : f32 to vector<8x64xf32>
    %128 = arith.mulf %126, %127 : vector<8x64xf32>
    %c8_80 = arith.constant 8 : index
    %c448_81 = arith.constant 448 : index
    %129 = vector.load %arg1[%c8_80, %c448_81] : memref<16x768xf32, #tpu.memory_space<vmem>>, vector<8x64xf32>
    %c8_82 = arith.constant 8 : index
    %c704_83 = arith.constant 704 : index
    %130 = vector.load %arg1[%c8_82, %c704_83] : memref<16x768xf32, #tpu.memory_space<vmem>>, vector<8x64xf32>
    %cst_84 = arith.constant dense<0.000000e+00> : vector<8x8xf32>
    %131 = tpu.matmul %128, %129, %cst_84 {dimension_numbers = #tpu.dot_dimension_numbers<[1], [1], [0], [0], [0, 0, 1, 0], [], []>} : vector<8x64xf32>, vector<8x64xf32>, vector<8x8xf32> -> vector<8x8xf32>
    %cst_85 = arith.constant dense<0xFF800000> : vector<8xf32>
    %132 = vector.multi_reduction <maximumf>, %131, %cst_85 [1] : vector<8x8xf32> to vector<8xf32>
    %133 = vector.shape_cast %132 : vector<8xf32> to vector<8x1xf32>
    %134 = vector.broadcast %133 : vector<8x1xf32> to vector<8x8xf32>
    %135 = arith.subf %131, %134 : vector<8x8xf32>
    %136 = math.exp %135 : vector<8x8xf32>
    %cst_86 = arith.constant dense<0.000000e+00> : vector<8xf32>
    %137 = vector.multi_reduction <add>, %136, %cst_86 [1] : vector<8x8xf32> to vector<8xf32>
    %138 = vector.shape_cast %137 : vector<8xf32> to vector<8x1xf32>
    %cst_87 = arith.constant dense<0.000000e+00> : vector<8x64xf32>
    %139 = tpu.matmul %136, %130, %cst_87 {dimension_numbers = #tpu.dot_dimension_numbers<[1], [0], [0], [1], [0, 0, 1, 1], [], []>} : vector<8x8xf32>, vector<8x64xf32>, vector<8x64xf32> -> vector<8x64xf32>
    %140 = tpu.reciprocal %138 : vector<8x1xf32> -> vector<8x1xf32>
    %141 = vector.broadcast %140 : vector<8x1xf32> to vector<8x64xf32>
    %142 = arith.mulf %139, %141 : vector<8x64xf32>
    %c8_88 = arith.constant 8 : index
    %c192_89 = arith.constant 192 : index
    %143 = vector.load %arg9[%c8_88, %c192_89] : memref<16x256xf32, #tpu.memory_space<vmem>>, vector<8x64xf32>
    tpu.vector_store %arg9[%c8_88, %c192_89], %142 {strides = array<i32>} : memref<16x256xf32, #tpu.memory_space<vmem>>, vector<8x64xf32>,
    %c0_90 = arith.constant 0 : index
    %c0_91 = arith.constant 0 : index
    %144 = vector.load %arg9[%c0_90, %c0_91] : memref<16x256xf32, #tpu.memory_space<vmem>>, vector<16x256xf32>
    %c0_92 = arith.constant 0 : index
    %c0_93 = arith.constant 0 : index
    %145 = vector.load %arg3[%c0_92, %c0_93] : memref<256x256xf32, #tpu.memory_space<vmem>>, vector<256x256xf32>
    %cst_94 = arith.constant dense<0.000000e+00> : vector<16x256xf32>
    %146 = tpu.matmul %144, %145, %cst_94 {dimension_numbers = #tpu.dot_dimension_numbers<[1], [0], [0], [1], [0, 0, 1, 1], [], []>} : vector<16x256xf32>, vector<256x256xf32>, vector<16x256xf32> -> vector<16x256xf32>
    %c0_95 = arith.constant 0 : index
    %c0_96 = arith.constant 0 : index
    %147 = vector.load %arg4[%c0_95, %c0_96] : memref<1x256xf32, #tpu.memory_space<vmem>>, vector<1x256xf32>
    %148 = vector.broadcast %147 : vector<1x256xf32> to vector<16x256xf32>
    %149 = arith.addf %146, %148 : vector<16x256xf32>
    %c0_97 = arith.constant 0 : index
    %c0_98 = arith.constant 0 : index
    %150 = vector.load %arg7[%c0_97, %c0_98] : memref<16x256xf32, #tpu.memory_space<vmem>>, vector<16x256xf32>
    tpu.vector_store %arg7[%c0_97, %c0_98], %149 {strides = array<i32>} : memref<16x256xf32, #tpu.memory_space<vmem>>, vector<16x256xf32>,
    %c0_99 = arith.constant 0 : index
    %c0_100 = arith.constant 0 : index
    %151 = vector.load %arg2[%c0_99, %c0_100] : memref<16x256xf32, #tpu.memory_space<vmem>>, vector<16x256xf32>
    %152 = arith.addf %149, %151 : vector<16x256xf32>
    %cst_101 = arith.constant dense<0.000000e+00> : vector<16xf32>
    %153 = vector.multi_reduction <add>, %152, %cst_101 [1] : vector<16x256xf32> to vector<16xf32>
    %154 = vector.shape_cast %153 : vector<16xf32> to vector<16x1xf32>
    %cst_102 = arith.constant 2.560000e+02 : f32
    %155 = vector.broadcast %cst_102 : f32 to vector<16x1xf32>
    %156 = arith.divf %154, %155 : vector<16x1xf32>
    %157 = vector.broadcast %156 : vector<16x1xf32> to vector<16x256xf32>
    %158 = arith.subf %152, %157 : vector<16x256xf32>
    %159 = arith.mulf %158, %158 : vector<16x256xf32>
    %cst_103 = arith.constant dense<0.000000e+00> : vector<16xf32>
    %160 = vector.multi_reduction <add>, %159, %cst_103 [1] : vector<16x256xf32> to vector<16xf32>
    %161 = vector.shape_cast %160 : vector<16xf32> to vector<16x1xf32>
    %cst_104 = arith.constant 2.560000e+02 : f32
    %162 = vector.broadcast %cst_104 : f32 to vector<16x1xf32>
    %163 = arith.divf %161, %162 : vector<16x1xf32>
    %164 = vector.broadcast %156 : vector<16x1xf32> to vector<16x256xf32>
    %165 = arith.subf %152, %164 : vector<16x256xf32>
    %cst_105 = arith.constant 9.99999974E-6 : f32
    %166 = vector.broadcast %cst_105 : f32 to vector<16x1xf32>
    %167 = arith.addf %163, %166 : vector<16x1xf32>
    %168 = math.rsqrt %167 : vector<16x1xf32>
    %169 = vector.broadcast %168 : vector<16x1xf32> to vector<16x256xf32>
    %170 = arith.mulf %165, %169 : vector<16x256xf32>
    %c0_106 = arith.constant 0 : index
    %c0_107 = arith.constant 0 : index
    %171 = vector.load %arg5[%c0_106, %c0_107] : memref<1x256xf32, #tpu.memory_space<vmem>>, vector<1x256xf32>
    %172 = vector.broadcast %171 : vector<1x256xf32> to vector<16x256xf32>
    %173 = arith.mulf %170, %172 : vector<16x256xf32>
    %c0_108 = arith.constant 0 : index
    %c0_109 = arith.constant 0 : index
    %174 = vector.load %arg6[%c0_108, %c0_109] : memref<1x256xf32, #tpu.memory_space<vmem>>, vector<1x256xf32>
    %175 = vector.broadcast %174 : vector<1x256xf32> to vector<16x256xf32>
    %176 = arith.addf %173, %175 : vector<16x256xf32>
    %c0_110 = arith.constant 0 : index
    %c0_111 = arith.constant 0 : index
    %177 = vector.load %arg8[%c0_110, %c0_111] : memref<16x256xf32, #tpu.memory_space<vmem>>, vector<16x256xf32>
    tpu.vector_store %arg8[%c0_110, %c0_111], %176 {strides = array<i32>} : memref<16x256xf32, #tpu.memory_space<vmem>>, vector<16x256xf32>,
    return
  }
  func.func @transform_0(%arg0: i32) -> (i32, i32) {
    %c0_i32 = arith.constant 0 : i32
    %c0_i32_0 = arith.constant 0 : i32
    return %arg0, %c0_i32 : i32, i32
  }
  func.func @transform_1(%arg0: i32) -> (i32, i32) {
    %c0_i32 = arith.constant 0 : i32
    %c0_i32_0 = arith.constant 0 : i32
    return %arg0, %c0_i32 : i32, i32
  }
  func.func @transform_2(%arg0: i32) -> (i32, i32) {
    %c0_i32 = arith.constant 0 : i32
    %c0_i32_0 = arith.constant 0 : i32
    %c0_i32_1 = arith.constant 0 : i32
    return %c0_i32, %c0_i32_0 : i32, i32
  }
  func.func @transform_3(%arg0: i32) -> (i32, i32) {
    %c0_i32 = arith.constant 0 : i32
    %c0_i32_0 = arith.constant 0 : i32
    %c0_i32_1 = arith.constant 0 : i32
    return %c0_i32, %c0_i32_0 : i32, i32
  }
  func.func @transform_4(%arg0: i32) -> (i32, i32) {
    %c0_i32 = arith.constant 0 : i32
    %c0_i32_0 = arith.constant 0 : i32
    %c0_i32_1 = arith.constant 0 : i32
    return %c0_i32, %c0_i32_0 : i32, i32
  }
  func.func @transform_5(%arg0: i32) -> (i32, i32) {
    %c0_i32 = arith.constant 0 : i32
    %c0_i32_0 = arith.constant 0 : i32
    %c0_i32_1 = arith.constant 0 : i32
    return %c0_i32, %c0_i32_0 : i32, i32
  }
  func.func @transform_6(%arg0: i32) -> (i32, i32) {
    %c0_i32 = arith.constant 0 : i32
    %c0_i32_0 = arith.constant 0 : i32
    return %arg0, %c0_i32 : i32, i32
  }
  func.func @transform_7(%arg0: i32) -> (i32, i32) {
    %c0_i32 = arith.constant 0 : i32
    %c0_i32_0 = arith.constant 0 : i32
    return %arg0, %c0_i32 : i32, i32
  }
}

module attributes {stable_mosaic.version = 11 : i64} {
  func.func @_ffn_ln_kernel(%arg0: i32, %arg1: memref<16x256xf32, #tpu.memory_space<vmem>>, %arg2: memref<16x256xf32, #tpu.memory_space<vmem>>, %arg3: memref<256x512xf32, #tpu.memory_space<vmem>>, %arg4: memref<1x512xf32, #tpu.memory_space<vmem>>, %arg5: memref<512x256xf32, #tpu.memory_space<vmem>>, %arg6: memref<1x256xf32, #tpu.memory_space<vmem>>, %arg7: memref<256x256xf32, #tpu.memory_space<vmem>>, %arg8: memref<1x256xf32, #tpu.memory_space<vmem>>, %arg9: memref<1x256xf32, #tpu.memory_space<vmem>>, %arg10: memref<1x256xf32, #tpu.memory_space<vmem>>, %arg11: memref<16x256xf32, #tpu.memory_space<vmem>>) attributes {dimension_semantics = [#tpu.dimension_semantics<parallel>], iteration_bounds = array<i64: 1>, scalar_prefetch = 0 : i64, scratch_operands = 0 : i64, tpu.core_type = #tpu.core_type<tc>, window_params = [{transform_indices = @transform_0, window_bounds = array<i64: 16, 256>}, {transform_indices = @transform_1, window_bounds = array<i64: 16, 256>}, {pipeline_mode = #tpu.pipeline_mode<synchronous>, transform_indices = @transform_2, window_bounds = array<i64: 256, 512>}, {pipeline_mode = #tpu.pipeline_mode<synchronous>, transform_indices = @transform_3, window_bounds = array<i64: 1, 512>}, {pipeline_mode = #tpu.pipeline_mode<synchronous>, transform_indices = @transform_4, window_bounds = array<i64: 512, 256>}, {pipeline_mode = #tpu.pipeline_mode<synchronous>, transform_indices = @transform_5, window_bounds = array<i64: 1, 256>}, {pipeline_mode = #tpu.pipeline_mode<synchronous>, transform_indices = @transform_6, window_bounds = array<i64: 256, 256>}, {pipeline_mode = #tpu.pipeline_mode<synchronous>, transform_indices = @transform_7, window_bounds = array<i64: 1, 256>}, {pipeline_mode = #tpu.pipeline_mode<synchronous>, transform_indices = @transform_8, window_bounds = array<i64: 1, 256>}, {pipeline_mode = #tpu.pipeline_mode<synchronous>, transform_indices = @transform_9, window_bounds = array<i64: 1, 256>}, {transform_indices = @transform_10, window_bounds = array<i64: 16, 256>}]} {
    %c0 = arith.constant 0 : index
    %c0_0 = arith.constant 0 : index
    %0 = vector.load %arg1[%c0, %c0_0] : memref<16x256xf32, #tpu.memory_space<vmem>>, vector<16x256xf32>
    %c0_1 = arith.constant 0 : index
    %c0_2 = arith.constant 0 : index
    %1 = vector.load %arg3[%c0_1, %c0_2] : memref<256x512xf32, #tpu.memory_space<vmem>>, vector<256x512xf32>
    %cst = arith.constant dense<0.000000e+00> : vector<16x512xf32>
    %2 = tpu.matmul %0, %1, %cst {dimension_numbers = #tpu.dot_dimension_numbers<[1], [0], [0], [1], [0, 0, 1, 1], [], []>} : vector<16x256xf32>, vector<256x512xf32>, vector<16x512xf32> -> vector<16x512xf32>
    %c0_3 = arith.constant 0 : index
    %c0_4 = arith.constant 0 : index
    %3 = vector.load %arg4[%c0_3, %c0_4] : memref<1x512xf32, #tpu.memory_space<vmem>>, vector<1x512xf32>
    %4 = vector.broadcast %3 : vector<1x512xf32> to vector<16x512xf32>
    %5 = arith.addf %2, %4 : vector<16x512xf32>
    %cst_5 = arith.constant 0.000000e+00 : f32
    %6 = vector.broadcast %cst_5 : f32 to vector<16x512xf32>
    %7 = arith.maximumf %5, %6 : vector<16x512xf32>
    %c0_6 = arith.constant 0 : index
    %c0_7 = arith.constant 0 : index
    %8 = vector.load %arg5[%c0_6, %c0_7] : memref<512x256xf32, #tpu.memory_space<vmem>>, vector<512x256xf32>
    %cst_8 = arith.constant dense<0.000000e+00> : vector<16x256xf32>
    %9 = tpu.matmul %7, %8, %cst_8 {dimension_numbers = #tpu.dot_dimension_numbers<[1], [0], [0], [1], [0, 0, 1, 1], [], []>} : vector<16x512xf32>, vector<512x256xf32>, vector<16x256xf32> -> vector<16x256xf32>
    %c0_9 = arith.constant 0 : index
    %c0_10 = arith.constant 0 : index
    %10 = vector.load %arg6[%c0_9, %c0_10] : memref<1x256xf32, #tpu.memory_space<vmem>>, vector<1x256xf32>
    %11 = vector.broadcast %10 : vector<1x256xf32> to vector<16x256xf32>
    %12 = arith.addf %9, %11 : vector<16x256xf32>
    %cst_11 = arith.constant 0.000000e+00 : f32
    %13 = vector.broadcast %cst_11 : f32 to vector<16x256xf32>
    %14 = arith.maximumf %12, %13 : vector<16x256xf32>
    %c0_12 = arith.constant 0 : index
    %c0_13 = arith.constant 0 : index
    %15 = vector.load %arg7[%c0_12, %c0_13] : memref<256x256xf32, #tpu.memory_space<vmem>>, vector<256x256xf32>
    %cst_14 = arith.constant dense<0.000000e+00> : vector<16x256xf32>
    %16 = tpu.matmul %14, %15, %cst_14 {dimension_numbers = #tpu.dot_dimension_numbers<[1], [0], [0], [1], [0, 0, 1, 1], [], []>} : vector<16x256xf32>, vector<256x256xf32>, vector<16x256xf32> -> vector<16x256xf32>
    %c0_15 = arith.constant 0 : index
    %c0_16 = arith.constant 0 : index
    %17 = vector.load %arg8[%c0_15, %c0_16] : memref<1x256xf32, #tpu.memory_space<vmem>>, vector<1x256xf32>
    %18 = vector.broadcast %17 : vector<1x256xf32> to vector<16x256xf32>
    %19 = arith.addf %16, %18 : vector<16x256xf32>
    %c0_17 = arith.constant 0 : index
    %c0_18 = arith.constant 0 : index
    %20 = vector.load %arg2[%c0_17, %c0_18] : memref<16x256xf32, #tpu.memory_space<vmem>>, vector<16x256xf32>
    %21 = arith.addf %19, %20 : vector<16x256xf32>
    %cst_19 = arith.constant dense<0.000000e+00> : vector<16xf32>
    %22 = vector.multi_reduction <add>, %21, %cst_19 [1] : vector<16x256xf32> to vector<16xf32>
    %23 = vector.shape_cast %22 : vector<16xf32> to vector<16x1xf32>
    %cst_20 = arith.constant 2.560000e+02 : f32
    %24 = vector.broadcast %cst_20 : f32 to vector<16x1xf32>
    %25 = arith.divf %23, %24 : vector<16x1xf32>
    %26 = vector.broadcast %25 : vector<16x1xf32> to vector<16x256xf32>
    %27 = arith.subf %21, %26 : vector<16x256xf32>
    %28 = arith.mulf %27, %27 : vector<16x256xf32>
    %cst_21 = arith.constant dense<0.000000e+00> : vector<16xf32>
    %29 = vector.multi_reduction <add>, %28, %cst_21 [1] : vector<16x256xf32> to vector<16xf32>
    %30 = vector.shape_cast %29 : vector<16xf32> to vector<16x1xf32>
    %cst_22 = arith.constant 2.560000e+02 : f32
    %31 = vector.broadcast %cst_22 : f32 to vector<16x1xf32>
    %32 = arith.divf %30, %31 : vector<16x1xf32>
    %33 = vector.broadcast %25 : vector<16x1xf32> to vector<16x256xf32>
    %34 = arith.subf %21, %33 : vector<16x256xf32>
    %cst_23 = arith.constant 9.99999974E-6 : f32
    %35 = vector.broadcast %cst_23 : f32 to vector<16x1xf32>
    %36 = arith.addf %32, %35 : vector<16x1xf32>
    %37 = math.rsqrt %36 : vector<16x1xf32>
    %38 = vector.broadcast %37 : vector<16x1xf32> to vector<16x256xf32>
    %39 = arith.mulf %34, %38 : vector<16x256xf32>
    %c0_24 = arith.constant 0 : index
    %c0_25 = arith.constant 0 : index
    %40 = vector.load %arg9[%c0_24, %c0_25] : memref<1x256xf32, #tpu.memory_space<vmem>>, vector<1x256xf32>
    %41 = vector.broadcast %40 : vector<1x256xf32> to vector<16x256xf32>
    %42 = arith.mulf %39, %41 : vector<16x256xf32>
    %c0_26 = arith.constant 0 : index
    %c0_27 = arith.constant 0 : index
    %43 = vector.load %arg10[%c0_26, %c0_27] : memref<1x256xf32, #tpu.memory_space<vmem>>, vector<1x256xf32>
    %44 = vector.broadcast %43 : vector<1x256xf32> to vector<16x256xf32>
    %45 = arith.addf %42, %44 : vector<16x256xf32>
    %c0_28 = arith.constant 0 : index
    %c0_29 = arith.constant 0 : index
    %46 = vector.load %arg11[%c0_28, %c0_29] : memref<16x256xf32, #tpu.memory_space<vmem>>, vector<16x256xf32>
    tpu.vector_store %arg11[%c0_28, %c0_29], %45 {strides = array<i32>} : memref<16x256xf32, #tpu.memory_space<vmem>>, vector<16x256xf32>,
    return
  }
  func.func @transform_0(%arg0: i32) -> (i32, i32) {
    %c0_i32 = arith.constant 0 : i32
    %c0_i32_0 = arith.constant 0 : i32
    return %arg0, %c0_i32 : i32, i32
  }
  func.func @transform_1(%arg0: i32) -> (i32, i32) {
    %c0_i32 = arith.constant 0 : i32
    %c0_i32_0 = arith.constant 0 : i32
    return %arg0, %c0_i32 : i32, i32
  }
  func.func @transform_2(%arg0: i32) -> (i32, i32) {
    %c0_i32 = arith.constant 0 : i32
    %c0_i32_0 = arith.constant 0 : i32
    %c0_i32_1 = arith.constant 0 : i32
    return %c0_i32, %c0_i32_0 : i32, i32
  }
  func.func @transform_3(%arg0: i32) -> (i32, i32) {
    %c0_i32 = arith.constant 0 : i32
    %c0_i32_0 = arith.constant 0 : i32
    %c0_i32_1 = arith.constant 0 : i32
    return %c0_i32, %c0_i32_0 : i32, i32
  }
  func.func @transform_4(%arg0: i32) -> (i32, i32) {
    %c0_i32 = arith.constant 0 : i32
    %c0_i32_0 = arith.constant 0 : i32
    %c0_i32_1 = arith.constant 0 : i32
    return %c0_i32, %c0_i32_0 : i32, i32
  }
  func.func @transform_5(%arg0: i32) -> (i32, i32) {
    %c0_i32 = arith.constant 0 : i32
    %c0_i32_0 = arith.constant 0 : i32
    %c0_i32_1 = arith.constant 0 : i32
    return %c0_i32, %c0_i32_0 : i32, i32
  }
  func.func @transform_6(%arg0: i32) -> (i32, i32) {
    %c0_i32 = arith.constant 0 : i32
    %c0_i32_0 = arith.constant 0 : i32
    %c0_i32_1 = arith.constant 0 : i32
    return %c0_i32, %c0_i32_0 : i32, i32
  }
  func.func @transform_7(%arg0: i32) -> (i32, i32) {
    %c0_i32 = arith.constant 0 : i32
    %c0_i32_0 = arith.constant 0 : i32
    %c0_i32_1 = arith.constant 0 : i32
    return %c0_i32, %c0_i32_0 : i32, i32
  }
  func.func @transform_8(%arg0: i32) -> (i32, i32) {
    %c0_i32 = arith.constant 0 : i32
    %c0_i32_0 = arith.constant 0 : i32
    %c0_i32_1 = arith.constant 0 : i32
    return %c0_i32, %c0_i32_0 : i32, i32
  }
  func.func @transform_9(%arg0: i32) -> (i32, i32) {
    %c0_i32 = arith.constant 0 : i32
    %c0_i32_0 = arith.constant 0 : i32
    %c0_i32_1 = arith.constant 0 : i32
    return %c0_i32, %c0_i32_0 : i32, i32
  }
  func.func @transform_10(%arg0: i32) -> (i32, i32) {
    %c0_i32 = arith.constant 0 : i32
    %c0_i32_0 = arith.constant 0 : i32
    return %arg0, %c0_i32 : i32, i32
  }
}

</mosaic_0001>

<llo_original>
// kernel: sent_mha_attn.3
$region0: #{sent_mha_attn.3}
  #allocation0 [shape = 'u32[]', space=smem, size = 0x4, offset = 0x4, fixed_abs, tag = 'smem constant byte address 0x4 - core index']
  #allocation1 [shape = 'u32[144,128]{1,0:T(1,128)}', space=vmem, size = 0x12000, scoped, tag = 'internal scratch']
  #allocation2 [shape = 'f32[16,256]{1,0:T(8,128)}', space=vmem, size = 0x4000, scoped, tag = 'scratch operand']
  %s0 = inlined_call_operand.vmem [shape: f32[16,256], index: 0, kind: input, shape index: {}]
  %s1 = inlined_call_operand.hbm [shape: f32[256,768], index: 1, kind: input, shape index: {}]
  %s2 = inlined_call_operand.vmem [shape: f32[1,768], index: 2, kind: input, shape index: {}]
  %s3 = inlined_call_operand.vmem [shape: f32[16,768], index: 3, kind: output, shape index: {}]
  %s4 = sld [smem:[#allocation0]]
  $region76: #{sent_mha_attn.3} parent=0
    _
  %s6 = ssub.s32 1, %s4
  %s7 = scalar_select 0, %s6, %s4
  $region1: #{sent_mha_attn.3} parent=0
    #allocation3 [shape = 'u8[524288]{0}', space=vmem, size = 0x80000, scoped, tag = 'input window, operand 1']
    #allocation4 [shape = 's32[2]{0}', space=sflag, size = 0x8, scoped, tag = 'scoped memory for sent_mha_attn.3']
    #allocation5 [shape = 'u8[32768]{0}', space=vmem, size = 0x8000, scoped, tag = 'output window, operand 0']
    %8 = vsyncpa [#allocation4], 0
    %s9 = scalar_lea.sflag [#allocation4], 1
    %10 = vsyncpa %s9, 0
    loop: start=0, step=1, limit=5
    $region2: #{sent_mha_attn.3} parent=1 // loop_pre_header
      _
    $region3: #{sent_mha_attn.3} parent=1 // loop_header
      %s12 = sphi 0, %s16
      %p13 = scmp.ge.s32.totalorder %s12, 5
      %s19 = sphi 0, %s38
      %s20 = sphi 0, %s34
      %s21 = sphi 0, %s30
      %s22 = sphi 0, %s19
      %s23 = sphi 0, %s20
      %s24 = sphi 0, %s21
      %s25 = sphi 0, %s22
      %s26 = sphi 0, %s23
      %s27 = sphi 0, %s24
      %s43 = sphi 0, %s45
      %s46 = sphi 0, %s43
      %s47 = sphi 0, %s46
      %s63 = sphi 0, %s47
      %s71 = sphi 0, %s73
      %s74 = sphi 0, %s71
      %s75 = sphi 0, %s74
      %s91 = sphi 0, %s75
      %s97 = sphi 0, %s99
      %s100 = sphi 0, %s97
      %s101 = sphi 0, %s100
      %s117 = sphi 0, %s101
      %s125 = sphi 0, %s127
      %s128 = sphi 0, %s125
      %s129 = sphi 0, %s128
      %s145 = sphi 0, %s129
    $region4: #{sent_mha_attn.3} parent=1 // loop_header_branch
      %15 = sbr.rel (%p13) target = $region8
    $region5: #{sent_mha_attn.3} parent=1 // loop_body
      %s17 = ssub.s32 %s12, 1
      %s18 = ssub.s32 %s12, 2
      %s28 = sadd.s32 1, %s21
      %p29 = scmp.ge.s32.totalorder %s28, 1
      %s30 = scalar_select %p29, 0, %s28
      %s31 = sadd.s32 1, %s20
      %s32 = scalar_select %p29, %s31, %s20
      %p33 = scmp.ge.s32.totalorder %s32, 3
      %s34 = scalar_select %p33, 0, %s32
      %s35 = sadd.s32 1, %s19
      %s36 = scalar_select %p33, %s35, %s19
      %p37 = scmp.ge.s32.totalorder %s36, 1
      %s38 = scalar_select %p37, 0, %s36
      %s39 = ssub.s32 %s19, %s38
      %s40 = ssub.s32 %s21, %s30
      %s41 = sor.u32 %s39, %s40
      %p42 = scmp.eq.s32.totalorder %s41, 0
      %s44 = sadd.s32 %s43, 1
      %s45 = scalar_select %p42, %s43, %s44
      %p48 = pneg %p42
      %p49 = scmp.eq.s32.totalorder %s12, 2
      %p50 = por %p48, %p49
      %p51 = scmp.ne.s32.totalorder %s43, %s46
      %p52 = scmp.eq.s32.totalorder %s12, 0
      %p53 = por %p51, %p52
      %p54 = scmp.ne.s32.totalorder %s43, %s46
      %p55 = scmp.eq.s32.totalorder %s17, 2
      %p56 = por %p54, %p55
      %p57 = scmp.ne.s32.totalorder %s46, %s47
      %p58 = scmp.eq.s32.totalorder %s17, 0
      %p59 = por %p57, %p58
      %p60 = scmp.ne.s32.totalorder %s46, %s47
      %p61 = scmp.eq.s32.totalorder %s18, 2
      %p62 = por %p60, %p61
      %p64 = scmp.ne.s32.totalorder %s47, %s63
      %p65 = scmp.eq.s32.totalorder %s18, 0
      %p66 = por %p64, %p65
      %s67 = ssub.s32 %s21, %s30
      %s68 = ssub.s32 %s20, %s34
      %s69 = sor.u32 %s67, %s68
      %p70 = scmp.eq.s32.totalorder %s69, 0
      %s72 = sadd.s32 %s71, 1
      %s73 = scalar_select %p70, %s71, %s72
      %p76 = pneg %p70
      %p77 = scmp.eq.s32.totalorder %s12, 2
      %p78 = por %p76, %p77
      %p79 = scmp.ne.s32.totalorder %s71, %s74
      %p80 = scmp.eq.s32.totalorder %s12, 0
      %p81 = por %p79, %p80
      %p82 = scmp.ne.s32.totalorder %s71, %s74
      %p83 = scmp.eq.s32.totalorder %s17, 2
      %p84 = por %p82, %p83
      %p85 = scmp.ne.s32.totalorder %s74, %s75
      %p86 = scmp.eq.s32.totalorder %s17, 0
      %p87 = por %p85, %p86
      %p88 = scmp.ne.s32.totalorder %s74, %s75
      %p89 = scmp.eq.s32.totalorder %s18, 2
      %p90 = por %p88, %p89
      %p92 = scmp.ne.s32.totalorder %s75, %s91
      %p93 = scmp.eq.s32.totalorder %s18, 0
      %p94 = por %p92, %p93
      %s95 = ssub.s32 %s20, %s34
      %p96 = scmp.eq.s32.totalorder %s95, 0
      %s98 = sadd.s32 %s97, 1
      %s99 = scalar_select %p96, %s97, %s98
      %p102 = pneg %p96
      %p103 = scmp.eq.s32.totalorder %s12, 2
      %p104 = por %p102, %p103
      %p105 = scmp.ne.s32.totalorder %s97, %s100
      %p106 = scmp.eq.s32.totalorder %s12, 0
      %p107 = por %p105, %p106
      %p108 = scmp.ne.s32.totalorder %s97, %s100
      %p109 = scmp.eq.s32.totalorder %s17, 2
      %p110 = por %p108, %p109
      %p111 = scmp.ne.s32.totalorder %s100, %s101
      %p112 = scmp.eq.s32.totalorder %s17, 0
      %p113 = por %p111, %p112
      %p114 = scmp.ne.s32.totalorder %s100, %s101
      %p115 = scmp.eq.s32.totalorder %s18, 2
      %p116 = por %p114, %p115
      %p118 = scmp.ne.s32.totalorder %s101, %s117
      %p119 = scmp.eq.s32.totalorder %s18, 0
      %p120 = por %p118, %p119
      %s121 = ssub.s32 %s19, %s38
      %s122 = ssub.s32 %s20, %s34
      %s123 = sor.u32 %s121, %s122
      %p124 = scmp.eq.s32.totalorder %s123, 0
      %s126 = sadd.s32 %s125, 1
      %s127 = scalar_select %p124, %s125, %s126
      %p130 = pneg %p124
      %p131 = scmp.eq.s32.totalorder %s12, 2
      %p132 = por %p130, %p131
      %p133 = scmp.ne.s32.totalorder %s125, %s128
      %p134 = scmp.eq.s32.totalorder %s12, 0
      %p135 = por %p133, %p134
      %p136 = scmp.ne.s32.totalorder %s125, %s128
      %p137 = scmp.eq.s32.totalorder %s17, 2
      %p138 = por %p136, %p137
      %p139 = scmp.ne.s32.totalorder %s128, %s129
      %p140 = scmp.eq.s32.totalorder %s17, 0
      %p141 = por %p139, %p140
      %p142 = scmp.ne.s32.totalorder %s128, %s129
      %p143 = scmp.eq.s32.totalorder %s18, 2
      %p144 = por %p142, %p143
      %p146 = scmp.ne.s32.totalorder %s129, %s145
      %p147 = scmp.eq.s32.totalorder %s18, 0
      %p148 = por %p146, %p147
      %p149 = scmp.le.s32.totalorder 1, %s12
      %p150 = scmp.lt.s32.totalorder %s12, 4
      %p151 = pnand %p149, %p150
      %p152 = pneg %p151
      // Predicated region
      $region9: #{sent_mha_attn.3} parent=5 // pred_check
        _
      $region10: #{sent_mha_attn.3} parent=5 // pred_check_branch
        %154 = sbr.rel (%p151) target = $region12
      $region11: #{sent_mha_attn.3} parent=5 // pred_region
        %s155 = ssub.s32 %s12, 1
        // Predicated region
        $region13: #{sent_mha_attn.3} parent=11 // pred_check
          %p156 = pneg %p59
        $region14: #{sent_mha_attn.3} parent=11 // pred_check_branch
          %158 = sbr.rel (%p156) target = $region16
        $region15: #{sent_mha_attn.3} parent=11 // pred_region
          %s159 = smul.u32 2, %s22
          %s160 = smul.u32 2, %s24
          %p161 = scmp.lt.s32.totalorder %s159, 1
          %s162 = scalar_select %p161, %s159, 1
          %p163 = scmp.lt.s32.totalorder %s160, 1
          %s164 = scalar_select %p163, %s160, 1
          %s165 = smul.addr %s162, 2
          %s166 = sadd.s32 %s164, %s165
          %s167 = smul.addr %s166, 8
          %s168 = scalar_lea.vmem %s0, %s167
          %s169 = smul.u32 2, %s22
          %s170 = smul.u32 2, %s24
        $region16: #{sent_mha_attn.3} parent=11 // pred_fallthru
          _
      $region12: #{sent_mha_attn.3} parent=5 // pred_fallthru
        _
      %p171 = scmp.lt.s32.totalorder %s12, 3
      // Predicated region
      $region17: #{sent_mha_attn.3} parent=5 // pred_check
        %p172 = pneg %p171
      $region18: #{sent_mha_attn.3} parent=5 // pred_check_branch
        %174 = sbr.rel (%p172) target = $region20
      $region19: #{sent_mha_attn.3} parent=5 // pred_region
        // Predicated region
        $region21: #{sent_mha_attn.3} parent=19 // pred_check
          %p175 = pneg %p81
        $region22: #{sent_mha_attn.3} parent=19 // pred_check_branch
          %177 = sbr.rel (%p175) target = $region24
        $region23: #{sent_mha_attn.3} parent=19 // pred_region
          %s178 = sand.u32 %s71, 1
          %s179 = scalar_lea.sflag [#allocation4], %s178
          %s180 = sand.u32 %s71, 1
          %s181 = smul.addr %s180, 512
          %s182 = scalar_lea.vmem [#allocation3], %s181
          %s183 = smul.u32 32, %s21
          %s184 = smul.u32 2, %s20
          %s186 = ssub.s32 8192, 8192
          %187 = vsyncadd %s179, %s186
          %s188 = smul.addr %s183, 6
          %s189 = sadd.s32 %s184, %s188
          %s190 = smul.addr %s189, 128
          %s191 = scalar_lea.hbm %s1, %s190
          %s192 = sshll.u32 %s182, 4
          %s193 = int_to_ptr.vmem [resolvable:$true] %s192
          %198 = dma.hbm_to_vmem [thread:$0]  %s191, 8192, %s193, %s179, 768, 256, 16
        $region24: #{sent_mha_attn.3} parent=19 // pred_fallthru
          _
        // Predicated region
        $region25: #{sent_mha_attn.3} parent=19 // pred_check
          %p199 = pneg %p107
        $region26: #{sent_mha_attn.3} parent=19 // pred_check_branch
          %201 = sbr.rel (%p199) target = $region28
        $region27: #{sent_mha_attn.3} parent=19 // pred_region
          %s202 = smul.u32 2, %s20
          %p203 = scmp.lt.s32.totalorder %s202, 5
          %s204 = scalar_select %p203, %s202, 5
          %s205 = scalar_lea.vmem %s2, %s204
          %s206 = smul.u32 2, %s20
        $region28: #{sent_mha_attn.3} parent=19 // pred_fallthru
          _
      $region20: #{sent_mha_attn.3} parent=5 // pred_fallthru
        _
      %p207 = scmp.le.s32.totalorder 1, %s12
      %p208 = scmp.lt.s32.totalorder %s12, 4
      %p209 = pnand %p207, %p208
      %p210 = pneg %p209
      // Predicated region
      $region29: #{sent_mha_attn.3} parent=5 // pred_check
        _
      $region30: #{sent_mha_attn.3} parent=5 // pred_check_branch
        %212 = sbr.rel (%p209) target = $region32
      $region31: #{sent_mha_attn.3} parent=5 // pred_region
        %s213 = ssub.s32 %s12, 1
        %s214 = sand.u32 %s74, 1
        %s215 = scalar_lea.sflag [#allocation4], %s214
        %s216 = sand.u32 %s74, 1
        %s217 = smul.addr %s216, 512
        %s218 = scalar_lea.vmem [#allocation3], %s217
        // Predicated region
        $region33: #{sent_mha_attn.3} parent=31 // pred_check
          %p219 = pneg %p87
        $region34: #{sent_mha_attn.3} parent=31 // pred_check_branch
          %221 = sbr.rel (%p219) target = $region36
        $region35: #{sent_mha_attn.3} parent=31 // pred_region
          %222 = dma.done %s215, 8192
        $region36: #{sent_mha_attn.3} parent=31 // pred_fallthru
          _
        %s223 = smul.u32 2, %s22
        %s224 = smul.u32 2, %s24
        %p225 = scmp.lt.s32.totalorder %s223, 1
        %s226 = scalar_select %p225, %s223, 1
        %p227 = scmp.lt.s32.totalorder %s224, 1
        %s228 = scalar_select %p227, %s224, 1
        %s229 = smul.addr %s226, 2
        %s230 = sadd.s32 %s228, %s229
        %s231 = smul.addr %s230, 8
        %s232 = scalar_lea.vmem %s0, %s231
        %p233 = pneg %p59
        %p234 = pneg %p56
        %s235 = sand.u32 %s74, 1
        %s236 = scalar_lea.sflag [#allocation4], %s235
        %s237 = sand.u32 %s74, 1
        %s238 = smul.addr %s237, 512
        %s239 = scalar_lea.vmem [#allocation3], %s238
        %p240 = pneg %p87
        %p241 = pneg %p84
        %s242 = smul.u32 2, %s23
        %p243 = scmp.lt.s32.totalorder %s242, 5
        %s244 = scalar_select %p243, %s242, 5
        %s245 = scalar_lea.vmem %s2, %s244
        %p246 = pneg %p113
        %p247 = pneg %p110
        %p248 = pneg %p141
        %p249 = pneg %p138
        %s250 = sand.u32 %s128, 1
        %s251 = sand.u32 %s128, 1
        %s252 = smul.addr %s251, 32
        %s253 = scalar_lea.vmem [#allocation5], %s252
        %s254 = smul.u32 2, %s22
        %s255 = smul.u32 2, %s24
        %p256 = scmp.lt.s32.totalorder %s254, 1
        %s257 = scalar_select %p256, %s254, 1
        %p258 = scmp.lt.s32.totalorder %s255, 1
        %s259 = scalar_select %p258, %s255, 1
        %s260 = smul.addr %s257, 2
        %s261 = sadd.s32 %s259, %s260
        %s262 = smul.addr %s261, 8
        %s263 = scalar_lea.vmem %s0, %s262
        %s264 = smul.u32 2, %s22
        %s265 = smul.u32 2, %s24
        %s266 = smul.u32 32, %s24
        %s267 = smul.u32 2, %s23
        %s268 = smul.u32 2, %s23
        %p269 = scmp.lt.s32.totalorder %s268, 5
        %s270 = scalar_select %p269, %s268, 5
        %s271 = scalar_lea.vmem %s2, %s270
        %s272 = smul.u32 2, %s23
        %s273 = smul.u32 2, %s22
        %s274 = smul.u32 2, %s23
        %p275 = scmp.eq.s32.totalorder %s24, 0
        // Predicated region
        $region37: #{sent_mha_attn.3} parent=31 // pred_check
          %p276 = pneg %p275
        $region38: #{sent_mha_attn.3} parent=31 // pred_check_branch
          %278 = sbr.rel (%p276) target = $region40
        $region39: #{sent_mha_attn.3} parent=31 // pred_region
          %279 = vst [vmem:[#allocation2] sm:$0xff] 0.0
          %280 = vst [vmem:[#allocation2 + $0x8] sm:$0xff] 0.0
          %281 = vst [vmem:[#allocation2 + $0x10] sm:$0xff] 0.0
          %282 = vst [vmem:[#allocation2 + $0x18] sm:$0xff] 0.0
        $region40: #{sent_mha_attn.3} parent=31 // pred_fallthru
          _
        %v283 = vld [vmem:[#allocation2] sm:$0xff]
        %v284 = vld [vmem:[#allocation2 + $0x8] sm:$0xff]
        %v285 = vld [vmem:[#allocation2 + $0x10] sm:$0xff]
        %v286 = vld [vmem:[#allocation2 + $0x18] sm:$0xff]
        %v287 = vld [vmem:[%s263] sm:$0xff]
        %v288 = vld [vmem:[%s263 + $0x8] sm:$0xff]
        %v289 = vld [vmem:[%s263 + $0x10] sm:$0xff]
        %v290 = vld [vmem:[%s263 + $0x18] sm:$0xff]
        %v291 = vld [vmem:[%s218] sm:$0xff]
        %v292 = vld [vmem:[%s218 + $0x8] sm:$0xff]
        %v293 = vld [vmem:[%s218 + $0x10] sm:$0xff]
        %v294 = vld [vmem:[%s218 + $0x18] sm:$0xff]
        %v295 = vld [vmem:[%s218 + $0x20] sm:$0xff]
        %v296 = vld [vmem:[%s218 + $0x28] sm:$0xff]
        %v297 = vld [vmem:[%s218 + $0x30] sm:$0xff]
        %v298 = vld [vmem:[%s218 + $0x38] sm:$0xff]
        %v299 = vld [vmem:[%s218 + $0x40] sm:$0xff]
        %v300 = vld [vmem:[%s218 + $0x48] sm:$0xff]
        %v301 = vld [vmem:[%s218 + $0x50] sm:$0xff]
        %v302 = vld [vmem:[%s218 + $0x58] sm:$0xff]
        %v303 = vld [vmem:[%s218 + $0x60] sm:$0xff]
        %v304 = vld [vmem:[%s218 + $0x68] sm:$0xff]
        %v305 = vld [vmem:[%s218 + $0x70] sm:$0xff]
        %v306 = vld [vmem:[%s218 + $0x78] sm:$0xff]
        %v307 = vld [vmem:[%s218 + $0x80] sm:$0xff]
        %v308 = vld [vmem:[%s218 + $0x88] sm:$0xff]
        %v309 = vld [vmem:[%s218 + $0x90] sm:$0xff]
        %v310 = vld [vmem:[%s218 + $0x98] sm:$0xff]
        %v311 = vld [vmem:[%s218 + $0xa0] sm:$0xff]
        %v312 = vld [vmem:[%s218 + $0xa8] sm:$0xff]
        %v313 = vld [vmem:[%s218 + $0xb0] sm:$0xff]
        %v314 = vld [vmem:[%s218 + $0xb8] sm:$0xff]
        %v315 = vld [vmem:[%s218 + $0xc0] sm:$0xff]
        %v316 = vld [vmem:[%s218 + $0xc8] sm:$0xff]
        %v317 = vld [vmem:[%s218 + $0xd0] sm:$0xff]
        %v318 = vld [vmem:[%s218 + $0xd8] sm:$0xff]
        %v319 = vld [vmem:[%s218 + $0xe0] sm:$0xff]
        %v320 = vld [vmem:[%s218 + $0xe8] sm:$0xff]
        %v321 = vld [vmem:[%s218 + $0xf0] sm:$0xff]
        %v322 = vld [vmem:[%s218 + $0xf8] sm:$0xff]
        %v323 = vld [vmem:[%s218 + $0x100] sm:$0xff]
        %v324 = vld [vmem:[%s218 + $0x108] sm:$0xff]
        %v325 = vld [vmem:[%s218 + $0x110] sm:$0xff]
        %v326 = vld [vmem:[%s218 + $0x118] sm:$0xff]
        %v327 = vld [vmem:[%s218 + $0x120] sm:$0xff]
        %v328 = vld [vmem:[%s218 + $0x128] sm:$0xff]
        %v329 = vld [vmem:[%s218 + $0x130] sm:$0xff]
        %v330 = vld [vmem:[%s218 + $0x138] sm:$0xff]
        %v331 = vld [vmem:[%s218 + $0x140] sm:$0xff]
        %v332 = vld [vmem:[%s218 + $0x148] sm:$0xff]
        %v333 = vld [vmem:[%s218 + $0x150] sm:$0xff]
        %v334 = vld [vmem:[%s218 + $0x158] sm:$0xff]
        %v335 = vld [vmem:[%s218 + $0x160] sm:$0xff]
        %v336 = vld [vmem:[%s218 + $0x168] sm:$0xff]
        %v337 = vld [vmem:[%s218 + $0x170] sm:$0xff]
        %v338 = vld [vmem:[%s218 + $0x178] sm:$0xff]
        %v339 = vld [vmem:[%s218 + $0x180] sm:$0xff]
        %v340 = vld [vmem:[%s218 + $0x188] sm:$0xff]
        %v341 = vld [vmem:[%s218 + $0x190] sm:$0xff]
        %v342 = vld [vmem:[%s218 + $0x198] sm:$0xff]
        %v343 = vld [vmem:[%s218 + $0x1a0] sm:$0xff]
        %v344 = vld [vmem:[%s218 + $0x1a8] sm:$0xff]
        %v345 = vld [vmem:[%s218 + $0x1b0] sm:$0xff]
        %v346 = vld [vmem:[%s218 + $0x1b8] sm:$0xff]
        %v347 = vld [vmem:[%s218 + $0x1c0] sm:$0xff]
        %v348 = vld [vmem:[%s218 + $0x1c8] sm:$0xff]
        %v349 = vld [vmem:[%s218 + $0x1d0] sm:$0xff]
        %v350 = vld [vmem:[%s218 + $0x1d8] sm:$0xff]
        %v351 = vld [vmem:[%s218 + $0x1e0] sm:$0xff]
        %v352 = vld [vmem:[%s218 + $0x1e8] sm:$0xff]
        %v353 = vld [vmem:[%s218 + $0x1f0] sm:$0xff]
        %v354 = vld [vmem:[%s218 + $0x1f8] sm:$0xff]
        %355 = vmatprep.subr.mxu0 %v292
        %356 = vmatpush1.msra.mxu0 %v291
        %357 = vmatprep.subr.mxu0 %v294
        %358 = vmatpush1.msra.mxu0 %v293
        %359 = vmatprep.subr.mxu0 %v296
        %360 = vmatpush1.msra.mxu0 %v295
        %361 = vmatprep.subr.mxu0 %v298
        %362 = vmatpush1.msra.mxu0 %v297
        %363 = vmatprep.subr.mxu0 %v300
        %364 = vmatpush1.msra.mxu0 %v299
        %365 = vmatprep.subr.mxu0 %v302
        %366 = vmatpush1.msra.mxu0 %v301
        %367 = vmatprep.subr.mxu0 %v304
        %368 = vmatpush1.msra.mxu0 %v303
        %369 = vmatprep.subr.mxu0 %v306
        %370 = vmatpush1.msra.mxu0 %v305
        %371 = vmatprep.subr.mxu0 %v308
        %372 = vmatpush1.msra.mxu0 %v307
        %373 = vmatprep.subr.mxu0 %v310
        %374 = vmatpush1.msra.mxu0 %v309
        %375 = vmatprep.subr.mxu0 %v312
        %376 = vmatpush1.msra.mxu0 %v311
        %377 = vmatprep.subr.mxu0 %v314
        %378 = vmatpush1.msra.mxu0 %v313
        %379 = vmatprep.subr.mxu0 %v316
        %380 = vmatpush1.msra.mxu0 %v315
        %381 = vmatprep.subr.mxu0 %v318
        %382 = vmatpush1.msra.mxu0 %v317
        %383 = vmatprep.subr.mxu0 %v320
        %384 = vmatpush1.msra.mxu0 %v319
        %385 = vmatprep.subr.mxu0 %v322
        %386 = vmatpush1.msra.mxu0 %v321
        %387 = vmatprep.subr.mxu0 %v324
        %388 = vmatpush1.msra.mxu0 %v323
        %389 = vmatprep.subr.mxu0 %v326
        %390 = vmatpush1.msra.mxu0 %v325
        %391 = vmatprep.subr.mxu0 %v328
        %392 = vmatpush1.msra.mxu0 %v327
        %393 = vmatprep.subr.mxu0 %v330
        %394 = vmatpush1.msra.mxu0 %v329
        %395 = vmatprep.subr.mxu0 %v332
        %396 = vmatpush1.msra.mxu0 %v331
        %397 = vmatprep.subr.mxu0 %v334
        %398 = vmatpush1.msra.mxu0 %v333
        %399 = vmatprep.subr.mxu0 %v336
        %400 = vmatpush1.msra.mxu0 %v335
        %401 = vmatprep.subr.mxu0 %v338
        %402 = vmatpush1.msra.mxu0 %v337
        %403 = vmatprep.subr.mxu0 %v340
        %404 = vmatpush1.msra.mxu0 %v339
        %405 = vmatprep.subr.mxu0 %v342
        %406 = vmatpush1.msra.mxu0 %v341
        %407 = vmatprep.subr.mxu0 %v344
        %408 = vmatpush1.msra.mxu0 %v343
        %409 = vmatprep.subr.mxu0 %v346
        %410 = vmatpush1.msra.mxu0 %v345
        %411 = vmatprep.subr.mxu0 %v348
        %412 = vmatpush1.msra.mxu0 %v347
        %413 = vmatprep.subr.mxu0 %v350
        %414 = vmatpush1.msra.mxu0 %v349
        %415 = vmatprep.subr.mxu0 %v352
        %416 = vmatpush1.msra.mxu0 %v351
        %417 = vmatprep.subr.mxu0 %v354
        %418 = vmatpush1.msra.mxu0 %v353
        %419 = vmatprep.mubr.f32.mxu0 %v288
        %420 = vmatmul.mubr.f32.gmra.mrb[0].mxu0 %v287
        %v421 = vpop.f32.mrb[0].mxu0
        %v422 = vadd.f32 0.0, %v421
        %v423 = vpop.f32.mrb[0].mxu0
        %v424 = vadd.f32 0.0, %v423
        %425 = vmatprep.mubr.f32.mxu0 %v290
        %426 = vmatmul.mubr.f32.gmra.mrb[0].mxu0 %v289
        %v427 = vpop.f32.mrb[0].mxu0
        %v428 = vadd.f32 0.0, %v427
        %v429 = vpop.f32.mrb[0].mxu0
        %v430 = vadd.f32 0.0, %v429
        %431 = vdwg.mxu0
        %v432 = vadd.f32 %v283, %v422
        %v433 = vadd.f32 %v284, %v424
        %v434 = vadd.f32 %v285, %v428
        %v435 = vadd.f32 %v286, %v430
        %436 = vst [vmem:[#allocation2] sm:$0xff] %v432
        %437 = vst [vmem:[#allocation2 + $0x8] sm:$0xff] %v433
        %438 = vst [vmem:[#allocation2 + $0x10] sm:$0xff] %v434
        %439 = vst [vmem:[#allocation2 + $0x18] sm:$0xff] %v435
        // Predicated region
        $region41: #{sent_mha_attn.3} parent=31 // pred_check
          %p440 = pneg %p275
        $region42: #{sent_mha_attn.3} parent=31 // pred_check_branch
          %442 = sbr.rel (%p440) target = $region44
        $region43: #{sent_mha_attn.3} parent=31 // pred_region
          %v443 = vld [vmem:[#allocation2] sm:$0xff]
          %v444 = vld [vmem:[#allocation2 + $0x8] sm:$0xff]
          %v445 = vld [vmem:[#allocation2 + $0x10] sm:$0xff]
          %v446 = vld [vmem:[#allocation2 + $0x18] sm:$0xff]
          %v447 = vld [vmem:[%s271] sm:$0x3]
          %v449 = vlaneseq
          %v450 = vshrl.u32 %v449, 7
          %v451 = vsub.s32 0, %v450
          %v452 = vrot.slane %v447, %v451
          %v453 = vlaneseq
          %v454 = vshrl.u32 %v453, 7
          %v455 = vsub.s32 1, %v454
          %v456 = vrot.slane %v447, %v455
          %v459 = vadd.f32 %v443, %v452
          %v460 = vadd.f32 %v444, %v456
          %v461 = vadd.f32 %v445, %v452
          %v462 = vadd.f32 %v446, %v456
          %463 = vst [vmem:[%s253] sm:$0xff] %v459
          %464 = vst [vmem:[%s253 + $0x8] sm:$0xff] %v460
          %465 = vst [vmem:[%s253 + $0x10] sm:$0xff] %v461
          %466 = vst [vmem:[%s253 + $0x18] sm:$0xff] %v462
        $region44: #{sent_mha_attn.3} parent=31 // pred_fallthru
          _
        %s467 = sand.u32 %s128, 1
        %s468 = sand.u32 %s128, 1
        %s469 = smul.addr %s468, 32
        %s470 = scalar_lea.vmem [#allocation5], %s469
        // Predicated region
        $region45: #{sent_mha_attn.3} parent=31 // pred_check
          %p471 = pneg %p138
        $region46: #{sent_mha_attn.3} parent=31 // pred_check_branch
          %473 = sbr.rel (%p471) target = $region48
        $region47: #{sent_mha_attn.3} parent=31 // pred_region
          %s474 = smul.u32 2, %s22
          %s475 = smul.u32 2, %s23
          %s476 = smul.addr %s474, 6
          %s477 = sadd.s32 %s475, %s476
          %s478 = smul.addr %s477, 8
          %s479 = scalar_lea.vmem %s3, %s478
          // Predicated region
          $region49: #{sent_mha_attn.3} parent=47 // pred_check
            _
          $region50: #{sent_mha_attn.3} parent=47 // pred_check_branch
            %481 = sbr.rel (0) target = $region52
          $region51: #{sent_mha_attn.3} parent=47 // pred_region
            // Predicated region
            $region53: #{sent_mha_attn.3} parent=51 // pred_check
              _
            $region54: #{sent_mha_attn.3} parent=51 // pred_check_branch
              %483 = sbr.rel (0) target = $region56
            $region55: #{sent_mha_attn.3} parent=51 // pred_region
              loop: start=0, step=1, limit=1
              $region57: #{sent_mha_attn.3} parent=55 // loop_pre_header
                _
              $region58: #{sent_mha_attn.3} parent=55 // loop_header
                %s485 = sphi 0, %s489
                %p486 = scmp.ge.s32.totalorder %s485, 1
                %s490 = sphi %s470, %s470
                %s491 = sphi %s479, %s479
              $region59: #{sent_mha_attn.3} parent=55 // loop_header_branch
                %488 = sbr.rel (%p486) target = $region63
              $region60: #{sent_mha_attn.3} parent=55 // loop_body
                %v492 = vld [vmem:[%s490] sm:$0xff]
                %493 = vst [vmem:[%s491] sm:$0xff] %v492
                %v494 = vld [vmem:[%s490 + $0x8] sm:$0xff]
                %495 = vst [vmem:[%s491 + $0x8] sm:$0xff] %v494
                %v496 = vld [vmem:[%s490 + $0x10] sm:$0xff]
                %497 = vst [vmem:[%s491 + $0x30] sm:$0xff] %v496
                %v498 = vld [vmem:[%s490 + $0x18] sm:$0xff]
                %499 = vst [vmem:[%s491 + $0x38] sm:$0xff] %v498
              $region61: #{sent_mha_attn.3} parent=55 // loop_footer
                %s489 = sadd.s32 1, %s485
              $region62: #{sent_mha_attn.3} parent=55 // loop_footer_branch
                %484 = sbr.rel target = $region58
              $region63: #{sent_mha_attn.3} parent=55 // loop_exit
                _
            $region56: #{sent_mha_attn.3} parent=51 // pred_fallthru
              _
            // Predicated region
            $region64: #{sent_mha_attn.3} parent=51 // pred_check
              _
            $region65: #{sent_mha_attn.3} parent=51 // pred_check_branch
              %501 = sbr.rel target = $region67
            $region66: #{sent_mha_attn.3} parent=51 // pred_region
              _
            $region67: #{sent_mha_attn.3} parent=51 // pred_fallthru
              _
          $region52: #{sent_mha_attn.3} parent=47 // pred_fallthru
            _
          %502 = vnop
        $region48: #{sent_mha_attn.3} parent=31 // pred_fallthru
          _
      $region32: #{sent_mha_attn.3} parent=5 // pred_fallthru
        _
      %p503 = scmp.le.s32.totalorder 2, %s12
      // Predicated region
      $region68: #{sent_mha_attn.3} parent=5 // pred_check
        %p504 = pneg %p503
      $region69: #{sent_mha_attn.3} parent=5 // pred_check_branch
        %506 = sbr.rel (%p504) target = $region71
      $region70: #{sent_mha_attn.3} parent=5 // pred_region
        %s507 = ssub.s32 %s12, 2
        // Predicated region
        $region72: #{sent_mha_attn.3} parent=70 // pred_check
          %p508 = pneg %p144
        $region73: #{sent_mha_attn.3} parent=70 // pred_check_branch
          %510 = sbr.rel (%p508) target = $region75
        $region74: #{sent_mha_attn.3} parent=70 // pred_region
          %s511 = sand.u32 %s129, 1
          %s512 = sand.u32 %s129, 1
          %s513 = smul.addr %s512, 32
          %s514 = scalar_lea.vmem [#allocation5], %s513
        $region75: #{sent_mha_attn.3} parent=70 // pred_fallthru
          _
      $region71: #{sent_mha_attn.3} parent=5 // pred_fallthru
        _
    $region6: #{sent_mha_attn.3} parent=1 // loop_footer
      %s16 = sadd.s32 1, %s12
    $region7: #{sent_mha_attn.3} parent=1 // loop_footer_branch
      %11 = sbr.rel target = $region3
    $region8: #{sent_mha_attn.3} parent=1 // loop_exit
      _
    %515 = vsyncpa [#allocation4], 1
    %s516 = scalar_lea.sflag [#allocation4], 1
    %517 = vsyncpa %s516, 1

// kernel: sent_mha_attn.5
$region0: #{sent_mha_attn.5}
  #allocation0 [shape = 'u32[]', space=smem, size = 0x4, offset = 0x4, fixed_abs, tag = 'smem constant byte address 0x4 - core index']
  #allocation1 [shape = 'u32[144,128]{1,0:T(1,128)}', space=vmem, size = 0x12000, scoped, tag = 'internal scratch']
  %s0 = inlined_call_operand.vmem [shape: f32[16,256], index: 0, kind: input, shape index: {}]
  %s1 = inlined_call_operand.vmem [shape: f32[16,256], index: 1, kind: input, shape index: {}]
  %s2 = inlined_call_operand.vmem [shape: f32[256,512], index: 2, kind: input, shape index: {}]
  %s3 = inlined_call_operand.vmem [shape: f32[1,512], index: 3, kind: input, shape index: {}]
  %s4 = inlined_call_operand.vmem [shape: f32[512,256], index: 4, kind: input, shape index: {}]
  %s5 = inlined_call_operand.vmem [shape: f32[1,256], index: 5, kind: input, shape index: {}]
  %s6 = inlined_call_operand.hbm [shape: f32[256,256], index: 6, kind: input, shape index: {}]
  %s7 = inlined_call_operand.vmem [shape: f32[1,256], index: 7, kind: input, shape index: {}]
  %s8 = inlined_call_operand.vmem [shape: f32[1,256], index: 8, kind: input, shape index: {}]
  %s9 = inlined_call_operand.vmem [shape: f32[1,256], index: 9, kind: input, shape index: {}]
  %s10 = inlined_call_operand.vmem [shape: f32[16,256], index: 10, kind: output, shape index: {}]
  %s11 = sld [smem:[#allocation0]]
  $region54: #{sent_mha_attn.5} parent=0
    _
  %s13 = ssub.s32 1, %s11
  %s14 = scalar_select 0, %s13, %s11
  $region1: #{sent_mha_attn.5} parent=0
    #allocation2 [shape = 'u8[262144]{0}', space=vmem, size = 0x40000, scoped, tag = 'input window, operand 6, single buffered']
    #allocation3 [shape = 's32[1]{0}', space=sflag, size = 0x4, scoped, tag = 'scoped memory for sent_mha_attn.5']
    %15 = vsyncpa [#allocation3], 0
    // Predicated region
    $region2: #{sent_mha_attn.5} parent=1 // pred_check
      _
    $region3: #{sent_mha_attn.5} parent=1 // pred_check_branch
      %17 = sbr.rel (0) target = $region5
    $region4: #{sent_mha_attn.5} parent=1 // pred_region
      _
    $region5: #{sent_mha_attn.5} parent=1 // pred_fallthru
      _
    // Predicated region
    $region6: #{sent_mha_attn.5} parent=1 // pred_check
      _
    $region7: #{sent_mha_attn.5} parent=1 // pred_check_branch
      %19 = sbr.rel (0) target = $region9
    $region8: #{sent_mha_attn.5} parent=1 // pred_region
      _
    $region9: #{sent_mha_attn.5} parent=1 // pred_fallthru
      _
    // Predicated region
    $region10: #{sent_mha_attn.5} parent=1 // pred_check
      _
    $region11: #{sent_mha_attn.5} parent=1 // pred_check_branch
      %21 = sbr.rel (0) target = $region13
    $region12: #{sent_mha_attn.5} parent=1 // pred_region
      _
    $region13: #{sent_mha_attn.5} parent=1 // pred_fallthru
      _
    // Predicated region
    $region14: #{sent_mha_attn.5} parent=1 // pred_check
      _
    $region15: #{sent_mha_attn.5} parent=1 // pred_check_branch
      %23 = sbr.rel (0) target = $region17
    $region16: #{sent_mha_attn.5} parent=1 // pred_region
      _
    $region17: #{sent_mha_attn.5} parent=1 // pred_fallthru
      _
    // Predicated region
    $region18: #{sent_mha_attn.5} parent=1 // pred_check
      _
    $region19: #{sent_mha_attn.5} parent=1 // pred_check_branch
      %25 = sbr.rel (0) target = $region21
    $region20: #{sent_mha_attn.5} parent=1 // pred_region
      _
    $region21: #{sent_mha_attn.5} parent=1 // pred_fallthru
      _
    // Predicated region
    $region22: #{sent_mha_attn.5} parent=1 // pred_check
      _
    $region23: #{sent_mha_attn.5} parent=1 // pred_check_branch
      %27 = sbr.rel (0) target = $region25
    $region24: #{sent_mha_attn.5} parent=1 // pred_region
      _
    $region25: #{sent_mha_attn.5} parent=1 // pred_fallthru
      _
    // Predicated region
    $region26: #{sent_mha_attn.5} parent=1 // pred_check
      _
    $region27: #{sent_mha_attn.5} parent=1 // pred_check_branch
      %29 = sbr.rel (0) target = $region29
    $region28: #{sent_mha_attn.5} parent=1 // pred_region
      %s31 = ssub.s32 8192, 8192
      %32 = vsyncadd [#allocation3], %s31
      %s33 = sshll.u32 [#allocation2], 4
      %s34 = int_to_ptr.vmem [resolvable:$true] %s33
      %39 = dma.hbm_to_vmem [thread:$0]  %s6, 8192, %s34, [#allocation3], 256, 256, 16
    $region29: #{sent_mha_attn.5} parent=1 // pred_fallthru
      _
    // Predicated region
    $region30: #{sent_mha_attn.5} parent=1 // pred_check
      _
    $region31: #{sent_mha_attn.5} parent=1 // pred_check_branch
      %41 = sbr.rel (0) target = $region33
    $region32: #{sent_mha_attn.5} parent=1 // pred_region
      _
    $region33: #{sent_mha_attn.5} parent=1 // pred_fallthru
      _
    // Predicated region
    $region34: #{sent_mha_attn.5} parent=1 // pred_check
      _
    $region35: #{sent_mha_attn.5} parent=1 // pred_check_branch
      %43 = sbr.rel (0) target = $region37
    $region36: #{sent_mha_attn.5} parent=1 // pred_region
      _
    $region37: #{sent_mha_attn.5} parent=1 // pred_fallthru
      _
    // Predicated region
    $region38: #{sent_mha_attn.5} parent=1 // pred_check
      _
    $region39: #{sent_mha_attn.5} parent=1 // pred_check_branch
      %45 = sbr.rel (0) target = $region41
    $region40: #{sent_mha_attn.5} parent=1 // pred_region
      _
    $region41: #{sent_mha_attn.5} parent=1 // pred_fallthru
      _
    // Predicated region
    $region42: #{sent_mha_attn.5} parent=1 // pred_check
      _
    $region43: #{sent_mha_attn.5} parent=1 // pred_check_branch
      %47 = sbr.rel (0) target = $region45
    $region44: #{sent_mha_attn.5} parent=1 // pred_region
      %48 = dma.done [#allocation3], 8192
    $region45: #{sent_mha_attn.5} parent=1 // pred_fallthru
      _
    %v49 = vld [vmem:[%s0] sm:$0xff]
    %v50 = vld [vmem:[%s0 + $0x8] sm:$0xff]
    %v51 = vld [vmem:[%s0 + $0x10] sm:$0xff]
    %v52 = vld [vmem:[%s0 + $0x18] sm:$0xff]
    %v53 = vld [vmem:[%s2] sm:$0xff]
    %v54 = vld [vmem:[%s2 + $0x8] sm:$0xff]
    %v55 = vld [vmem:[%s2 + $0x10] sm:$0xff]
    %v56 = vld [vmem:[%s2 + $0x18] sm:$0xff]
    %v57 = vld [vmem:[%s2 + $0x20] sm:$0xff]
    %v58 = vld [vmem:[%s2 + $0x28] sm:$0xff]
    %v59 = vld [vmem:[%s2 + $0x30] sm:$0xff]
    %v60 = vld [vmem:[%s2 + $0x38] sm:$0xff]
    %v61 = vld [vmem:[%s2 + $0x40] sm:$0xff]
    %v62 = vld [vmem:[%s2 + $0x48] sm:$0xff]
    %v63 = vld [vmem:[%s2 + $0x50] sm:$0xff]
    %v64 = vld [vmem:[%s2 + $0x58] sm:$0xff]
    %v65 = vld [vmem:[%s2 + $0x60] sm:$0xff]
    %v66 = vld [vmem:[%s2 + $0x68] sm:$0xff]
    %v67 = vld [vmem:[%s2 + $0x70] sm:$0xff]
    %v68 = vld [vmem:[%s2 + $0x78] sm:$0xff]
    %v69 = vld [vmem:[%s2 + $0x80] sm:$0xff]
    %v70 = vld [vmem:[%s2 + $0x88] sm:$0xff]
    %v71 = vld [vmem:[%s2 + $0x90] sm:$0xff]
    %v72 = vld [vmem:[%s2 + $0x98] sm:$0xff]
    %v73 = vld [vmem:[%s2 + $0xa0] sm:$0xff]
    %v74 = vld [vmem:[%s2 + $0xa8] sm:$0xff]
    %v75 = vld [vmem:[%s2 + $0xb0] sm:$0xff]
    %v76 = vld [vmem:[%s2 + $0xb8] sm:$0xff]
    %v77 = vld [vmem:[%s2 + $0xc0] sm:$0xff]
    %v78 = vld [vmem:[%s2 + $0xc8] sm:$0xff]
    %v79 = vld [vmem:[%s2 + $0xd0] sm:$0xff]
    %v80 = vld [vmem:[%s2 + $0xd8] sm:$0xff]
    %v81 = vld [vmem:[%s2 + $0xe0] sm:$0xff]
    %v82 = vld [vmem:[%s2 + $0xe8] sm:$0xff]
    %v83 = vld [vmem:[%s2 + $0xf0] sm:$0xff]
    %v84 = vld [vmem:[%s2 + $0xf8] sm:$0xff]
    %v85 = vld [vmem:[%s2 + $0x100] sm:$0xff]
    %v86 = vld [vmem:[%s2 + $0x108] sm:$0xff]
    %v87 = vld [vmem:[%s2 + $0x110] sm:$0xff]
    %v88 = vld [vmem:[%s2 + $0x118] sm:$0xff]
    %v89 = vld [vmem:[%s2 + $0x120] sm:$0xff]
    %v90 = vld [vmem:[%s2 + $0x128] sm:$0xff]
    %v91 = vld [vmem:[%s2 + $0x130] sm:$0xff]
    %v92 = vld [vmem:[%s2 + $0x138] sm:$0xff]
    %v93 = vld [vmem:[%s2 + $0x140] sm:$0xff]
    %v94 = vld [vmem:[%s2 + $0x148] sm:$0xff]
    %v95 = vld [vmem:[%s2 + $0x150] sm:$0xff]
    %v96 = vld [vmem:[%s2 + $0x158] sm:$0xff]
    %v97 = vld [vmem:[%s2 + $0x160] sm:$0xff]
    %v98 = vld [vmem:[%s2 + $0x168] sm:$0xff]
    %v99 = vld [vmem:[%s2 + $0x170] sm:$0xff]
    %v100 = vld [vmem:[%s2 + $0x178] sm:$0xff]
    %v101 = vld [vmem:[%s2 + $0x180] sm:$0xff]
    %v102 = vld [vmem:[%s2 + $0x188] sm:$0xff]
    %v103 = vld [vmem:[%s2 + $0x190] sm:$0xff]
    %v104 = vld [vmem:[%s2 + $0x198] sm:$0xff]
    %v105 = vld [vmem:[%s2 + $0x1a0] sm:$0xff]
    %v106 = vld [vmem:[%s2 + $0x1a8] sm:$0xff]
    %v107 = vld [vmem:[%s2 + $0x1b0] sm:$0xff]
    %v108 = vld [vmem:[%s2 + $0x1b8] sm:$0xff]
    %v109 = vld [vmem:[%s2 + $0x1c0] sm:$0xff]
    %v110 = vld [vmem:[%s2 + $0x1c8] sm:$0xff]
    %v111 = vld [vmem:[%s2 + $0x1d0] sm:$0xff]
    %v112 = vld [vmem:[%s2 + $0x1d8] sm:$0xff]
    %v113 = vld [vmem:[%s2 + $0x1e0] sm:$0xff]
    %v114 = vld [vmem:[%s2 + $0x1e8] sm:$0xff]
    %v115 = vld [vmem:[%s2 + $0x1f0] sm:$0xff]
    %v116 = vld [vmem:[%s2 + $0x1f8] sm:$0xff]
    %v117 = vld [vmem:[%s2 + $0x200] sm:$0xff]
    %v118 = vld [vmem:[%s2 + $0x208] sm:$0xff]
    %v119 = vld [vmem:[%s2 + $0x210] sm:$0xff]
    %v120 = vld [vmem:[%s2 + $0x218] sm:$0xff]
    %v121 = vld [vmem:[%s2 + $0x220] sm:$0xff]
    %v122 = vld [vmem:[%s2 + $0x228] sm:$0xff]
    %v123 = vld [vmem:[%s2 + $0x230] sm:$0xff]
    %v124 = vld [vmem:[%s2 + $0x238] sm:$0xff]
    %v125 = vld [vmem:[%s2 + $0x240] sm:$0xff]
    %v126 = vld [vmem:[%s2 + $0x248] sm:$0xff]
    %v127 = vld [vmem:[%s2 + $0x250] sm:$0xff]
    %v128 = vld [vmem:[%s2 + $0x258] sm:$0xff]
    %v129 = vld [vmem:[%s2 + $0x260] sm:$0xff]
    %v130 = vld [vmem:[%s2 + $0x268] sm:$0xff]
    %v131 = vld [vmem:[%s2 + $0x270] sm:$0xff]
    %v132 = vld [vmem:[%s2 + $0x278] sm:$0xff]
    %v133 = vld [vmem:[%s2 + $0x280] sm:$0xff]
    %v134 = vld [vmem:[%s2 + $0x288] sm:$0xff]
    %v135 = vld [vmem:[%s2 + $0x290] sm:$0xff]
    %v136 = vld [vmem:[%s2 + $0x298] sm:$0xff]
    %v137 = vld [vmem:[%s2 + $0x2a0] sm:$0xff]
    %v138 = vld [vmem:[%s2 + $0x2a8] sm:$0xff]
    %v139 = vld [vmem:[%s2 + $0x2b0] sm:$0xff]
    %v140 = vld [vmem:[%s2 + $0x2b8] sm:$0xff]
    %v141 = vld [vmem:[%s2 + $0x2c0] sm:$0xff]
    %v142 = vld [vmem:[%s2 + $0x2c8] sm:$0xff]
    %v143 = vld [vmem:[%s2 + $0x2d0] sm:$0xff]
    %v144 = vld [vmem:[%s2 + $0x2d8] sm:$0xff]
    %v145 = vld [vmem:[%s2 + $0x2e0] sm:$0xff]
    %v146 = vld [vmem:[%s2 + $0x2e8] sm:$0xff]
    %v147 = vld [vmem:[%s2 + $0x2f0] sm:$0xff]
    %v148 = vld [vmem:[%s2 + $0x2f8] sm:$0xff]
    %v149 = vld [vmem:[%s2 + $0x300] sm:$0xff]
    %v150 = vld [vmem:[%s2 + $0x308] sm:$0xff]
    %v151 = vld [vmem:[%s2 + $0x310] sm:$0xff]
    %v152 = vld [vmem:[%s2 + $0x318] sm:$0xff]
    %v153 = vld [vmem:[%s2 + $0x320] sm:$0xff]
    %v154 = vld [vmem:[%s2 + $0x328] sm:$0xff]
    %v155 = vld [vmem:[%s2 + $0x330] sm:$0xff]
    %v156 = vld [vmem:[%s2 + $0x338] sm:$0xff]
    %v157 = vld [vmem:[%s2 + $0x340] sm:$0xff]
    %v158 = vld [vmem:[%s2 + $0x348] sm:$0xff]
    %v159 = vld [vmem:[%s2 + $0x350] sm:$0xff]
    %v160 = vld [vmem:[%s2 + $0x358] sm:$0xff]
    %v161 = vld [vmem:[%s2 + $0x360] sm:$0xff]
    %v162 = vld [vmem:[%s2 + $0x368] sm:$0xff]
    %v163 = vld [vmem:[%s2 + $0x370] sm:$0xff]
    %v164 = vld [vmem:[%s2 + $0x378] sm:$0xff]
    %v165 = vld [vmem:[%s2 + $0x380] sm:$0xff]
    %v166 = vld [vmem:[%s2 + $0x388] sm:$0xff]
    %v167 = vld [vmem:[%s2 + $0x390] sm:$0xff]
    %v168 = vld [vmem:[%s2 + $0x398] sm:$0xff]
    %v169 = vld [vmem:[%s2 + $0x3a0] sm:$0xff]
    %v170 = vld [vmem:[%s2 + $0x3a8] sm:$0xff]
    %v171 = vld [vmem:[%s2 + $0x3b0] sm:$0xff]
    %v172 = vld [vmem:[%s2 + $0x3b8] sm:$0xff]
    %v173 = vld [vmem:[%s2 + $0x3c0] sm:$0xff]
    %v174 = vld [vmem:[%s2 + $0x3c8] sm:$0xff]
    %v175 = vld [vmem:[%s2 + $0x3d0] sm:$0xff]
    %v176 = vld [vmem:[%s2 + $0x3d8] sm:$0xff]
    %v177 = vld [vmem:[%s2 + $0x3e0] sm:$0xff]
    %v178 = vld [vmem:[%s2 + $0x3e8] sm:$0xff]
    %v179 = vld [vmem:[%s2 + $0x3f0] sm:$0xff]
    %v180 = vld [vmem:[%s2 + $0x3f8] sm:$0xff]
    %v181 = vld [vmem:[%s3] sm:$0xf]
    %v183 = vlaneseq
    %v184 = vshrl.u32 %v183, 7
    %v185 = vsub.s32 0, %v184
    %v186 = vrot.slane %v181, %v185
    %v187 = vlaneseq
    %v188 = vshrl.u32 %v187, 7
    %v189 = vsub.s32 1, %v188
    %v190 = vrot.slane %v181, %v189
    %v191 = vlaneseq
    %v192 = vshrl.u32 %v191, 7
    %v193 = vsub.s32 2, %v192
    %v194 = vrot.slane %v181, %v193
    %v195 = vlaneseq
    %v196 = vshrl.u32 %v195, 7
    %v197 = vsub.s32 3, %v196
    %v198 = vrot.slane %v181, %v197
    %203 = vmatprep.subr.mxu0 %v54
    %204 = vmatpush1.msra.mxu0 %v53
    %205 = vmatprep.subr.mxu0 %v58
    %206 = vmatpush1.msra.mxu0 %v57
    %207 = vmatprep.subr.mxu0 %v62
    %208 = vmatpush1.msra.mxu0 %v61
    %209 = vmatprep.subr.mxu0 %v66
    %210 = vmatpush1.msra.mxu0 %v65
    %211 = vmatprep.subr.mxu0 %v70
    %212 = vmatpush1.msra.mxu0 %v69
    %213 = vmatprep.subr.mxu0 %v74
    %214 = vmatpush1.msra.mxu0 %v73
    %215 = vmatprep.subr.mxu0 %v78
    %216 = vmatpush1.msra.mxu0 %v77
    %217 = vmatprep.subr.mxu0 %v82
    %218 = vmatpush1.msra.mxu0 %v81
    %219 = vmatprep.subr.mxu0 %v86
    %220 = vmatpush1.msra.mxu0 %v85
    %221 = vmatprep.subr.mxu0 %v90
    %222 = vmatpush1.msra.mxu0 %v89
    %223 = vmatprep.subr.mxu0 %v94
    %224 = vmatpush1.msra.mxu0 %v93
    %225 = vmatprep.subr.mxu0 %v98
    %226 = vmatpush1.msra.mxu0 %v97
    %227 = vmatprep.subr.mxu0 %v102
    %228 = vmatpush1.msra.mxu0 %v101
    %229 = vmatprep.subr.mxu0 %v106
    %230 = vmatpush1.msra.mxu0 %v105
    %231 = vmatprep.subr.mxu0 %v110
    %232 = vmatpush1.msra.mxu0 %v109
    %233 = vmatprep.subr.mxu0 %v114
    %234 = vmatpush1.msra.mxu0 %v113
    %235 = vmatprep.subr.mxu0 %v118
    %236 = vmatpush1.msra.mxu0 %v117
    %237 = vmatprep.subr.mxu0 %v122
    %238 = vmatpush1.msra.mxu0 %v121
    %239 = vmatprep.subr.mxu0 %v126
    %240 = vmatpush1.msra.mxu0 %v125
    %241 = vmatprep.subr.mxu0 %v130
    %242 = vmatpush1.msra.mxu0 %v129
    %243 = vmatprep.subr.mxu0 %v134
    %244 = vmatpush1.msra.mxu0 %v133
    %245 = vmatprep.subr.mxu0 %v138
    %246 = vmatpush1.msra.mxu0 %v137
    %247 = vmatprep.subr.mxu0 %v142
    %248 = vmatpush1.msra.mxu0 %v141
    %249 = vmatprep.subr.mxu0 %v146
    %250 = vmatpush1.msra.mxu0 %v145
    %251 = vmatprep.subr.mxu0 %v150
    %252 = vmatpush1.msra.mxu0 %v149
    %253 = vmatprep.subr.mxu0 %v154
    %254 = vmatpush1.msra.mxu0 %v153
    %255 = vmatprep.subr.mxu0 %v158
    %256 = vmatpush1.msra.mxu0 %v157
    %257 = vmatprep.subr.mxu0 %v162
    %258 = vmatpush1.msra.mxu0 %v161
    %259 = vmatprep.subr.mxu0 %v166
    %260 = vmatpush1.msra.mxu0 %v165
    %261 = vmatprep.subr.mxu0 %v170
    %262 = vmatpush1.msra.mxu0 %v169
    %263 = vmatprep.subr.mxu0 %v174
    %264 = vmatpush1.msra.mxu0 %v173
    %265 = vmatprep.subr.mxu0 %v178
    %266 = vmatpush1.msra.mxu0 %v177
    %267 = vmatprep.mubr.f32.mxu0 %v50
    %268 = vmatmul.mubr.f32.gmra.mrb[0].mxu0 %v49
    %v269 = vpop.f32.mrb[0].mxu0
    %v270 = vadd.f32 %v186, %v269
    %v271 = vpop.f32.mrb[0].mxu0
    %v272 = vadd.f32 %v190, %v271
    %273 = vmatprep.mubr.f32.mxu0 %v52
    %274 = vmatmul.mubr.f32.gmra.mrb[0].mxu0 %v51
    %v275 = vpop.f32.mrb[0].mxu0
    %v276 = vadd.f32 %v186, %v275
    %v277 = vpop.f32.mrb[0].mxu0
    %v278 = vadd.f32 %v190, %v277
    %279 = vdwg.mxu0
    %280 = vmatprep.subr.mxu0 %v56
    %281 = vmatpush1.msra.mxu0 %v55
    %282 = vmatprep.subr.mxu0 %v60
    %283 = vmatpush1.msra.mxu0 %v59
    %284 = vmatprep.subr.mxu0 %v64
    %285 = vmatpush1.msra.mxu0 %v63
    %286 = vmatprep.subr.mxu0 %v68
    %287 = vmatpush1.msra.mxu0 %v67
    %288 = vmatprep.subr.mxu0 %v72
    %289 = vmatpush1.msra.mxu0 %v71
    %290 = vmatprep.subr.mxu0 %v76
    %291 = vmatpush1.msra.mxu0 %v75
    %292 = vmatprep.subr.mxu0 %v80
    %293 = vmatpush1.msra.mxu0 %v79
    %294 = vmatprep.subr.mxu0 %v84
    %295 = vmatpush1.msra.mxu0 %v83
    %296 = vmatprep.subr.mxu0 %v88
    %297 = vmatpush1.msra.mxu0 %v87
    %298 = vmatprep.subr.mxu0 %v92
    %299 = vmatpush1.msra.mxu0 %v91
    %300 = vmatprep.subr.mxu0 %v96
    %301 = vmatpush1.msra.mxu0 %v95
    %302 = vmatprep.subr.mxu0 %v100
    %303 = vmatpush1.msra.mxu0 %v99
    %304 = vmatprep.subr.mxu0 %v104
    %305 = vmatpush1.msra.mxu0 %v103
    %306 = vmatprep.subr.mxu0 %v108
    %307 = vmatpush1.msra.mxu0 %v107
    %308 = vmatprep.subr.mxu0 %v112
    %309 = vmatpush1.msra.mxu0 %v111
    %310 = vmatprep.subr.mxu0 %v116
    %311 = vmatpush1.msra.mxu0 %v115
    %312 = vmatprep.subr.mxu0 %v120
    %313 = vmatpush1.msra.mxu0 %v119
    %314 = vmatprep.subr.mxu0 %v124
    %315 = vmatpush1.msra.mxu0 %v123
    %316 = vmatprep.subr.mxu0 %v128
    %317 = vmatpush1.msra.mxu0 %v127
    %318 = vmatprep.subr.mxu0 %v132
    %319 = vmatpush1.msra.mxu0 %v131
    %320 = vmatprep.subr.mxu0 %v136
    %321 = vmatpush1.msra.mxu0 %v135
    %322 = vmatprep.subr.mxu0 %v140
    %323 = vmatpush1.msra.mxu0 %v139
    %324 = vmatprep.subr.mxu0 %v144
    %325 = vmatpush1.msra.mxu0 %v143
    %326 = vmatprep.subr.mxu0 %v148
    %327 = vmatpush1.msra.mxu0 %v147
    %328 = vmatprep.subr.mxu0 %v152
    %329 = vmatpush1.msra.mxu0 %v151
    %330 = vmatprep.subr.mxu0 %v156
    %331 = vmatpush1.msra.mxu0 %v155
    %332 = vmatprep.subr.mxu0 %v160
    %333 = vmatpush1.msra.mxu0 %v159
    %334 = vmatprep.subr.mxu0 %v164
    %335 = vmatpush1.msra.mxu0 %v163
    %336 = vmatprep.subr.mxu0 %v168
    %337 = vmatpush1.msra.mxu0 %v167
    %338 = vmatprep.subr.mxu0 %v172
    %339 = vmatpush1.msra.mxu0 %v171
    %340 = vmatprep.subr.mxu0 %v176
    %341 = vmatpush1.msra.mxu0 %v175
    %342 = vmatprep.subr.mxu0 %v180
    %343 = vmatpush1.msra.mxu0 %v179
    %344 = vmatprep.mubr.f32.mxu0 %v50
    %345 = vmatmul.mubr.f32.gmra.mrb[0].mxu0 %v49
    %v346 = vpop.f32.mrb[0].mxu0
    %v347 = vadd.f32 %v194, %v346
    %v348 = vpop.f32.mrb[0].mxu0
    %v349 = vadd.f32 %v198, %v348
    %350 = vmatprep.mubr.f32.mxu0 %v52
    %351 = vmatmul.mubr.f32.gmra.mrb[0].mxu0 %v51
    %v352 = vpop.f32.mrb[0].mxu0
    %v353 = vadd.f32 %v194, %v352
    %v354 = vpop.f32.mrb[0].mxu0
    %v355 = vadd.f32 %v198, %v354
    %356 = vdwg.mxu0
    %v357 = vmax.f32 %v270, 0.0
    %v358 = vmax.f32 %v272, 0.0
    %v359 = vmax.f32 %v347, 0.0
    %v360 = vmax.f32 %v349, 0.0
    %v361 = vmax.f32 %v276, 0.0
    %v362 = vmax.f32 %v278, 0.0
    %v363 = vmax.f32 %v353, 0.0
    %v364 = vmax.f32 %v355, 0.0
    %v365 = vld [vmem:[%s4] sm:$0xff]
    %v366 = vld [vmem:[%s4 + $0x8] sm:$0xff]
    %v367 = vld [vmem:[%s4 + $0x10] sm:$0xff]
    %v368 = vld [vmem:[%s4 + $0x18] sm:$0xff]
    %v369 = vld [vmem:[%s4 + $0x20] sm:$0xff]
    %v370 = vld [vmem:[%s4 + $0x28] sm:$0xff]
    %v371 = vld [vmem:[%s4 + $0x30] sm:$0xff]
    %v372 = vld [vmem:[%s4 + $0x38] sm:$0xff]
    %v373 = vld [vmem:[%s4 + $0x40] sm:$0xff]
    %v374 = vld [vmem:[%s4 + $0x48] sm:$0xff]
    %v375 = vld [vmem:[%s4 + $0x50] sm:$0xff]
    %v376 = vld [vmem:[%s4 + $0x58] sm:$0xff]
    %v377 = vld [vmem:[%s4 + $0x60] sm:$0xff]
    %v378 = vld [vmem:[%s4 + $0x68] sm:$0xff]
    %v379 = vld [vmem:[%s4 + $0x70] sm:$0xff]
    %v380 = vld [vmem:[%s4 + $0x78] sm:$0xff]
    %v381 = vld [vmem:[%s4 + $0x80] sm:$0xff]
    %v382 = vld [vmem:[%s4 + $0x88] sm:$0xff]
    %v383 = vld [vmem:[%s4 + $0x90] sm:$0xff]
    %v384 = vld [vmem:[%s4 + $0x98] sm:$0xff]
    %v385 = vld [vmem:[%s4 + $0xa0] sm:$0xff]
    %v386 = vld [vmem:[%s4 + $0xa8] sm:$0xff]
    %v387 = vld [vmem:[%s4 + $0xb0] sm:$0xff]
    %v388 = vld [vmem:[%s4 + $0xb8] sm:$0xff]
    %v389 = vld [vmem:[%s4 + $0xc0] sm:$0xff]
    %v390 = vld [vmem:[%s4 + $0xc8] sm:$0xff]
    %v391 = vld [vmem:[%s4 + $0xd0] sm:$0xff]
    %v392 = vld [vmem:[%s4 + $0xd8] sm:$0xff]
    %v393 = vld [vmem:[%s4 + $0xe0] sm:$0xff]
    %v394 = vld [vmem:[%s4 + $0xe8] sm:$0xff]
    %v395 = vld [vmem:[%s4 + $0xf0] sm:$0xff]
    %v396 = vld [vmem:[%s4 + $0xf8] sm:$0xff]
    %v397 = vld [vmem:[%s4 + $0x100] sm:$0xff]
    %v398 = vld [vmem:[%s4 + $0x108] sm:$0xff]
    %v399 = vld [vmem:[%s4 + $0x110] sm:$0xff]
    %v400 = vld [vmem:[%s4 + $0x118] sm:$0xff]
    %v401 = vld [vmem:[%s4 + $0x120] sm:$0xff]
    %v402 = vld [vmem:[%s4 + $0x128] sm:$0xff]
    %v403 = vld [vmem:[%s4 + $0x130] sm:$0xff]
    %v404 = vld [vmem:[%s4 + $0x138] sm:$0xff]
    %v405 = vld [vmem:[%s4 + $0x140] sm:$0xff]
    %v406 = vld [vmem:[%s4 + $0x148] sm:$0xff]
    %v407 = vld [vmem:[%s4 + $0x150] sm:$0xff]
    %v408 = vld [vmem:[%s4 + $0x158] sm:$0xff]
    %v409 = vld [vmem:[%s4 + $0x160] sm:$0xff]
    %v410 = vld [vmem:[%s4 + $0x168] sm:$0xff]
    %v411 = vld [vmem:[%s4 + $0x170] sm:$0xff]
    %v412 = vld [vmem:[%s4 + $0x178] sm:$0xff]
    %v413 = vld [vmem:[%s4 + $0x180] sm:$0xff]
    %v414 = vld [vmem:[%s4 + $0x188] sm:$0xff]
    %v415 = vld [vmem:[%s4 + $0x190] sm:$0xff]
    %v416 = vld [vmem:[%s4 + $0x198] sm:$0xff]
    %v417 = vld [vmem:[%s4 + $0x1a0] sm:$0xff]
    %v418 = vld [vmem:[%s4 + $0x1a8] sm:$0xff]
    %v419 = vld [vmem:[%s4 + $0x1b0] sm:$0xff]
    %v420 = vld [vmem:[%s4 + $0x1b8] sm:$0xff]
    %v421 = vld [vmem:[%s4 + $0x1c0] sm:$0xff]
    %v422 = vld [vmem:[%s4 + $0x1c8] sm:$0xff]
    %v423 = vld [vmem:[%s4 + $0x1d0] sm:$0xff]
    %v424 = vld [vmem:[%s4 + $0x1d8] sm:$0xff]
    %v425 = vld [vmem:[%s4 + $0x1e0] sm:$0xff]
    %v426 = vld [vmem:[%s4 + $0x1e8] sm:$0xff]
    %v427 = vld [vmem:[%s4 + $0x1f0] sm:$0xff]
    %v428 = vld [vmem:[%s4 + $0x1f8] sm:$0xff]
    %v429 = vld [vmem:[%s4 + $0x200] sm:$0xff]
    %v430 = vld [vmem:[%s4 + $0x208] sm:$0xff]
    %v431 = vld [vmem:[%s4 + $0x210] sm:$0xff]
    %v432 = vld [vmem:[%s4 + $0x218] sm:$0xff]
    %v433 = vld [vmem:[%s4 + $0x220] sm:$0xff]
    %v434 = vld [vmem:[%s4 + $0x228] sm:$0xff]
    %v435 = vld [vmem:[%s4 + $0x230] sm:$0xff]
    %v436 = vld [vmem:[%s4 + $0x238] sm:$0xff]
    %v437 = vld [vmem:[%s4 + $0x240] sm:$0xff]
    %v438 = vld [vmem:[%s4 + $0x248] sm:$0xff]
    %v439 = vld [vmem:[%s4 + $0x250] sm:$0xff]
    %v440 = vld [vmem:[%s4 + $0x258] sm:$0xff]
    %v441 = vld [vmem:[%s4 + $0x260] sm:$0xff]
    %v442 = vld [vmem:[%s4 + $0x268] sm:$0xff]
    %v443 = vld [vmem:[%s4 + $0x270] sm:$0xff]
    %v444 = vld [vmem:[%s4 + $0x278] sm:$0xff]
    %v445 = vld [vmem:[%s4 + $0x280] sm:$0xff]
    %v446 = vld [vmem:[%s4 + $0x288] sm:$0xff]
    %v447 = vld [vmem:[%s4 + $0x290] sm:$0xff]
    %v448 = vld [vmem:[%s4 + $0x298] sm:$0xff]
    %v449 = vld [vmem:[%s4 + $0x2a0] sm:$0xff]
    %v450 = vld [vmem:[%s4 + $0x2a8] sm:$0xff]
    %v451 = vld [vmem:[%s4 + $0x2b0] sm:$0xff]
    %v452 = vld [vmem:[%s4 + $0x2b8] sm:$0xff]
    %v453 = vld [vmem:[%s4 + $0x2c0] sm:$0xff]
    %v454 = vld [vmem:[%s4 + $0x2c8] sm:$0xff]
    %v455 = vld [vmem:[%s4 + $0x2d0] sm:$0xff]
    %v456 = vld [vmem:[%s4 + $0x2d8] sm:$0xff]
    %v457 = vld [vmem:[%s4 + $0x2e0] sm:$0xff]
    %v458 = vld [vmem:[%s4 + $0x2e8] sm:$0xff]
    %v459 = vld [vmem:[%s4 + $0x2f0] sm:$0xff]
    %v460 = vld [vmem:[%s4 + $0x2f8] sm:$0xff]
    %v461 = vld [vmem:[%s4 + $0x300] sm:$0xff]
    %v462 = vld [vmem:[%s4 + $0x308] sm:$0xff]
    %v463 = vld [vmem:[%s4 + $0x310] sm:$0xff]
    %v464 = vld [vmem:[%s4 + $0x318] sm:$0xff]
    %v465 = vld [vmem:[%s4 + $0x320] sm:$0xff]
    %v466 = vld [vmem:[%s4 + $0x328] sm:$0xff]
    %v467 = vld [vmem:[%s4 + $0x330] sm:$0xff]
    %v468 = vld [vmem:[%s4 + $0x338] sm:$0xff]
    %v469 = vld [vmem:[%s4 + $0x340] sm:$0xff]
    %v470 = vld [vmem:[%s4 + $0x348] sm:$0xff]
    %v471 = vld [vmem:[%s4 + $0x350] sm:$0xff]
    %v472 = vld [vmem:[%s4 + $0x358] sm:$0xff]
    %v473 = vld [vmem:[%s4 + $0x360] sm:$0xff]
    %v474 = vld [vmem:[%s4 + $0x368] sm:$0xff]
    %v475 = vld [vmem:[%s4 + $0x370] sm:$0xff]
    %v476 = vld [vmem:[%s4 + $0x378] sm:$0xff]
    %v477 = vld [vmem:[%s4 + $0x380] sm:$0xff]
    %v478 = vld [vmem:[%s4 + $0x388] sm:$0xff]
    %v479 = vld [vmem:[%s4 + $0x390] sm:$0xff]
    %v480 = vld [vmem:[%s4 + $0x398] sm:$0xff]
    %v481 = vld [vmem:[%s4 + $0x3a0] sm:$0xff]
    %v482 = vld [vmem:[%s4 + $0x3a8] sm:$0xff]
    %v483 = vld [vmem:[%s4 + $0x3b0] sm:$0xff]
    %v484 = vld [vmem:[%s4 + $0x3b8] sm:$0xff]
    %v485 = vld [vmem:[%s4 + $0x3c0] sm:$0xff]
    %v486 = vld [vmem:[%s4 + $0x3c8] sm:$0xff]
    %v487 = vld [vmem:[%s4 + $0x3d0] sm:$0xff]
    %v488 = vld [vmem:[%s4 + $0x3d8] sm:$0xff]
    %v489 = vld [vmem:[%s4 + $0x3e0] sm:$0xff]
    %v490 = vld [vmem:[%s4 + $0x3e8] sm:$0xff]
    %v491 = vld [vmem:[%s4 + $0x3f0] sm:$0xff]
    %v492 = vld [vmem:[%s4 + $0x3f8] sm:$0xff]
    %v493 = vld [vmem:[%s5] sm:$0x3]
    %v495 = vlaneseq
    %v496 = vshrl.u32 %v495, 7
    %v497 = vsub.s32 0, %v496
    %v498 = vrot.slane %v493, %v497
    %v499 = vlaneseq
    %v500 = vshrl.u32 %v499, 7
    %v501 = vsub.s32 1, %v500
    %v502 = vrot.slane %v493, %v501
    %505 = vmatprep.subr.mxu0 %v366
    %506 = vmatpush1.msra.mxu0 %v365
    %507 = vmatprep.subr.mxu0 %v368
    %508 = vmatpush1.msra.mxu0 %v367
    %509 = vmatprep.subr.mxu0 %v370
    %510 = vmatpush1.msra.mxu0 %v369
    %511 = vmatprep.subr.mxu0 %v372
    %512 = vmatpush1.msra.mxu0 %v371
    %513 = vmatprep.subr.mxu0 %v374
    %514 = vmatpush1.msra.mxu0 %v373
    %515 = vmatprep.subr.mxu0 %v376
    %516 = vmatpush1.msra.mxu0 %v375
    %517 = vmatprep.subr.mxu0 %v378
    %518 = vmatpush1.msra.mxu0 %v377
    %519 = vmatprep.subr.mxu0 %v380
    %520 = vmatpush1.msra.mxu0 %v379
    %521 = vmatprep.subr.mxu0 %v382
    %522 = vmatpush1.msra.mxu0 %v381
    %523 = vmatprep.subr.mxu0 %v384
    %524 = vmatpush1.msra.mxu0 %v383
    %525 = vmatprep.subr.mxu0 %v386
    %526 = vmatpush1.msra.mxu0 %v385
    %527 = vmatprep.subr.mxu0 %v388
    %528 = vmatpush1.msra.mxu0 %v387
    %529 = vmatprep.subr.mxu0 %v390
    %530 = vmatpush1.msra.mxu0 %v389
    %531 = vmatprep.subr.mxu0 %v392
    %532 = vmatpush1.msra.mxu0 %v391
    %533 = vmatprep.subr.mxu0 %v394
    %534 = vmatpush1.msra.mxu0 %v393
    %535 = vmatprep.subr.mxu0 %v396
    %536 = vmatpush1.msra.mxu0 %v395
    %537 = vmatprep.subr.mxu0 %v398
    %538 = vmatpush1.msra.mxu0 %v397
    %539 = vmatprep.subr.mxu0 %v400
    %540 = vmatpush1.msra.mxu0 %v399
    %541 = vmatprep.subr.mxu0 %v402
    %542 = vmatpush1.msra.mxu0 %v401
    %543 = vmatprep.subr.mxu0 %v404
    %544 = vmatpush1.msra.mxu0 %v403
    %545 = vmatprep.subr.mxu0 %v406
    %546 = vmatpush1.msra.mxu0 %v405
    %547 = vmatprep.subr.mxu0 %v408
    %548 = vmatpush1.msra.mxu0 %v407
    %549 = vmatprep.subr.mxu0 %v410
    %550 = vmatpush1.msra.mxu0 %v409
    %551 = vmatprep.subr.mxu0 %v412
    %552 = vmatpush1.msra.mxu0 %v411
    %553 = vmatprep.subr.mxu0 %v414
    %554 = vmatpush1.msra.mxu0 %v413
    %555 = vmatprep.subr.mxu0 %v416
    %556 = vmatpush1.msra.mxu0 %v415
    %557 = vmatprep.subr.mxu0 %v418
    %558 = vmatpush1.msra.mxu0 %v417
    %559 = vmatprep.subr.mxu0 %v420
    %560 = vmatpush1.msra.mxu0 %v419
    %561 = vmatprep.subr.mxu0 %v422
    %562 = vmatpush1.msra.mxu0 %v421
    %563 = vmatprep.subr.mxu0 %v424
    %564 = vmatpush1.msra.mxu0 %v423
    %565 = vmatprep.subr.mxu0 %v426
    %566 = vmatpush1.msra.mxu0 %v425
    %567 = vmatprep.subr.mxu0 %v428
    %568 = vmatpush1.msra.mxu0 %v427
    %569 = vmatprep.mubr.f32.mxu0 %v358
    %570 = vmatmul.mubr.f32.gmra.mrb[0].mxu0 %v357
    %v571 = vpop.f32.mrb[0].mxu0
    %v572 = vadd.f32 %v498, %v571
    %v573 = vpop.f32.mrb[0].mxu0
    %v574 = vadd.f32 %v502, %v573
    %575 = vmatprep.mubr.f32.mxu0 %v362
    %576 = vmatmul.mubr.f32.gmra.mrb[0].mxu0 %v361
    %v577 = vpop.f32.mrb[0].mxu0
    %v578 = vadd.f32 %v498, %v577
    %v579 = vpop.f32.mrb[0].mxu0
    %v580 = vadd.f32 %v502, %v579
    %581 = vdwg.mxu0
    %582 = vmatprep.subr.mxu0 %v430
    %583 = vmatpush1.msra.mxu0 %v429
    %584 = vmatprep.subr.mxu0 %v432
    %585 = vmatpush1.msra.mxu0 %v431
    %586 = vmatprep.subr.mxu0 %v434
    %587 = vmatpush1.msra.mxu0 %v433
    %588 = vmatprep.subr.mxu0 %v436
    %589 = vmatpush1.msra.mxu0 %v435
    %590 = vmatprep.subr.mxu0 %v438
    %591 = vmatpush1.msra.mxu0 %v437
    %592 = vmatprep.subr.mxu0 %v440
    %593 = vmatpush1.msra.mxu0 %v439
    %594 = vmatprep.subr.mxu0 %v442
    %595 = vmatpush1.msra.mxu0 %v441
    %596 = vmatprep.subr.mxu0 %v444
    %597 = vmatpush1.msra.mxu0 %v443
    %598 = vmatprep.subr.mxu0 %v446
    %599 = vmatpush1.msra.mxu0 %v445
    %600 = vmatprep.subr.mxu0 %v448
    %601 = vmatpush1.msra.mxu0 %v447
    %602 = vmatprep.subr.mxu0 %v450
    %603 = vmatpush1.msra.mxu0 %v449
    %604 = vmatprep.subr.mxu0 %v452
    %605 = vmatpush1.msra.mxu0 %v451
    %606 = vmatprep.subr.mxu0 %v454
    %607 = vmatpush1.msra.mxu0 %v453
    %608 = vmatprep.subr.mxu0 %v456
    %609 = vmatpush1.msra.mxu0 %v455
    %610 = vmatprep.subr.mxu0 %v458
    %611 = vmatpush1.msra.mxu0 %v457
    %612 = vmatprep.subr.mxu0 %v460
    %613 = vmatpush1.msra.mxu0 %v459
    %614 = vmatprep.subr.mxu0 %v462
    %615 = vmatpush1.msra.mxu0 %v461
    %616 = vmatprep.subr.mxu0 %v464
    %617 = vmatpush1.msra.mxu0 %v463
    %618 = vmatprep.subr.mxu0 %v466
    %619 = vmatpush1.msra.mxu0 %v465
    %620 = vmatprep.subr.mxu0 %v468
    %621 = vmatpush1.msra.mxu0 %v467
    %622 = vmatprep.subr.mxu0 %v470
    %623 = vmatpush1.msra.mxu0 %v469
    %624 = vmatprep.subr.mxu0 %v472
    %625 = vmatpush1.msra.mxu0 %v471
    %626 = vmatprep.subr.mxu0 %v474
    %627 = vmatpush1.msra.mxu0 %v473
    %628 = vmatprep.subr.mxu0 %v476
    %629 = vmatpush1.msra.mxu0 %v475
    %630 = vmatprep.subr.mxu0 %v478
    %631 = vmatpush1.msra.mxu0 %v477
    %632 = vmatprep.subr.mxu0 %v480
    %633 = vmatpush1.msra.mxu0 %v479
    %634 = vmatprep.subr.mxu0 %v482
    %635 = vmatpush1.msra.mxu0 %v481
    %636 = vmatprep.subr.mxu0 %v484
    %637 = vmatpush1.msra.mxu0 %v483
    %638 = vmatprep.subr.mxu0 %v486
    %639 = vmatpush1.msra.mxu0 %v485
    %640 = vmatprep.subr.mxu0 %v488
    %641 = vmatpush1.msra.mxu0 %v487
    %642 = vmatprep.subr.mxu0 %v490
    %643 = vmatpush1.msra.mxu0 %v489
    %644 = vmatprep.subr.mxu0 %v492
    %645 = vmatpush1.msra.mxu0 %v491
    %646 = vmatprep.mubr.f32.mxu0 %v360
    %647 = vmatmul.mubr.f32.gmra.mrb[0].mxu0 %v359
    %v648 = vpop.f32.mrb[0].mxu0
    %v649 = vadd.f32 %v572, %v648
    %v650 = vpop.f32.mrb[0].mxu0
    %v651 = vadd.f32 %v574, %v650
    %652 = vmatprep.mubr.f32.mxu0 %v364
    %653 = vmatmul.mubr.f32.gmra.mrb[0].mxu0 %v363
    %v654 = vpop.f32.mrb[0].mxu0
    %v655 = vadd.f32 %v578, %v654
    %v656 = vpop.f32.mrb[0].mxu0
    %v657 = vadd.f32 %v580, %v656
    %658 = vdwg.mxu0
    %v659 = vmax.f32 %v649, 0.0
    %v660 = vmax.f32 %v651, 0.0
    %v661 = vmax.f32 %v655, 0.0
    %v662 = vmax.f32 %v657, 0.0
    %v663 = vld [vmem:[#allocation2] sm:$0xff]
    %v664 = vld [vmem:[#allocation2 + $0x8] sm:$0xff]
    %v665 = vld [vmem:[#allocation2 + $0x10] sm:$0xff]
    %v666 = vld [vmem:[#allocation2 + $0x18] sm:$0xff]
    %v667 = vld [vmem:[#allocation2 + $0x20] sm:$0xff]
    %v668 = vld [vmem:[#allocation2 + $0x28] sm:$0xff]
    %v669 = vld [vmem:[#allocation2 + $0x30] sm:$0xff]
    %v670 = vld [vmem:[#allocation2 + $0x38] sm:$0xff]
    %v671 = vld [vmem:[#allocation2 + $0x40] sm:$0xff]
    %v672 = vld [vmem:[#allocation2 + $0x48] sm:$0xff]
    %v673 = vld [vmem:[#allocation2 + $0x50] sm:$0xff]
    %v674 = vld [vmem:[#allocation2 + $0x58] sm:$0xff]
    %v675 = vld [vmem:[#allocation2 + $0x60] sm:$0xff]
    %v676 = vld [vmem:[#allocation2 + $0x68] sm:$0xff]
    %v677 = vld [vmem:[#allocation2 + $0x70] sm:$0xff]
    %v678 = vld [vmem:[#allocation2 + $0x78] sm:$0xff]
    %v679 = vld [vmem:[#allocation2 + $0x80] sm:$0xff]
    %v680 = vld [vmem:[#allocation2 + $0x88] sm:$0xff]
    %v681 = vld [vmem:[#allocation2 + $0x90] sm:$0xff]
    %v682 = vld [vmem:[#allocation2 + $0x98] sm:$0xff]
    %v683 = vld [vmem:[#allocation2 + $0xa0] sm:$0xff]
    %v684 = vld [vmem:[#allocation2 + $0xa8] sm:$0xff]
    %v685 = vld [vmem:[#allocation2 + $0xb0] sm:$0xff]
    %v686 = vld [vmem:[#allocation2 + $0xb8] sm:$0xff]
    %v687 = vld [vmem:[#allocation2 + $0xc0] sm:$0xff]
    %v688 = vld [vmem:[#allocation2 + $0xc8] sm:$0xff]
    %v689 = vld [vmem:[#allocation2 + $0xd0] sm:$0xff]
    %v690 = vld [vmem:[#allocation2 + $0xd8] sm:$0xff]
    %v691 = vld [vmem:[#allocation2 + $0xe0] sm:$0xff]
    %v692 = vld [vmem:[#allocation2 + $0xe8] sm:$0xff]
    %v693 = vld [vmem:[#allocation2 + $0xf0] sm:$0xff]
    %v694 = vld [vmem:[#allocation2 + $0xf8] sm:$0xff]
    %v695 = vld [vmem:[#allocation2 + $0x100] sm:$0xff]
    %v696 = vld [vmem:[#allocation2 + $0x108] sm:$0xff]
    %v697 = vld [vmem:[#allocation2 + $0x110] sm:$0xff]
    %v698 = vld [vmem:[#allocation2 + $0x118] sm:$0xff]
    %v699 = vld [vmem:[#allocation2 + $0x120] sm:$0xff]
    %v700 = vld [vmem:[#allocation2 + $0x128] sm:$0xff]
    %v701 = vld [vmem:[#allocation2 + $0x130] sm:$0xff]
    %v702 = vld [vmem:[#allocation2 + $0x138] sm:$0xff]
    %v703 = vld [vmem:[#allocation2 + $0x140] sm:$0xff]
    %v704 = vld [vmem:[#allocation2 + $0x148] sm:$0xff]
    %v705 = vld [vmem:[#allocation2 + $0x150] sm:$0xff]
    %v706 = vld [vmem:[#allocation2 + $0x158] sm:$0xff]
    %v707 = vld [vmem:[#allocation2 + $0x160] sm:$0xff]
    %v708 = vld [vmem:[#allocation2 + $0x168] sm:$0xff]
    %v709 = vld [vmem:[#allocation2 + $0x170] sm:$0xff]
    %v710 = vld [vmem:[#allocation2 + $0x178] sm:$0xff]
    %v711 = vld [vmem:[#allocation2 + $0x180] sm:$0xff]
    %v712 = vld [vmem:[#allocation2 + $0x188] sm:$0xff]
    %v713 = vld [vmem:[#allocation2 + $0x190] sm:$0xff]
    %v714 = vld [vmem:[#allocation2 + $0x198] sm:$0xff]
    %v715 = vld [vmem:[#allocation2 + $0x1a0] sm:$0xff]
    %v716 = vld [vmem:[#allocation2 + $0x1a8] sm:$0xff]
    %v717 = vld [vmem:[#allocation2 + $0x1b0] sm:$0xff]
    %v718 = vld [vmem:[#allocation2 + $0x1b8] sm:$0xff]
    %v719 = vld [vmem:[#allocation2 + $0x1c0] sm:$0xff]
    %v720 = vld [vmem:[#allocation2 + $0x1c8] sm:$0xff]
    %v721 = vld [vmem:[#allocation2 + $0x1d0] sm:$0xff]
    %v722 = vld [vmem:[#allocation2 + $0x1d8] sm:$0xff]
    %v723 = vld [vmem:[#allocation2 + $0x1e0] sm:$0xff]
    %v724 = vld [vmem:[#allocation2 + $0x1e8] sm:$0xff]
    %v725 = vld [vmem:[#allocation2 + $0x1f0] sm:$0xff]
    %v726 = vld [vmem:[#allocation2 + $0x1f8] sm:$0xff]
    %v727 = vld [vmem:[%s7] sm:$0x3]
    %v729 = vlaneseq
    %v730 = vshrl.u32 %v729, 7
    %v731 = vsub.s32 0, %v730
    %v732 = vrot.slane %v727, %v731
    %v733 = vlaneseq
    %v734 = vshrl.u32 %v733, 7
    %v735 = vsub.s32 1, %v734
    %v736 = vrot.slane %v727, %v735
    %739 = vmatprep.subr.mxu0 %v664
    %740 = vmatpush1.msra.mxu0 %v663
    %741 = vmatprep.subr.mxu0 %v666
    %742 = vmatpush1.msra.mxu0 %v665
    %743 = vmatprep.subr.mxu0 %v668
    %744 = vmatpush1.msra.mxu0 %v667
    %745 = vmatprep.subr.mxu0 %v670
    %746 = vmatpush1.msra.mxu0 %v669
    %747 = vmatprep.subr.mxu0 %v672
    %748 = vmatpush1.msra.mxu0 %v671
    %749 = vmatprep.subr.mxu0 %v674
    %750 = vmatpush1.msra.mxu0 %v673
    %751 = vmatprep.subr.mxu0 %v676
    %752 = vmatpush1.msra.mxu0 %v675
    %753 = vmatprep.subr.mxu0 %v678
    %754 = vmatpush1.msra.mxu0 %v677
    %755 = vmatprep.subr.mxu0 %v680
    %756 = vmatpush1.msra.mxu0 %v679
    %757 = vmatprep.subr.mxu0 %v682
    %758 = vmatpush1.msra.mxu0 %v681
    %759 = vmatprep.subr.mxu0 %v684
    %760 = vmatpush1.msra.mxu0 %v683
    %761 = vmatprep.subr.mxu0 %v686
    %762 = vmatpush1.msra.mxu0 %v685
    %763 = vmatprep.subr.mxu0 %v688
    %764 = vmatpush1.msra.mxu0 %v687
    %765 = vmatprep.subr.mxu0 %v690
    %766 = vmatpush1.msra.mxu0 %v689
    %767 = vmatprep.subr.mxu0 %v692
    %768 = vmatpush1.msra.mxu0 %v691
    %769 = vmatprep.subr.mxu0 %v694
    %770 = vmatpush1.msra.mxu0 %v693
    %771 = vmatprep.subr.mxu0 %v696
    %772 = vmatpush1.msra.mxu0 %v695
    %773 = vmatprep.subr.mxu0 %v698
    %774 = vmatpush1.msra.mxu0 %v697
    %775 = vmatprep.subr.mxu0 %v700
    %776 = vmatpush1.msra.mxu0 %v699
    %777 = vmatprep.subr.mxu0 %v702
    %778 = vmatpush1.msra.mxu0 %v701
    %779 = vmatprep.subr.mxu0 %v704
    %780 = vmatpush1.msra.mxu0 %v703
    %781 = vmatprep.subr.mxu0 %v706
    %782 = vmatpush1.msra.mxu0 %v705
    %783 = vmatprep.subr.mxu0 %v708
    %784 = vmatpush1.msra.mxu0 %v707
    %785 = vmatprep.subr.mxu0 %v710
    %786 = vmatpush1.msra.mxu0 %v709
    %787 = vmatprep.subr.mxu0 %v712
    %788 = vmatpush1.msra.mxu0 %v711
    %789 = vmatprep.subr.mxu0 %v714
    %790 = vmatpush1.msra.mxu0 %v713
    %791 = vmatprep.subr.mxu0 %v716
    %792 = vmatpush1.msra.mxu0 %v715
    %793 = vmatprep.subr.mxu0 %v718
    %794 = vmatpush1.msra.mxu0 %v717
    %795 = vmatprep.subr.mxu0 %v720
    %796 = vmatpush1.msra.mxu0 %v719
    %797 = vmatprep.subr.mxu0 %v722
    %798 = vmatpush1.msra.mxu0 %v721
    %799 = vmatprep.subr.mxu0 %v724
    %800 = vmatpush1.msra.mxu0 %v723
    %801 = vmatprep.subr.mxu0 %v726
    %802 = vmatpush1.msra.mxu0 %v725
    %803 = vmatprep.mubr.f32.mxu0 %v660
    %804 = vmatmul.mubr.f32.gmra.mrb[0].mxu0 %v659
    %v805 = vpop.f32.mrb[0].mxu0
    %v806 = vadd.f32 %v732, %v805
    %v807 = vpop.f32.mrb[0].mxu0
    %v808 = vadd.f32 %v736, %v807
    %809 = vmatprep.mubr.f32.mxu0 %v662
    %810 = vmatmul.mubr.f32.gmra.mrb[0].mxu0 %v661
    %v811 = vpop.f32.mrb[0].mxu0
    %v812 = vadd.f32 %v732, %v811
    %v813 = vpop.f32.mrb[0].mxu0
    %v814 = vadd.f32 %v736, %v813
    %815 = vdwg.mxu0
    %v816 = vld [vmem:[%s1] sm:$0xff]
    %v817 = vld [vmem:[%s1 + $0x8] sm:$0xff]
    %v818 = vld [vmem:[%s1 + $0x10] sm:$0xff]
    %v819 = vld [vmem:[%s1 + $0x18] sm:$0xff]
    %v820 = vadd.f32 %v806, %v816
    %v821 = vadd.f32 %v808, %v817
    %v822 = vadd.f32 %v812, %v818
    %v823 = vadd.f32 %v814, %v819
    %v824 = vadd.f32 %v820, %v821
    %825 = vadd.xlane.f32.xlu0 %v824
    %v826 = vpop.xlane.xlu0 %825
    %v827 = vadd.f32 %v822, %v823
    %828 = vadd.xlane.f32.xlu0 %v827
    %v829 = vpop.xlane.xlu0 %828
    %v830 = vrcp.pop 256.0
    %v831 = vmul.f32 %v826, %v830
    %v832 = vmul.f32 %v829, %v830
    %v833 = vsub.f32 %v820, %v831
    %v834 = vsub.f32 %v821, %v831
    %v835 = vsub.f32 %v822, %v832
    %v836 = vsub.f32 %v823, %v832
    %v837 = vmul.f32 %v833, %v833
    %v838 = vmul.f32 %v834, %v834
    %v839 = vmul.f32 %v835, %v835
    %v840 = vmul.f32 %v836, %v836
    %v841 = vadd.f32 %v837, %v838
    %842 = vadd.xlane.f32.xlu0 %v841
    %v843 = vpop.xlane.xlu0 %842
    %v844 = vadd.f32 %v839, %v840
    %845 = vadd.xlane.f32.xlu0 %v844
    %v846 = vpop.xlane.xlu0 %845
    %v847 = vmul.f32 %v843, %v830
    %v848 = vmul.f32 %v846, %v830
    %v849 = vadd.f32 %v847, 1e-05
    %v850 = vadd.f32 %v848, 1e-05
    %v851 = vrsqrt.pop %v849
    %v852 = vrsqrt.pop %v850
    %v853 = vmul.f32 %v833, %v851
    %v854 = vmul.f32 %v834, %v851
    %v855 = vmul.f32 %v835, %v852
    %v856 = vmul.f32 %v836, %v852
    %v857 = vld [vmem:[%s8] sm:$0x3]
    %v859 = vlaneseq
    %v860 = vshrl.u32 %v859, 7
    %v861 = vsub.s32 0, %v860
    %v862 = vrot.slane %v857, %v861
    %v863 = vlaneseq
    %v864 = vshrl.u32 %v863, 7
    %v865 = vsub.s32 1, %v864
    %v866 = vrot.slane %v857, %v865
    %v869 = vmul.f32 %v853, %v862
    %v870 = vmul.f32 %v854, %v866
    %v871 = vmul.f32 %v855, %v862
    %v872 = vmul.f32 %v856, %v866
    %v873 = vld [vmem:[%s9] sm:$0x3]
    %v875 = vlaneseq
    %v876 = vshrl.u32 %v875, 7
    %v877 = vsub.s32 0, %v876
    %v878 = vrot.slane %v873, %v877
    %v879 = vlaneseq
    %v880 = vshrl.u32 %v879, 7
    %v881 = vsub.s32 1, %v880
    %v882 = vrot.slane %v873, %v881
    %v885 = vadd.f32 %v869, %v878
    %v886 = vadd.f32 %v870, %v882
    %v887 = vadd.f32 %v871, %v878
    %v888 = vadd.f32 %v872, %v882
    %889 = vst [vmem:[%s10] sm:$0xff] %v885
    %890 = vst [vmem:[%s10 + $0x8] sm:$0xff] %v886
    %891 = vst [vmem:[%s10 + $0x10] sm:$0xff] %v887
    %892 = vst [vmem:[%s10 + $0x18] sm:$0xff] %v888
    // Predicated region
    $region46: #{sent_mha_attn.5} parent=1 // pred_check
      _
    $region47: #{sent_mha_attn.5} parent=1 // pred_check_branch
      %894 = sbr.rel (0) target = $region49
    $region48: #{sent_mha_attn.5} parent=1 // pred_region
      _
    $region49: #{sent_mha_attn.5} parent=1 // pred_fallthru
      _
    // Predicated region
    $region50: #{sent_mha_attn.5} parent=1 // pred_check
      _
    $region51: #{sent_mha_attn.5} parent=1 // pred_check_branch
      %896 = sbr.rel (0) target = $region53
    $region52: #{sent_mha_attn.5} parent=1 // pred_region
      _
    $region53: #{sent_mha_attn.5} parent=1 // pred_fallthru
      _
    %897 = vsyncpa [#allocation3], 1

// kernel: sent_mha_attn.4
$region0: #{sent_mha_attn.4}
  #allocation0 [shape = 'u32[]', space=smem, size = 0x4, offset = 0x4, fixed_abs, tag = 'smem constant byte address 0x4 - core index']
  #allocation1 [shape = 'u32[144,128]{1,0:T(1,128)}', space=vmem, size = 0x12000, scoped, tag = 'internal scratch']
  #allocation2 [shape = 'f32[16,256]{1,0:T(8,128)}', space=vmem, size = 0x4000, scoped, tag = 'scratch operand']
  %s0 = inlined_call_operand.vmem [shape: f32[16,768], index: 0, kind: input, shape index: {}]
  %s1 = inlined_call_operand.vmem [shape: f32[16,256], index: 1, kind: input, shape index: {}]
  %s2 = inlined_call_operand.hbm [shape: f32[256,256], index: 2, kind: input, shape index: {}]
  %s3 = inlined_call_operand.vmem [shape: f32[1,256], index: 3, kind: input, shape index: {}]
  %s4 = inlined_call_operand.vmem [shape: f32[1,256], index: 4, kind: input, shape index: {}]
  %s5 = inlined_call_operand.vmem [shape: f32[1,256], index: 5, kind: input, shape index: {}]
  %s6 = inlined_call_operand.vmem [shape: f32[16,256], index: 6, kind: output, shape index: {0}]
  %s7 = inlined_call_operand.vmem [shape: f32[16,256], index: 7, kind: output, shape index: {1}]
  %8 = xla_tuple %s6, %s7
  %s9 = sld [smem:[#allocation0]]
  $region46: #{sent_mha_attn.4} parent=0
    _
  %s11 = ssub.s32 1, %s9
  %s12 = scalar_select 0, %s11, %s9
  $region1: #{sent_mha_attn.4} parent=0
    #allocation3 [shape = 'u8[262144]{0}', space=vmem, size = 0x40000, scoped, tag = 'input window, operand 2, single buffered']
    #allocation4 [shape = 's32[1]{0}', space=sflag, size = 0x4, scoped, tag = 'scoped memory for sent_mha_attn.4']
    %13 = vsyncpa [#allocation4], 0
    // Predicated region
    $region2: #{sent_mha_attn.4} parent=1 // pred_check
      _
    $region3: #{sent_mha_attn.4} parent=1 // pred_check_branch
      %15 = sbr.rel (0) target = $region5
    $region4: #{sent_mha_attn.4} parent=1 // pred_region
      _
    $region5: #{sent_mha_attn.4} parent=1 // pred_fallthru
      _
    // Predicated region
    $region6: #{sent_mha_attn.4} parent=1 // pred_check
      _
    $region7: #{sent_mha_attn.4} parent=1 // pred_check_branch
      %17 = sbr.rel (0) target = $region9
    $region8: #{sent_mha_attn.4} parent=1 // pred_region
      _
    $region9: #{sent_mha_attn.4} parent=1 // pred_fallthru
      _
    // Predicated region
    $region10: #{sent_mha_attn.4} parent=1 // pred_check
      _
    $region11: #{sent_mha_attn.4} parent=1 // pred_check_branch
      %19 = sbr.rel (0) target = $region13
    $region12: #{sent_mha_attn.4} parent=1 // pred_region
      %s21 = ssub.s32 8192, 8192
      %22 = vsyncadd [#allocation4], %s21
      %s23 = sshll.u32 [#allocation3], 4
      %s24 = int_to_ptr.vmem [resolvable:$true] %s23
      %29 = dma.hbm_to_vmem [thread:$0]  %s2, 8192, %s24, [#allocation4], 256, 256, 16
    $region13: #{sent_mha_attn.4} parent=1 // pred_fallthru
      _
    // Predicated region
    $region14: #{sent_mha_attn.4} parent=1 // pred_check
      _
    $region15: #{sent_mha_attn.4} parent=1 // pred_check_branch
      %31 = sbr.rel (0) target = $region17
    $region16: #{sent_mha_attn.4} parent=1 // pred_region
      _
    $region17: #{sent_mha_attn.4} parent=1 // pred_fallthru
      _
    // Predicated region
    $region18: #{sent_mha_attn.4} parent=1 // pred_check
      _
    $region19: #{sent_mha_attn.4} parent=1 // pred_check_branch
      %33 = sbr.rel (0) target = $region21
    $region20: #{sent_mha_attn.4} parent=1 // pred_region
      _
    $region21: #{sent_mha_attn.4} parent=1 // pred_fallthru
      _
    // Predicated region
    $region22: #{sent_mha_attn.4} parent=1 // pred_check
      _
    $region23: #{sent_mha_attn.4} parent=1 // pred_check_branch
      %35 = sbr.rel (0) target = $region25
    $region24: #{sent_mha_attn.4} parent=1 // pred_region
      _
    $region25: #{sent_mha_attn.4} parent=1 // pred_fallthru
      _
    // Predicated region
    $region26: #{sent_mha_attn.4} parent=1 // pred_check
      _
    $region27: #{sent_mha_attn.4} parent=1 // pred_check_branch
      %37 = sbr.rel (0) target = $region29
    $region28: #{sent_mha_attn.4} parent=1 // pred_region
      %38 = dma.done [#allocation4], 8192
    $region29: #{sent_mha_attn.4} parent=1 // pred_fallthru
      _
    %v39 = vld [vmem:[%s0] sm:$0xff]
    %v40 = vmul.f32 %v39, 0.125
    %v41 = vld [vmem:[%s0 + $0x10] sm:$0xff]
    %v42 = vld [vmem:[%s0 + $0x20] sm:$0xff]
    %vm43 = vcmask 523264
    %v45 = vsel %vm43, %v40, 0
    %v48 = vsel %vm43, %v41, 0
    %50 = vmatprep.subr.mxu0 0.0
    %51 = vmatpush1.xpose.msra.mxu0 %v48
    %52 = vmatprep.subr.mxu0 0.0
    %53 = vmatpush1.xpose.msra.mxu0 0.0
    %54 = vmatprep.subr.mxu0 0.0
    %55 = vmatpush1.xpose.msra.mxu0 0.0
    %56 = vmatprep.subr.mxu0 0.0
    %57 = vmatpush1.xpose.msra.mxu0 0.0
    %58 = vmatprep.subr.mxu0 0.0
    %59 = vmatpush1.xpose.msra.mxu0 0.0
    %60 = vmatprep.subr.mxu0 0.0
    %61 = vmatpush1.xpose.msra.mxu0 0.0
    %62 = vmatprep.subr.mxu0 0.0
    %63 = vmatpush1.xpose.msra.mxu0 0.0
    %64 = vmatprep.subr.mxu0 0.0
    %65 = vmatpush1.xpose.msra.mxu0 0.0
    %66 = vmatprep.subr.mxu0 0.0
    %67 = vmatpush1.xpose.msra.mxu0 0.0
    %68 = vmatprep.subr.mxu0 0.0
    %69 = vmatpush1.xpose.msra.mxu0 0.0
    %70 = vmatprep.subr.mxu0 0.0
    %71 = vmatpush1.xpose.msra.mxu0 0.0
    %72 = vmatprep.subr.mxu0 0.0
    %73 = vmatpush1.xpose.msra.mxu0 0.0
    %74 = vmatprep.subr.mxu0 0.0
    %75 = vmatpush1.xpose.msra.mxu0 0.0
    %76 = vmatprep.subr.mxu0 0.0
    %77 = vmatpush1.xpose.msra.mxu0 0.0
    %78 = vmatprep.subr.mxu0 0.0
    %79 = vmatpush1.xpose.msra.mxu0 0.0
    %80 = vmatprep.subr.mxu0 0.0
    %81 = vmatpush1.xpose.msra.mxu0 0.0
    %82 = vmatprep.subr.mxu0 0.0
    %83 = vmatpush1.xpose.msra.mxu0 0.0
    %84 = vmatprep.subr.mxu0 0.0
    %85 = vmatpush1.xpose.msra.mxu0 0.0
    %86 = vmatprep.subr.mxu0 0.0
    %87 = vmatpush1.xpose.msra.mxu0 0.0
    %88 = vmatprep.subr.mxu0 0.0
    %89 = vmatpush1.xpose.msra.mxu0 0.0
    %90 = vmatprep.subr.mxu0 0.0
    %91 = vmatpush1.xpose.msra.mxu0 0.0
    %92 = vmatprep.subr.mxu0 0.0
    %93 = vmatpush1.xpose.msra.mxu0 0.0
    %94 = vmatprep.subr.mxu0 0.0
    %95 = vmatpush1.xpose.msra.mxu0 0.0
    %96 = vmatprep.subr.mxu0 0.0
    %97 = vmatpush1.xpose.msra.mxu0 0.0
    %98 = vmatprep.subr.mxu0 0.0
    %99 = vmatpush1.xpose.msra.mxu0 0.0
    %100 = vmatprep.subr.mxu0 0.0
    %101 = vmatpush1.xpose.msra.mxu0 0.0
    %102 = vmatprep.subr.mxu0 0.0
    %103 = vmatpush1.xpose.msra.mxu0 0.0
    %104 = vmatprep.subr.mxu0 0.0
    %105 = vmatpush1.xpose.msra.mxu0 0.0
    %106 = vmatprep.subr.mxu0 0.0
    %107 = vmatpush1.xpose.msra.mxu0 0.0
    %108 = vmatprep.subr.mxu0 0.0
    %109 = vmatpush1.xpose.msra.mxu0 0.0
    %110 = vmatprep.subr.mxu0 0.0
    %111 = vmatpush1.xpose.msra.mxu0 0.0
    %112 = vmatprep.subr.mxu0 0.0
    %113 = vmatpush1.xpose.msra.mxu0 0.0
    %114 = vmatprep.mubr.f32.mxu0 0.0
    %115 = vmatmul.mubr.f32.gmra.mrb[0].mxu0 %v45
    %v116 = vpop.f32.mrb[0].mxu0
    %v117 = vadd.f32 0.0, %v116
    %v118 = vpop.f32.mrb[0].mxu0
    %119 = vdwg.mxu0
    %vm120 = vcmask 64512
    %v121 = vsel %vm120, %v117, -inf
    %122 = vmax.xlane.f32.xlu0 %v121
    %v123 = vpop.xlane.xlu0 %122
    %v124 = vsub.f32 %v117, %v123
    %v125 = vmul.f32 %v124, 1.442695
    %v126 = vpow.pop %v125
    %v127 = vsel %vm120, %v126, 0.0
    %128 = vadd.xlane.f32.xlu0 %v127
    %v129 = vpop.xlane.xlu0 %128
    %v131 = vsel %vm120, %v126, 0
    %133 = vmatprep.subr.mxu0 0.0
    %134 = vmatpush1.msra.mxu0 %v42
    %135 = vmatprep.subr.mxu0 0.0
    %136 = vmatpush1.msra.mxu0 0.0
    %137 = vmatprep.subr.mxu0 0.0
    %138 = vmatpush1.msra.mxu0 0.0
    %139 = vmatprep.subr.mxu0 0.0
    %140 = vmatpush1.msra.mxu0 0.0
    %141 = vmatprep.subr.mxu0 0.0
    %142 = vmatpush1.msra.mxu0 0.0
    %143 = vmatprep.subr.mxu0 0.0
    %144 = vmatpush1.msra.mxu0 0.0
    %145 = vmatprep.subr.mxu0 0.0
    %146 = vmatpush1.msra.mxu0 0.0
    %147 = vmatprep.subr.mxu0 0.0
    %148 = vmatpush1.msra.mxu0 0.0
    %149 = vmatprep.subr.mxu0 0.0
    %150 = vmatpush1.msra.mxu0 0.0
    %151 = vmatprep.subr.mxu0 0.0
    %152 = vmatpush1.msra.mxu0 0.0
    %153 = vmatprep.subr.mxu0 0.0
    %154 = vmatpush1.msra.mxu0 0.0
    %155 = vmatprep.subr.mxu0 0.0
    %156 = vmatpush1.msra.mxu0 0.0
    %157 = vmatprep.subr.mxu0 0.0
    %158 = vmatpush1.msra.mxu0 0.0
    %159 = vmatprep.subr.mxu0 0.0
    %160 = vmatpush1.msra.mxu0 0.0
    %161 = vmatprep.subr.mxu0 0.0
    %162 = vmatpush1.msra.mxu0 0.0
    %163 = vmatprep.subr.mxu0 0.0
    %164 = vmatpush1.msra.mxu0 0.0
    %165 = vmatprep.subr.mxu0 0.0
    %166 = vmatpush1.msra.mxu0 0.0
    %167 = vmatprep.subr.mxu0 0.0
    %168 = vmatpush1.msra.mxu0 0.0
    %169 = vmatprep.subr.mxu0 0.0
    %170 = vmatpush1.msra.mxu0 0.0
    %171 = vmatprep.subr.mxu0 0.0
    %172 = vmatpush1.msra.mxu0 0.0
    %173 = vmatprep.subr.mxu0 0.0
    %174 = vmatpush1.msra.mxu0 0.0
    %175 = vmatprep.subr.mxu0 0.0
    %176 = vmatpush1.msra.mxu0 0.0
    %177 = vmatprep.subr.mxu0 0.0
    %178 = vmatpush1.msra.mxu0 0.0
    %179 = vmatprep.subr.mxu0 0.0
    %180 = vmatpush1.msra.mxu0 0.0
    %181 = vmatprep.subr.mxu0 0.0
    %182 = vmatpush1.msra.mxu0 0.0
    %183 = vmatprep.subr.mxu0 0.0
    %184 = vmatpush1.msra.mxu0 0.0
    %185 = vmatprep.subr.mxu0 0.0
    %186 = vmatpush1.msra.mxu0 0.0
    %187 = vmatprep.subr.mxu0 0.0
    %188 = vmatpush1.msra.mxu0 0.0
    %189 = vmatprep.subr.mxu0 0.0
    %190 = vmatpush1.msra.mxu0 0.0
    %191 = vmatprep.subr.mxu0 0.0
    %192 = vmatpush1.msra.mxu0 0.0
    %193 = vmatprep.subr.mxu0 0.0
    %194 = vmatpush1.msra.mxu0 0.0
    %195 = vmatprep.subr.mxu0 0.0
    %196 = vmatpush1.msra.mxu0 0.0
    %197 = vmatprep.mubr.f32.mxu0 0.0
    %198 = vmatmul.mubr.f32.gmra.mrb[0].mxu0 %v131
    %v199 = vpop.f32.mrb[0].mxu0
    %v200 = vadd.f32 0.0, %v199
    %v201 = vpop.f32.mrb[0].mxu0
    %202 = vdwg.mxu0
    %v203 = vrcp.pop %v129
    %v204 = vmul.f32 %v200, %v203
    %205 = vst.msk [vmem:[#allocation2] sm:$0xff] %vm43, %v204
    %v206 = vld [vmem:[%s0] sm:$0xff]
    %v207 = vmul.f32 %v206, 0.125
    %v208 = vld [vmem:[%s0 + $0x10] sm:$0xff]
    %v209 = vld [vmem:[%s0 + $0x20] sm:$0xff]
    %211 = vrot.lane.b32.xlu0 %v207, 64
    %v212 = vpop.permute.xlu0 %211
    %214 = vrot.lane.b32.xlu0 %v208, 64
    %v215 = vpop.permute.xlu0 %214
    %v216 = vsel %vm43, %v212, 0
    %v218 = vsel %vm43, %v215, 0
    %220 = vmatprep.subr.mxu0 0.0
    %221 = vmatpush1.xpose.msra.mxu0 %v218
    %222 = vmatprep.subr.mxu0 0.0
    %223 = vmatpush1.xpose.msra.mxu0 0.0
    %224 = vmatprep.subr.mxu0 0.0
    %225 = vmatpush1.xpose.msra.mxu0 0.0
    %226 = vmatprep.subr.mxu0 0.0
    %227 = vmatpush1.xpose.msra.mxu0 0.0
    %228 = vmatprep.subr.mxu0 0.0
    %229 = vmatpush1.xpose.msra.mxu0 0.0
    %230 = vmatprep.subr.mxu0 0.0
    %231 = vmatpush1.xpose.msra.mxu0 0.0
    %232 = vmatprep.subr.mxu0 0.0
    %233 = vmatpush1.xpose.msra.mxu0 0.0
    %234 = vmatprep.subr.mxu0 0.0
    %235 = vmatpush1.xpose.msra.mxu0 0.0
    %236 = vmatprep.subr.mxu0 0.0
    %237 = vmatpush1.xpose.msra.mxu0 0.0
    %238 = vmatprep.subr.mxu0 0.0
    %239 = vmatpush1.xpose.msra.mxu0 0.0
    %240 = vmatprep.subr.mxu0 0.0
    %241 = vmatpush1.xpose.msra.mxu0 0.0
    %242 = vmatprep.subr.mxu0 0.0
    %243 = vmatpush1.xpose.msra.mxu0 0.0
    %244 = vmatprep.subr.mxu0 0.0
    %245 = vmatpush1.xpose.msra.mxu0 0.0
    %246 = vmatprep.subr.mxu0 0.0
    %247 = vmatpush1.xpose.msra.mxu0 0.0
    %248 = vmatprep.subr.mxu0 0.0
    %249 = vmatpush1.xpose.msra.mxu0 0.0
    %250 = vmatprep.subr.mxu0 0.0
    %251 = vmatpush1.xpose.msra.mxu0 0.0
    %252 = vmatprep.subr.mxu0 0.0
    %253 = vmatpush1.xpose.msra.mxu0 0.0
    %254 = vmatprep.subr.mxu0 0.0
    %255 = vmatpush1.xpose.msra.mxu0 0.0
    %256 = vmatprep.subr.mxu0 0.0
    %257 = vmatpush1.xpose.msra.mxu0 0.0
    %258 = vmatprep.subr.mxu0 0.0
    %259 = vmatpush1.xpose.msra.mxu0 0.0
    %260 = vmatprep.subr.mxu0 0.0
    %261 = vmatpush1.xpose.msra.mxu0 0.0
    %262 = vmatprep.subr.mxu0 0.0
    %263 = vmatpush1.xpose.msra.mxu0 0.0
    %264 = vmatprep.subr.mxu0 0.0
    %265 = vmatpush1.xpose.msra.mxu0 0.0
    %266 = vmatprep.subr.mxu0 0.0
    %267 = vmatpush1.xpose.msra.mxu0 0.0
    %268 = vmatprep.subr.mxu0 0.0
    %269 = vmatpush1.xpose.msra.mxu0 0.0
    %270 = vmatprep.subr.mxu0 0.0
    %271 = vmatpush1.xpose.msra.mxu0 0.0
    %272 = vmatprep.subr.mxu0 0.0
    %273 = vmatpush1.xpose.msra.mxu0 0.0
    %274 = vmatprep.subr.mxu0 0.0
    %275 = vmatpush1.xpose.msra.mxu0 0.0
    %276 = vmatprep.subr.mxu0 0.0
    %277 = vmatpush1.xpose.msra.mxu0 0.0
    %278 = vmatprep.subr.mxu0 0.0
    %279 = vmatpush1.xpose.msra.mxu0 0.0
    %280 = vmatprep.subr.mxu0 0.0
    %281 = vmatpush1.xpose.msra.mxu0 0.0
    %282 = vmatprep.subr.mxu0 0.0
    %283 = vmatpush1.xpose.msra.mxu0 0.0
    %284 = vmatprep.mubr.f32.mxu0 0.0
    %285 = vmatmul.mubr.f32.gmra.mrb[0].mxu0 %v216
    %v286 = vpop.f32.mrb[0].mxu0
    %v287 = vadd.f32 0.0, %v286
    %v288 = vpop.f32.mrb[0].mxu0
    %289 = vdwg.mxu0
    %v290 = vsel %vm120, %v287, -inf
    %291 = vmax.xlane.f32.xlu0 %v290
    %v292 = vpop.xlane.xlu0 %291
    %v293 = vsub.f32 %v287, %v292
    %v294 = vmul.f32 %v293, 1.442695
    %v295 = vpow.pop %v294
    %v296 = vsel %vm120, %v295, 0.0
    %297 = vadd.xlane.f32.xlu0 %v296
    %v298 = vpop.xlane.xlu0 %297
    %300 = vrot.lane.b32.xlu0 %v209, 64
    %v301 = vpop.permute.xlu0 %300
    %v304 = vsel %vm120, %v295, 0
    %306 = vmatprep.subr.mxu0 0.0
    %307 = vmatpush1.msra.mxu0 %v301
    %308 = vmatprep.subr.mxu0 0.0
    %309 = vmatpush1.msra.mxu0 0.0
    %310 = vmatprep.subr.mxu0 0.0
    %311 = vmatpush1.msra.mxu0 0.0
    %312 = vmatprep.subr.mxu0 0.0
    %313 = vmatpush1.msra.mxu0 0.0
    %314 = vmatprep.subr.mxu0 0.0
    %315 = vmatpush1.msra.mxu0 0.0
    %316 = vmatprep.subr.mxu0 0.0
    %317 = vmatpush1.msra.mxu0 0.0
    %318 = vmatprep.subr.mxu0 0.0
    %319 = vmatpush1.msra.mxu0 0.0
    %320 = vmatprep.subr.mxu0 0.0
    %321 = vmatpush1.msra.mxu0 0.0
    %322 = vmatprep.subr.mxu0 0.0
    %323 = vmatpush1.msra.mxu0 0.0
    %324 = vmatprep.subr.mxu0 0.0
    %325 = vmatpush1.msra.mxu0 0.0
    %326 = vmatprep.subr.mxu0 0.0
    %327 = vmatpush1.msra.mxu0 0.0
    %328 = vmatprep.subr.mxu0 0.0
    %329 = vmatpush1.msra.mxu0 0.0
    %330 = vmatprep.subr.mxu0 0.0
    %331 = vmatpush1.msra.mxu0 0.0
    %332 = vmatprep.subr.mxu0 0.0
    %333 = vmatpush1.msra.mxu0 0.0
    %334 = vmatprep.subr.mxu0 0.0
    %335 = vmatpush1.msra.mxu0 0.0
    %336 = vmatprep.subr.mxu0 0.0
    %337 = vmatpush1.msra.mxu0 0.0
    %338 = vmatprep.subr.mxu0 0.0
    %339 = vmatpush1.msra.mxu0 0.0
    %340 = vmatprep.subr.mxu0 0.0
    %341 = vmatpush1.msra.mxu0 0.0
    %342 = vmatprep.subr.mxu0 0.0
    %343 = vmatpush1.msra.mxu0 0.0
    %344 = vmatprep.subr.mxu0 0.0
    %345 = vmatpush1.msra.mxu0 0.0
    %346 = vmatprep.subr.mxu0 0.0
    %347 = vmatpush1.msra.mxu0 0.0
    %348 = vmatprep.subr.mxu0 0.0
    %349 = vmatpush1.msra.mxu0 0.0
    %350 = vmatprep.subr.mxu0 0.0
    %351 = vmatpush1.msra.mxu0 0.0
    %352 = vmatprep.subr.mxu0 0.0
    %353 = vmatpush1.msra.mxu0 0.0
    %354 = vmatprep.subr.mxu0 0.0
    %355 = vmatpush1.msra.mxu0 0.0
    %356 = vmatprep.subr.mxu0 0.0
    %357 = vmatpush1.msra.mxu0 0.0
    %358 = vmatprep.subr.mxu0 0.0
    %359 = vmatpush1.msra.mxu0 0.0
    %360 = vmatprep.subr.mxu0 0.0
    %361 = vmatpush1.msra.mxu0 0.0
    %362 = vmatprep.subr.mxu0 0.0
    %363 = vmatpush1.msra.mxu0 0.0
    %364 = vmatprep.subr.mxu0 0.0
    %365 = vmatpush1.msra.mxu0 0.0
    %366 = vmatprep.subr.mxu0 0.0
    %367 = vmatpush1.msra.mxu0 0.0
    %368 = vmatprep.subr.mxu0 0.0
    %369 = vmatpush1.msra.mxu0 0.0
    %370 = vmatprep.mubr.f32.mxu0 0.0
    %371 = vmatmul.mubr.f32.gmra.mrb[0].mxu0 %v304
    %v372 = vpop.f32.mrb[0].mxu0
    %v373 = vadd.f32 0.0, %v372
    %v374 = vpop.f32.mrb[0].mxu0
    %375 = vdwg.mxu0
    %v376 = vrcp.pop %v298
    %v377 = vmul.f32 %v373, %v376
    %379 = vrot.lane.b32.xlu0 %v377, 64
    %v380 = vpop.permute.xlu0 %379
    %vm382 = vcmask 1048064
    %383 = vst.msk [vmem:[#allocation2] sm:$0xff] %vm382, %v380
    %v384 = vld [vmem:[%s0 + $0x8] sm:$0xff]
    %v385 = vmul.f32 %v384, 0.125
    %v386 = vld [vmem:[%s0 + $0x18] sm:$0xff]
    %v387 = vld [vmem:[%s0 + $0x28] sm:$0xff]
    %v389 = vsel %vm43, %v385, 0
    %v392 = vsel %vm43, %v386, 0
    %394 = vmatprep.subr.mxu0 0.0
    %395 = vmatpush1.xpose.msra.mxu0 %v392
    %396 = vmatprep.subr.mxu0 0.0
    %397 = vmatpush1.xpose.msra.mxu0 0.0
    %398 = vmatprep.subr.mxu0 0.0
    %399 = vmatpush1.xpose.msra.mxu0 0.0
    %400 = vmatprep.subr.mxu0 0.0
    %401 = vmatpush1.xpose.msra.mxu0 0.0
    %402 = vmatprep.subr.mxu0 0.0
    %403 = vmatpush1.xpose.msra.mxu0 0.0
    %404 = vmatprep.subr.mxu0 0.0
    %405 = vmatpush1.xpose.msra.mxu0 0.0
    %406 = vmatprep.subr.mxu0 0.0
    %407 = vmatpush1.xpose.msra.mxu0 0.0
    %408 = vmatprep.subr.mxu0 0.0
    %409 = vmatpush1.xpose.msra.mxu0 0.0
    %410 = vmatprep.subr.mxu0 0.0
    %411 = vmatpush1.xpose.msra.mxu0 0.0
    %412 = vmatprep.subr.mxu0 0.0
    %413 = vmatpush1.xpose.msra.mxu0 0.0
    %414 = vmatprep.subr.mxu0 0.0
    %415 = vmatpush1.xpose.msra.mxu0 0.0
    %416 = vmatprep.subr.mxu0 0.0
    %417 = vmatpush1.xpose.msra.mxu0 0.0
    %418 = vmatprep.subr.mxu0 0.0
    %419 = vmatpush1.xpose.msra.mxu0 0.0
    %420 = vmatprep.subr.mxu0 0.0
    %421 = vmatpush1.xpose.msra.mxu0 0.0
    %422 = vmatprep.subr.mxu0 0.0
    %423 = vmatpush1.xpose.msra.mxu0 0.0
    %424 = vmatprep.subr.mxu0 0.0
    %425 = vmatpush1.xpose.msra.mxu0 0.0
    %426 = vmatprep.subr.mxu0 0.0
    %427 = vmatpush1.xpose.msra.mxu0 0.0
    %428 = vmatprep.subr.mxu0 0.0
    %429 = vmatpush1.xpose.msra.mxu0 0.0
    %430 = vmatprep.subr.mxu0 0.0
    %431 = vmatpush1.xpose.msra.mxu0 0.0
    %432 = vmatprep.subr.mxu0 0.0
    %433 = vmatpush1.xpose.msra.mxu0 0.0
    %434 = vmatprep.subr.mxu0 0.0
    %435 = vmatpush1.xpose.msra.mxu0 0.0
    %436 = vmatprep.subr.mxu0 0.0
    %437 = vmatpush1.xpose.msra.mxu0 0.0
    %438 = vmatprep.subr.mxu0 0.0
    %439 = vmatpush1.xpose.msra.mxu0 0.0
    %440 = vmatprep.subr.mxu0 0.0
    %441 = vmatpush1.xpose.msra.mxu0 0.0
    %442 = vmatprep.subr.mxu0 0.0
    %443 = vmatpush1.xpose.msra.mxu0 0.0
    %444 = vmatprep.subr.mxu0 0.0
    %445 = vmatpush1.xpose.msra.mxu0 0.0
    %446 = vmatprep.subr.mxu0 0.0
    %447 = vmatpush1.xpose.msra.mxu0 0.0
    %448 = vmatprep.subr.mxu0 0.0
    %449 = vmatpush1.xpose.msra.mxu0 0.0
    %450 = vmatprep.subr.mxu0 0.0
    %451 = vmatpush1.xpose.msra.mxu0 0.0
    %452 = vmatprep.subr.mxu0 0.0
    %453 = vmatpush1.xpose.msra.mxu0 0.0
    %454 = vmatprep.subr.mxu0 0.0
    %455 = vmatpush1.xpose.msra.mxu0 0.0
    %456 = vmatprep.subr.mxu0 0.0
    %457 = vmatpush1.xpose.msra.mxu0 0.0
    %458 = vmatprep.mubr.f32.mxu0 0.0
    %459 = vmatmul.mubr.f32.gmra.mrb[0].mxu0 %v389
    %v460 = vpop.f32.mrb[0].mxu0
    %v461 = vadd.f32 0.0, %v460
    %v462 = vpop.f32.mrb[0].mxu0
    %463 = vdwg.mxu0
    %v464 = vsel %vm120, %v461, -inf
    %465 = vmax.xlane.f32.xlu0 %v464
    %v466 = vpop.xlane.xlu0 %465
    %v467 = vsub.f32 %v461, %v466
    %v468 = vmul.f32 %v467, 1.442695
    %v469 = vpow.pop %v468
    %v470 = vsel %vm120, %v469, 0.0
    %471 = vadd.xlane.f32.xlu0 %v470
    %v472 = vpop.xlane.xlu0 %471
    %v474 = vsel %vm120, %v469, 0
    %476 = vmatprep.subr.mxu0 0.0
    %477 = vmatpush1.msra.mxu0 %v387
    %478 = vmatprep.subr.mxu0 0.0
    %479 = vmatpush1.msra.mxu0 0.0
    %480 = vmatprep.subr.mxu0 0.0
    %481 = vmatpush1.msra.mxu0 0.0
    %482 = vmatprep.subr.mxu0 0.0
    %483 = vmatpush1.msra.mxu0 0.0
    %484 = vmatprep.subr.mxu0 0.0
    %485 = vmatpush1.msra.mxu0 0.0
    %486 = vmatprep.subr.mxu0 0.0
    %487 = vmatpush1.msra.mxu0 0.0
    %488 = vmatprep.subr.mxu0 0.0
    %489 = vmatpush1.msra.mxu0 0.0
    %490 = vmatprep.subr.mxu0 0.0
    %491 = vmatpush1.msra.mxu0 0.0
    %492 = vmatprep.subr.mxu0 0.0
    %493 = vmatpush1.msra.mxu0 0.0
    %494 = vmatprep.subr.mxu0 0.0
    %495 = vmatpush1.msra.mxu0 0.0
    %496 = vmatprep.subr.mxu0 0.0
    %497 = vmatpush1.msra.mxu0 0.0
    %498 = vmatprep.subr.mxu0 0.0
    %499 = vmatpush1.msra.mxu0 0.0
    %500 = vmatprep.subr.mxu0 0.0
    %501 = vmatpush1.msra.mxu0 0.0
    %502 = vmatprep.subr.mxu0 0.0
    %503 = vmatpush1.msra.mxu0 0.0
    %504 = vmatprep.subr.mxu0 0.0
    %505 = vmatpush1.msra.mxu0 0.0
    %506 = vmatprep.subr.mxu0 0.0
    %507 = vmatpush1.msra.mxu0 0.0
    %508 = vmatprep.subr.mxu0 0.0
    %509 = vmatpush1.msra.mxu0 0.0
    %510 = vmatprep.subr.mxu0 0.0
    %511 = vmatpush1.msra.mxu0 0.0
    %512 = vmatprep.subr.mxu0 0.0
    %513 = vmatpush1.msra.mxu0 0.0
    %514 = vmatprep.subr.mxu0 0.0
    %515 = vmatpush1.msra.mxu0 0.0
    %516 = vmatprep.subr.mxu0 0.0
    %517 = vmatpush1.msra.mxu0 0.0
    %518 = vmatprep.subr.mxu0 0.0
    %519 = vmatpush1.msra.mxu0 0.0
    %520 = vmatprep.subr.mxu0 0.0
    %521 = vmatpush1.msra.mxu0 0.0
    %522 = vmatprep.subr.mxu0 0.0
    %523 = vmatpush1.msra.mxu0 0.0
    %524 = vmatprep.subr.mxu0 0.0
    %525 = vmatpush1.msra.mxu0 0.0
    %526 = vmatprep.subr.mxu0 0.0
    %527 = vmatpush1.msra.mxu0 0.0
    %528 = vmatprep.subr.mxu0 0.0
    %529 = vmatpush1.msra.mxu0 0.0
    %530 = vmatprep.subr.mxu0 0.0
    %531 = vmatpush1.msra.mxu0 0.0
    %532 = vmatprep.subr.mxu0 0.0
    %533 = vmatpush1.msra.mxu0 0.0
    %534 = vmatprep.subr.mxu0 0.0
    %535 = vmatpush1.msra.mxu0 0.0
    %536 = vmatprep.subr.mxu0 0.0
    %537 = vmatpush1.msra.mxu0 0.0
    %538 = vmatprep.subr.mxu0 0.0
    %539 = vmatpush1.msra.mxu0 0.0
    %540 = vmatprep.mubr.f32.mxu0 0.0
    %541 = vmatmul.mubr.f32.gmra.mrb[0].mxu0 %v474
    %v542 = vpop.f32.mrb[0].mxu0
    %v543 = vadd.f32 0.0, %v542
    %v544 = vpop.f32.mrb[0].mxu0
    %545 = vdwg.mxu0
    %v546 = vrcp.pop %v472
    %v547 = vmul.f32 %v543, %v546
    %548 = vst.msk [vmem:[#allocation2 + $0x8] sm:$0xff] %vm43, %v547
    %v549 = vld [vmem:[%s0 + $0x8] sm:$0xff]
    %v550 = vmul.f32 %v549, 0.125
    %v551 = vld [vmem:[%s0 + $0x18] sm:$0xff]
    %v552 = vld [vmem:[%s0 + $0x28] sm:$0xff]
    %554 = vrot.lane.b32.xlu0 %v550, 64
    %v555 = vpop.permute.xlu0 %554
    %557 = vrot.lane.b32.xlu0 %v551, 64
    %v558 = vpop.permute.xlu0 %557
    %v559 = vsel %vm43, %v555, 0
    %v561 = vsel %vm43, %v558, 0
    %563 = vmatprep.subr.mxu0 0.0
    %564 = vmatpush1.xpose.msra.mxu0 %v561
    %565 = vmatprep.subr.mxu0 0.0
    %566 = vmatpush1.xpose.msra.mxu0 0.0
    %567 = vmatprep.subr.mxu0 0.0
    %568 = vmatpush1.xpose.msra.mxu0 0.0
    %569 = vmatprep.subr.mxu0 0.0
    %570 = vmatpush1.xpose.msra.mxu0 0.0
    %571 = vmatprep.subr.mxu0 0.0
    %572 = vmatpush1.xpose.msra.mxu0 0.0
    %573 = vmatprep.subr.mxu0 0.0
    %574 = vmatpush1.xpose.msra.mxu0 0.0
    %575 = vmatprep.subr.mxu0 0.0
    %576 = vmatpush1.xpose.msra.mxu0 0.0
    %577 = vmatprep.subr.mxu0 0.0
    %578 = vmatpush1.xpose.msra.mxu0 0.0
    %579 = vmatprep.subr.mxu0 0.0
    %580 = vmatpush1.xpose.msra.mxu0 0.0
    %581 = vmatprep.subr.mxu0 0.0
    %582 = vmatpush1.xpose.msra.mxu0 0.0
    %583 = vmatprep.subr.mxu0 0.0
    %584 = vmatpush1.xpose.msra.mxu0 0.0
    %585 = vmatprep.subr.mxu0 0.0
    %586 = vmatpush1.xpose.msra.mxu0 0.0
    %587 = vmatprep.subr.mxu0 0.0
    %588 = vmatpush1.xpose.msra.mxu0 0.0
    %589 = vmatprep.subr.mxu0 0.0
    %590 = vmatpush1.xpose.msra.mxu0 0.0
    %591 = vmatprep.subr.mxu0 0.0
    %592 = vmatpush1.xpose.msra.mxu0 0.0
    %593 = vmatprep.subr.mxu0 0.0
    %594 = vmatpush1.xpose.msra.mxu0 0.0
    %595 = vmatprep.subr.mxu0 0.0
    %596 = vmatpush1.xpose.msra.mxu0 0.0
    %597 = vmatprep.subr.mxu0 0.0
    %598 = vmatpush1.xpose.msra.mxu0 0.0
    %599 = vmatprep.subr.mxu0 0.0
    %600 = vmatpush1.xpose.msra.mxu0 0.0
    %601 = vmatprep.subr.mxu0 0.0
    %602 = vmatpush1.xpose.msra.mxu0 0.0
    %603 = vmatprep.subr.mxu0 0.0
    %604 = vmatpush1.xpose.msra.mxu0 0.0
    %605 = vmatprep.subr.mxu0 0.0
    %606 = vmatpush1.xpose.msra.mxu0 0.0
    %607 = vmatprep.subr.mxu0 0.0
    %608 = vmatpush1.xpose.msra.mxu0 0.0
    %609 = vmatprep.subr.mxu0 0.0
    %610 = vmatpush1.xpose.msra.mxu0 0.0
    %611 = vmatprep.subr.mxu0 0.0
    %612 = vmatpush1.xpose.msra.mxu0 0.0
    %613 = vmatprep.subr.mxu0 0.0
    %614 = vmatpush1.xpose.msra.mxu0 0.0
    %615 = vmatprep.subr.mxu0 0.0
    %616 = vmatpush1.xpose.msra.mxu0 0.0
    %617 = vmatprep.subr.mxu0 0.0
    %618 = vmatpush1.xpose.msra.mxu0 0.0
    %619 = vmatprep.subr.mxu0 0.0
    %620 = vmatpush1.xpose.msra.mxu0 0.0
    %621 = vmatprep.subr.mxu0 0.0
    %622 = vmatpush1.xpose.msra.mxu0 0.0
    %623 = vmatprep.subr.mxu0 0.0
    %624 = vmatpush1.xpose.msra.mxu0 0.0
    %625 = vmatprep.subr.mxu0 0.0
    %626 = vmatpush1.xpose.msra.mxu0 0.0
    %627 = vmatprep.mubr.f32.mxu0 0.0
    %628 = vmatmul.mubr.f32.gmra.mrb[0].mxu0 %v559
    %v629 = vpop.f32.mrb[0].mxu0
    %v630 = vadd.f32 0.0, %v629
    %v631 = vpop.f32.mrb[0].mxu0
    %632 = vdwg.mxu0
    %v633 = vsel %vm120, %v630, -inf
    %634 = vmax.xlane.f32.xlu0 %v633
    %v635 = vpop.xlane.xlu0 %634
    %v636 = vsub.f32 %v630, %v635
    %v637 = vmul.f32 %v636, 1.442695
    %v638 = vpow.pop %v637
    %v639 = vsel %vm120, %v638, 0.0
    %640 = vadd.xlane.f32.xlu0 %v639
    %v641 = vpop.xlane.xlu0 %640
    %643 = vrot.lane.b32.xlu0 %v552, 64
    %v644 = vpop.permute.xlu0 %643
    %v647 = vsel %vm120, %v638, 0
    %649 = vmatprep.subr.mxu0 0.0
    %650 = vmatpush1.msra.mxu0 %v644
    %651 = vmatprep.subr.mxu0 0.0
    %652 = vmatpush1.msra.mxu0 0.0
    %653 = vmatprep.subr.mxu0 0.0
    %654 = vmatpush1.msra.mxu0 0.0
    %655 = vmatprep.subr.mxu0 0.0
    %656 = vmatpush1.msra.mxu0 0.0
    %657 = vmatprep.subr.mxu0 0.0
    %658 = vmatpush1.msra.mxu0 0.0
    %659 = vmatprep.subr.mxu0 0.0
    %660 = vmatpush1.msra.mxu0 0.0
    %661 = vmatprep.subr.mxu0 0.0
    %662 = vmatpush1.msra.mxu0 0.0
    %663 = vmatprep.subr.mxu0 0.0
    %664 = vmatpush1.msra.mxu0 0.0
    %665 = vmatprep.subr.mxu0 0.0
    %666 = vmatpush1.msra.mxu0 0.0
    %667 = vmatprep.subr.mxu0 0.0
    %668 = vmatpush1.msra.mxu0 0.0
    %669 = vmatprep.subr.mxu0 0.0
    %670 = vmatpush1.msra.mxu0 0.0
    %671 = vmatprep.subr.mxu0 0.0
    %672 = vmatpush1.msra.mxu0 0.0
    %673 = vmatprep.subr.mxu0 0.0
    %674 = vmatpush1.msra.mxu0 0.0
    %675 = vmatprep.subr.mxu0 0.0
    %676 = vmatpush1.msra.mxu0 0.0
    %677 = vmatprep.subr.mxu0 0.0
    %678 = vmatpush1.msra.mxu0 0.0
    %679 = vmatprep.subr.mxu0 0.0
    %680 = vmatpush1.msra.mxu0 0.0
    %681 = vmatprep.subr.mxu0 0.0
    %682 = vmatpush1.msra.mxu0 0.0
    %683 = vmatprep.subr.mxu0 0.0
    %684 = vmatpush1.msra.mxu0 0.0
    %685 = vmatprep.subr.mxu0 0.0
    %686 = vmatpush1.msra.mxu0 0.0
    %687 = vmatprep.subr.mxu0 0.0
    %688 = vmatpush1.msra.mxu0 0.0
    %689 = vmatprep.subr.mxu0 0.0
    %690 = vmatpush1.msra.mxu0 0.0
    %691 = vmatprep.subr.mxu0 0.0
    %692 = vmatpush1.msra.mxu0 0.0
    %693 = vmatprep.subr.mxu0 0.0
    %694 = vmatpush1.msra.mxu0 0.0
    %695 = vmatprep.subr.mxu0 0.0
    %696 = vmatpush1.msra.mxu0 0.0
    %697 = vmatprep.subr.mxu0 0.0
    %698 = vmatpush1.msra.mxu0 0.0
    %699 = vmatprep.subr.mxu0 0.0
    %700 = vmatpush1.msra.mxu0 0.0
    %701 = vmatprep.subr.mxu0 0.0
    %702 = vmatpush1.msra.mxu0 0.0
    %703 = vmatprep.subr.mxu0 0.0
    %704 = vmatpush1.msra.mxu0 0.0
    %705 = vmatprep.subr.mxu0 0.0
    %706 = vmatpush1.msra.mxu0 0.0
    %707 = vmatprep.subr.mxu0 0.0
    %708 = vmatpush1.msra.mxu0 0.0
    %709 = vmatprep.subr.mxu0 0.0
    %710 = vmatpush1.msra.mxu0 0.0
    %711 = vmatprep.subr.mxu0 0.0
    %712 = vmatpush1.msra.mxu0 0.0
    %713 = vmatprep.mubr.f32.mxu0 0.0
    %714 = vmatmul.mubr.f32.gmra.mrb[0].mxu0 %v647
    %v715 = vpop.f32.mrb[0].mxu0
    %v716 = vadd.f32 0.0, %v715
    %v717 = vpop.f32.mrb[0].mxu0
    %718 = vdwg.mxu0
    %v719 = vrcp.pop %v641
    %v720 = vmul.f32 %v716, %v719
    %722 = vrot.lane.b32.xlu0 %v720, 64
    %v723 = vpop.permute.xlu0 %722
    %725 = vst.msk [vmem:[#allocation2 + $0x8] sm:$0xff] %vm382, %v723
    %v726 = vld [vmem:[%s0 + $0x30] sm:$0xff]
    %v727 = vmul.f32 %v726, 0.125
    %v728 = vld [vmem:[%s0 + $0x40] sm:$0xff]
    %v729 = vld [vmem:[%s0 + $0x50] sm:$0xff]
    %v731 = vsel %vm43, %v727, 0
    %v734 = vsel %vm43, %v728, 0
    %736 = vmatprep.subr.mxu0 0.0
    %737 = vmatpush1.xpose.msra.mxu0 %v734
    %738 = vmatprep.subr.mxu0 0.0
    %739 = vmatpush1.xpose.msra.mxu0 0.0
    %740 = vmatprep.subr.mxu0 0.0
    %741 = vmatpush1.xpose.msra.mxu0 0.0
    %742 = vmatprep.subr.mxu0 0.0
    %743 = vmatpush1.xpose.msra.mxu0 0.0
    %744 = vmatprep.subr.mxu0 0.0
    %745 = vmatpush1.xpose.msra.mxu0 0.0
    %746 = vmatprep.subr.mxu0 0.0
    %747 = vmatpush1.xpose.msra.mxu0 0.0
    %748 = vmatprep.subr.mxu0 0.0
    %749 = vmatpush1.xpose.msra.mxu0 0.0
    %750 = vmatprep.subr.mxu0 0.0
    %751 = vmatpush1.xpose.msra.mxu0 0.0
    %752 = vmatprep.subr.mxu0 0.0
    %753 = vmatpush1.xpose.msra.mxu0 0.0
    %754 = vmatprep.subr.mxu0 0.0
    %755 = vmatpush1.xpose.msra.mxu0 0.0
    %756 = vmatprep.subr.mxu0 0.0
    %757 = vmatpush1.xpose.msra.mxu0 0.0
    %758 = vmatprep.subr.mxu0 0.0
    %759 = vmatpush1.xpose.msra.mxu0 0.0
    %760 = vmatprep.subr.mxu0 0.0
    %761 = vmatpush1.xpose.msra.mxu0 0.0
    %762 = vmatprep.subr.mxu0 0.0
    %763 = vmatpush1.xpose.msra.mxu0 0.0
    %764 = vmatprep.subr.mxu0 0.0
    %765 = vmatpush1.xpose.msra.mxu0 0.0
    %766 = vmatprep.subr.mxu0 0.0
    %767 = vmatpush1.xpose.msra.mxu0 0.0
    %768 = vmatprep.subr.mxu0 0.0
    %769 = vmatpush1.xpose.msra.mxu0 0.0
    %770 = vmatprep.subr.mxu0 0.0
    %771 = vmatpush1.xpose.msra.mxu0 0.0
    %772 = vmatprep.subr.mxu0 0.0
    %773 = vmatpush1.xpose.msra.mxu0 0.0
    %774 = vmatprep.subr.mxu0 0.0
    %775 = vmatpush1.xpose.msra.mxu0 0.0
    %776 = vmatprep.subr.mxu0 0.0
    %777 = vmatpush1.xpose.msra.mxu0 0.0
    %778 = vmatprep.subr.mxu0 0.0
    %779 = vmatpush1.xpose.msra.mxu0 0.0
    %780 = vmatprep.subr.mxu0 0.0
    %781 = vmatpush1.xpose.msra.mxu0 0.0
    %782 = vmatprep.subr.mxu0 0.0
    %783 = vmatpush1.xpose.msra.mxu0 0.0
    %784 = vmatprep.subr.mxu0 0.0
    %785 = vmatpush1.xpose.msra.mxu0 0.0
    %786 = vmatprep.subr.mxu0 0.0
    %787 = vmatpush1.xpose.msra.mxu0 0.0
    %788 = vmatprep.subr.mxu0 0.0
    %789 = vmatpush1.xpose.msra.mxu0 0.0
    %790 = vmatprep.subr.mxu0 0.0
    %791 = vmatpush1.xpose.msra.mxu0 0.0
    %792 = vmatprep.subr.mxu0 0.0
    %793 = vmatpush1.xpose.msra.mxu0 0.0
    %794 = vmatprep.subr.mxu0 0.0
    %795 = vmatpush1.xpose.msra.mxu0 0.0
    %796 = vmatprep.subr.mxu0 0.0
    %797 = vmatpush1.xpose.msra.mxu0 0.0
    %798 = vmatprep.subr.mxu0 0.0
    %799 = vmatpush1.xpose.msra.mxu0 0.0
    %800 = vmatprep.mubr.f32.mxu0 0.0
    %801 = vmatmul.mubr.f32.gmra.mrb[0].mxu0 %v731
    %v802 = vpop.f32.mrb[0].mxu0
    %v803 = vadd.f32 0.0, %v802
    %v804 = vpop.f32.mrb[0].mxu0
    %805 = vdwg.mxu0
    %v806 = vsel %vm120, %v803, -inf
    %807 = vmax.xlane.f32.xlu0 %v806
    %v808 = vpop.xlane.xlu0 %807
    %v809 = vsub.f32 %v803, %v808
    %v810 = vmul.f32 %v809, 1.442695
    %v811 = vpow.pop %v810
    %v812 = vsel %vm120, %v811, 0.0
    %813 = vadd.xlane.f32.xlu0 %v812
    %v814 = vpop.xlane.xlu0 %813
    %v816 = vsel %vm120, %v811, 0
    %818 = vmatprep.subr.mxu0 0.0
    %819 = vmatpush1.msra.mxu0 %v729
    %820 = vmatprep.subr.mxu0 0.0
    %821 = vmatpush1.msra.mxu0 0.0
    %822 = vmatprep.subr.mxu0 0.0
    %823 = vmatpush1.msra.mxu0 0.0
    %824 = vmatprep.subr.mxu0 0.0
    %825 = vmatpush1.msra.mxu0 0.0
    %826 = vmatprep.subr.mxu0 0.0
    %827 = vmatpush1.msra.mxu0 0.0
    %828 = vmatprep.subr.mxu0 0.0
    %829 = vmatpush1.msra.mxu0 0.0
    %830 = vmatprep.subr.mxu0 0.0
    %831 = vmatpush1.msra.mxu0 0.0
    %832 = vmatprep.subr.mxu0 0.0
    %833 = vmatpush1.msra.mxu0 0.0
    %834 = vmatprep.subr.mxu0 0.0
    %835 = vmatpush1.msra.mxu0 0.0
    %836 = vmatprep.subr.mxu0 0.0
    %837 = vmatpush1.msra.mxu0 0.0
    %838 = vmatprep.subr.mxu0 0.0
    %839 = vmatpush1.msra.mxu0 0.0
    %840 = vmatprep.subr.mxu0 0.0
    %841 = vmatpush1.msra.mxu0 0.0
    %842 = vmatprep.subr.mxu0 0.0
    %843 = vmatpush1.msra.mxu0 0.0
    %844 = vmatprep.subr.mxu0 0.0
    %845 = vmatpush1.msra.mxu0 0.0
    %846 = vmatprep.subr.mxu0 0.0
    %847 = vmatpush1.msra.mxu0 0.0
    %848 = vmatprep.subr.mxu0 0.0
    %849 = vmatpush1.msra.mxu0 0.0
    %850 = vmatprep.subr.mxu0 0.0
    %851 = vmatpush1.msra.mxu0 0.0
    %852 = vmatprep.subr.mxu0 0.0
    %853 = vmatpush1.msra.mxu0 0.0
    %854 = vmatprep.subr.mxu0 0.0
    %855 = vmatpush1.msra.mxu0 0.0
    %856 = vmatprep.subr.mxu0 0.0
    %857 = vmatpush1.msra.mxu0 0.0
    %858 = vmatprep.subr.mxu0 0.0
    %859 = vmatpush1.msra.mxu0 0.0
    %860 = vmatprep.subr.mxu0 0.0
    %861 = vmatpush1.msra.mxu0 0.0
    %862 = vmatprep.subr.mxu0 0.0
    %863 = vmatpush1.msra.mxu0 0.0
    %864 = vmatprep.subr.mxu0 0.0
    %865 = vmatpush1.msra.mxu0 0.0
    %866 = vmatprep.subr.mxu0 0.0
    %867 = vmatpush1.msra.mxu0 0.0
    %868 = vmatprep.subr.mxu0 0.0
    %869 = vmatpush1.msra.mxu0 0.0
    %870 = vmatprep.subr.mxu0 0.0
    %871 = vmatpush1.msra.mxu0 0.0
    %872 = vmatprep.subr.mxu0 0.0
    %873 = vmatpush1.msra.mxu0 0.0
    %874 = vmatprep.subr.mxu0 0.0
    %875 = vmatpush1.msra.mxu0 0.0
    %876 = vmatprep.subr.mxu0 0.0
    %877 = vmatpush1.msra.mxu0 0.0
    %878 = vmatprep.subr.mxu0 0.0
    %879 = vmatpush1.msra.mxu0 0.0
    %880 = vmatprep.subr.mxu0 0.0
    %881 = vmatpush1.msra.mxu0 0.0
    %882 = vmatprep.mubr.f32.mxu0 0.0
    %883 = vmatmul.mubr.f32.gmra.mrb[0].mxu0 %v816
    %v884 = vpop.f32.mrb[0].mxu0
    %v885 = vadd.f32 0.0, %v884
    %v886 = vpop.f32.mrb[0].mxu0
    %887 = vdwg.mxu0
    %v888 = vrcp.pop %v814
    %v889 = vmul.f32 %v885, %v888
    %890 = vst.msk [vmem:[#allocation2 + $0x10] sm:$0xff] %vm43, %v889
    %v891 = vld [vmem:[%s0 + $0x30] sm:$0xff]
    %v892 = vmul.f32 %v891, 0.125
    %v893 = vld [vmem:[%s0 + $0x40] sm:$0xff]
    %v894 = vld [vmem:[%s0 + $0x50] sm:$0xff]
    %896 = vrot.lane.b32.xlu0 %v892, 64
    %v897 = vpop.permute.xlu0 %896
    %899 = vrot.lane.b32.xlu0 %v893, 64
    %v900 = vpop.permute.xlu0 %899
    %v901 = vsel %vm43, %v897, 0
    %v903 = vsel %vm43, %v900, 0
    %905 = vmatprep.subr.mxu0 0.0
    %906 = vmatpush1.xpose.msra.mxu0 %v903
    %907 = vmatprep.subr.mxu0 0.0
    %908 = vmatpush1.xpose.msra.mxu0 0.0
    %909 = vmatprep.subr.mxu0 0.0
    %910 = vmatpush1.xpose.msra.mxu0 0.0
    %911 = vmatprep.subr.mxu0 0.0
    %912 = vmatpush1.xpose.msra.mxu0 0.0
    %913 = vmatprep.subr.mxu0 0.0
    %914 = vmatpush1.xpose.msra.mxu0 0.0
    %915 = vmatprep.subr.mxu0 0.0
    %916 = vmatpush1.xpose.msra.mxu0 0.0
    %917 = vmatprep.subr.mxu0 0.0
    %918 = vmatpush1.xpose.msra.mxu0 0.0
    %919 = vmatprep.subr.mxu0 0.0
    %920 = vmatpush1.xpose.msra.mxu0 0.0
    %921 = vmatprep.subr.mxu0 0.0
    %922 = vmatpush1.xpose.msra.mxu0 0.0
    %923 = vmatprep.subr.mxu0 0.0
    %924 = vmatpush1.xpose.msra.mxu0 0.0
    %925 = vmatprep.subr.mxu0 0.0
    %926 = vmatpush1.xpose.msra.mxu0 0.0
    %927 = vmatprep.subr.mxu0 0.0
    %928 = vmatpush1.xpose.msra.mxu0 0.0
    %929 = vmatprep.subr.mxu0 0.0
    %930 = vmatpush1.xpose.msra.mxu0 0.0
    %931 = vmatprep.subr.mxu0 0.0
    %932 = vmatpush1.xpose.msra.mxu0 0.0
    %933 = vmatprep.subr.mxu0 0.0
    %934 = vmatpush1.xpose.msra.mxu0 0.0
    %935 = vmatprep.subr.mxu0 0.0
    %936 = vmatpush1.xpose.msra.mxu0 0.0
    %937 = vmatprep.subr.mxu0 0.0
    %938 = vmatpush1.xpose.msra.mxu0 0.0
    %939 = vmatprep.subr.mxu0 0.0
    %940 = vmatpush1.xpose.msra.mxu0 0.0
    %941 = vmatprep.subr.mxu0 0.0
    %942 = vmatpush1.xpose.msra.mxu0 0.0
    %943 = vmatprep.subr.mxu0 0.0
    %944 = vmatpush1.xpose.msra.mxu0 0.0
    %945 = vmatprep.subr.mxu0 0.0
    %946 = vmatpush1.xpose.msra.mxu0 0.0
    %947 = vmatprep.subr.mxu0 0.0
    %948 = vmatpush1.xpose.msra.mxu0 0.0
    %949 = vmatprep.subr.mxu0 0.0
    %950 = vmatpush1.xpose.msra.mxu0 0.0
    %951 = vmatprep.subr.mxu0 0.0
    %952 = vmatpush1.xpose.msra.mxu0 0.0
    %953 = vmatprep.subr.mxu0 0.0
    %954 = vmatpush1.xpose.msra.mxu0 0.0
    %955 = vmatprep.subr.mxu0 0.0
    %956 = vmatpush1.xpose.msra.mxu0 0.0
    %957 = vmatprep.subr.mxu0 0.0
    %958 = vmatpush1.xpose.msra.mxu0 0.0
    %959 = vmatprep.subr.mxu0 0.0
    %960 = vmatpush1.xpose.msra.mxu0 0.0
    %961 = vmatprep.subr.mxu0 0.0
    %962 = vmatpush1.xpose.msra.mxu0 0.0
    %963 = vmatprep.subr.mxu0 0.0
    %964 = vmatpush1.xpose.msra.mxu0 0.0
    %965 = vmatprep.subr.mxu0 0.0
    %966 = vmatpush1.xpose.msra.mxu0 0.0
    %967 = vmatprep.subr.mxu0 0.0
    %968 = vmatpush1.xpose.msra.mxu0 0.0
    %969 = vmatprep.mubr.f32.mxu0 0.0
    %970 = vmatmul.mubr.f32.gmra.mrb[0].mxu0 %v901
    %v971 = vpop.f32.mrb[0].mxu0
    %v972 = vadd.f32 0.0, %v971
    %v973 = vpop.f32.mrb[0].mxu0
    %974 = vdwg.mxu0
    %v975 = vsel %vm120, %v972, -inf
    %976 = vmax.xlane.f32.xlu0 %v975
    %v977 = vpop.xlane.xlu0 %976
    %v978 = vsub.f32 %v972, %v977
    %v979 = vmul.f32 %v978, 1.442695
    %v980 = vpow.pop %v979
    %v981 = vsel %vm120, %v980, 0.0
    %982 = vadd.xlane.f32.xlu0 %v981
    %v983 = vpop.xlane.xlu0 %982
    %985 = vrot.lane.b32.xlu0 %v894, 64
    %v986 = vpop.permute.xlu0 %985
    %v989 = vsel %vm120, %v980, 0
    %991 = vmatprep.subr.mxu0 0.0
    %992 = vmatpush1.msra.mxu0 %v986
    %993 = vmatprep.subr.mxu0 0.0
    %994 = vmatpush1.msra.mxu0 0.0
    %995 = vmatprep.subr.mxu0 0.0
    %996 = vmatpush1.msra.mxu0 0.0
    %997 = vmatprep.subr.mxu0 0.0
    %998 = vmatpush1.msra.mxu0 0.0
    %999 = vmatprep.subr.mxu0 0.0
    %1000 = vmatpush1.msra.mxu0 0.0
    %1001 = vmatprep.subr.mxu0 0.0
    %1002 = vmatpush1.msra.mxu0 0.0
    %1003 = vmatprep.subr.mxu0 0.0
    %1004 = vmatpush1.msra.mxu0 0.0
    %1005 = vmatprep.subr.mxu0 0.0
    %1006 = vmatpush1.msra.mxu0 0.0
    %1007 = vmatprep.subr.mxu0 0.0
    %1008 = vmatpush1.msra.mxu0 0.0
    %1009 = vmatprep.subr.mxu0 0.0
    %1010 = vmatpush1.msra.mxu0 0.0
    %1011 = vmatprep.subr.mxu0 0.0
    %1012 = vmatpush1.msra.mxu0 0.0
    %1013 = vmatprep.subr.mxu0 0.0
    %1014 = vmatpush1.msra.mxu0 0.0
    %1015 = vmatprep.subr.mxu0 0.0
    %1016 = vmatpush1.msra.mxu0 0.0
    %1017 = vmatprep.subr.mxu0 0.0
    %1018 = vmatpush1.msra.mxu0 0.0
    %1019 = vmatprep.subr.mxu0 0.0
    %1020 = vmatpush1.msra.mxu0 0.0
    %1021 = vmatprep.subr.mxu0 0.0
    %1022 = vmatpush1.msra.mxu0 0.0
    %1023 = vmatprep.subr.mxu0 0.0
    %1024 = vmatpush1.msra.mxu0 0.0
    %1025 = vmatprep.subr.mxu0 0.0
    %1026 = vmatpush1.msra.mxu0 0.0
    %1027 = vmatprep.subr.mxu0 0.0
    %1028 = vmatpush1.msra.mxu0 0.0
    %1029 = vmatprep.subr.mxu0 0.0
    %1030 = vmatpush1.msra.mxu0 0.0
    %1031 = vmatprep.subr.mxu0 0.0
    %1032 = vmatpush1.msra.mxu0 0.0
    %1033 = vmatprep.subr.mxu0 0.0
    %1034 = vmatpush1.msra.mxu0 0.0
    %1035 = vmatprep.subr.mxu0 0.0
    %1036 = vmatpush1.msra.mxu0 0.0
    %1037 = vmatprep.subr.mxu0 0.0
    %1038 = vmatpush1.msra.mxu0 0.0
    %1039 = vmatprep.subr.mxu0 0.0
    %1040 = vmatpush1.msra.mxu0 0.0
    %1041 = vmatprep.subr.mxu0 0.0
    %1042 = vmatpush1.msra.mxu0 0.0
    %1043 = vmatprep.subr.mxu0 0.0
    %1044 = vmatpush1.msra.mxu0 0.0
    %1045 = vmatprep.subr.mxu0 0.0
    %1046 = vmatpush1.msra.mxu0 0.0
    %1047 = vmatprep.subr.mxu0 0.0
    %1048 = vmatpush1.msra.mxu0 0.0
    %1049 = vmatprep.subr.mxu0 0.0
    %1050 = vmatpush1.msra.mxu0 0.0
    %1051 = vmatprep.subr.mxu0 0.0
    %1052 = vmatpush1.msra.mxu0 0.0
    %1053 = vmatprep.subr.mxu0 0.0
    %1054 = vmatpush1.msra.mxu0 0.0
    %1055 = vmatprep.mubr.f32.mxu0 0.0
    %1056 = vmatmul.mubr.f32.gmra.mrb[0].mxu0 %v989
    %v1057 = vpop.f32.mrb[0].mxu0
    %v1058 = vadd.f32 0.0, %v1057
    %v1059 = vpop.f32.mrb[0].mxu0
    %1060 = vdwg.mxu0
    %v1061 = vrcp.pop %v983
    %v1062 = vmul.f32 %v1058, %v1061
    %1064 = vrot.lane.b32.xlu0 %v1062, 64
    %v1065 = vpop.permute.xlu0 %1064
    %1067 = vst.msk [vmem:[#allocation2 + $0x10] sm:$0xff] %vm382, %v1065
    %v1068 = vld [vmem:[%s0 + $0x38] sm:$0xff]
    %v1069 = vmul.f32 %v1068, 0.125
    %v1070 = vld [vmem:[%s0 + $0x48] sm:$0xff]
    %v1071 = vld [vmem:[%s0 + $0x58] sm:$0xff]
    %v1073 = vsel %vm43, %v1069, 0
    %v1076 = vsel %vm43, %v1070, 0
    %1078 = vmatprep.subr.mxu0 0.0
    %1079 = vmatpush1.xpose.msra.mxu0 %v1076
    %1080 = vmatprep.subr.mxu0 0.0
    %1081 = vmatpush1.xpose.msra.mxu0 0.0
    %1082 = vmatprep.subr.mxu0 0.0
    %1083 = vmatpush1.xpose.msra.mxu0 0.0
    %1084 = vmatprep.subr.mxu0 0.0
    %1085 = vmatpush1.xpose.msra.mxu0 0.0
    %1086 = vmatprep.subr.mxu0 0.0
    %1087 = vmatpush1.xpose.msra.mxu0 0.0
    %1088 = vmatprep.subr.mxu0 0.0
    %1089 = vmatpush1.xpose.msra.mxu0 0.0
    %1090 = vmatprep.subr.mxu0 0.0
    %1091 = vmatpush1.xpose.msra.mxu0 0.0
    %1092 = vmatprep.subr.mxu0 0.0
    %1093 = vmatpush1.xpose.msra.mxu0 0.0
    %1094 = vmatprep.subr.mxu0 0.0
    %1095 = vmatpush1.xpose.msra.mxu0 0.0
    %1096 = vmatprep.subr.mxu0 0.0
    %1097 = vmatpush1.xpose.msra.mxu0 0.0
    %1098 = vmatprep.subr.mxu0 0.0
    %1099 = vmatpush1.xpose.msra.mxu0 0.0
    %1100 = vmatprep.subr.mxu0 0.0
    %1101 = vmatpush1.xpose.msra.mxu0 0.0
    %1102 = vmatprep.subr.mxu0 0.0
    %1103 = vmatpush1.xpose.msra.mxu0 0.0
    %1104 = vmatprep.subr.mxu0 0.0
    %1105 = vmatpush1.xpose.msra.mxu0 0.0
    %1106 = vmatprep.subr.mxu0 0.0
    %1107 = vmatpush1.xpose.msra.mxu0 0.0
    %1108 = vmatprep.subr.mxu0 0.0
    %1109 = vmatpush1.xpose.msra.mxu0 0.0
    %1110 = vmatprep.subr.mxu0 0.0
    %1111 = vmatpush1.xpose.msra.mxu0 0.0
    %1112 = vmatprep.subr.mxu0 0.0
    %1113 = vmatpush1.xpose.msra.mxu0 0.0
    %1114 = vmatprep.subr.mxu0 0.0
    %1115 = vmatpush1.xpose.msra.mxu0 0.0
    %1116 = vmatprep.subr.mxu0 0.0
    %1117 = vmatpush1.xpose.msra.mxu0 0.0
    %1118 = vmatprep.subr.mxu0 0.0
    %1119 = vmatpush1.xpose.msra.mxu0 0.0
    %1120 = vmatprep.subr.mxu0 0.0
    %1121 = vmatpush1.xpose.msra.mxu0 0.0
    %1122 = vmatprep.subr.mxu0 0.0
    %1123 = vmatpush1.xpose.msra.mxu0 0.0
    %1124 = vmatprep.subr.mxu0 0.0
    %1125 = vmatpush1.xpose.msra.mxu0 0.0
    %1126 = vmatprep.subr.mxu0 0.0
    %1127 = vmatpush1.xpose.msra.mxu0 0.0
    %1128 = vmatprep.subr.mxu0 0.0
    %1129 = vmatpush1.xpose.msra.mxu0 0.0
    %1130 = vmatprep.subr.mxu0 0.0
    %1131 = vmatpush1.xpose.msra.mxu0 0.0
    %1132 = vmatprep.subr.mxu0 0.0
    %1133 = vmatpush1.xpose.msra.mxu0 0.0
    %1134 = vmatprep.subr.mxu0 0.0
    %1135 = vmatpush1.xpose.msra.mxu0 0.0
    %1136 = vmatprep.subr.mxu0 0.0
    %1137 = vmatpush1.xpose.msra.mxu0 0.0
    %1138 = vmatprep.subr.mxu0 0.0
    %1139 = vmatpush1.xpose.msra.mxu0 0.0
    %1140 = vmatprep.subr.mxu0 0.0
    %1141 = vmatpush1.xpose.msra.mxu0 0.0
    %1142 = vmatprep.mubr.f32.mxu0 0.0
    %1143 = vmatmul.mubr.f32.gmra.mrb[0].mxu0 %v1073
    %v1144 = vpop.f32.mrb[0].mxu0
    %v1145 = vadd.f32 0.0, %v1144
    %v1146 = vpop.f32.mrb[0].mxu0
    %1147 = vdwg.mxu0
    %v1148 = vsel %vm120, %v1145, -inf
    %1149 = vmax.xlane.f32.xlu0 %v1148
    %v1150 = vpop.xlane.xlu0 %1149
    %v1151 = vsub.f32 %v1145, %v1150
    %v1152 = vmul.f32 %v1151, 1.442695
    %v1153 = vpow.pop %v1152
    %v1154 = vsel %vm120, %v1153, 0.0
    %1155 = vadd.xlane.f32.xlu0 %v1154
    %v1156 = vpop.xlane.xlu0 %1155
    %v1158 = vsel %vm120, %v1153, 0
    %1160 = vmatprep.subr.mxu0 0.0
    %1161 = vmatpush1.msra.mxu0 %v1071
    %1162 = vmatprep.subr.mxu0 0.0
    %1163 = vmatpush1.msra.mxu0 0.0
    %1164 = vmatprep.subr.mxu0 0.0
    %1165 = vmatpush1.msra.mxu0 0.0
    %1166 = vmatprep.subr.mxu0 0.0
    %1167 = vmatpush1.msra.mxu0 0.0
    %1168 = vmatprep.subr.mxu0 0.0
    %1169 = vmatpush1.msra.mxu0 0.0
    %1170 = vmatprep.subr.mxu0 0.0
    %1171 = vmatpush1.msra.mxu0 0.0
    %1172 = vmatprep.subr.mxu0 0.0
    %1173 = vmatpush1.msra.mxu0 0.0
    %1174 = vmatprep.subr.mxu0 0.0
    %1175 = vmatpush1.msra.mxu0 0.0
    %1176 = vmatprep.subr.mxu0 0.0
    %1177 = vmatpush1.msra.mxu0 0.0
    %1178 = vmatprep.subr.mxu0 0.0
    %1179 = vmatpush1.msra.mxu0 0.0
    %1180 = vmatprep.subr.mxu0 0.0
    %1181 = vmatpush1.msra.mxu0 0.0
    %1182 = vmatprep.subr.mxu0 0.0
    %1183 = vmatpush1.msra.mxu0 0.0
    %1184 = vmatprep.subr.mxu0 0.0
    %1185 = vmatpush1.msra.mxu0 0.0
    %1186 = vmatprep.subr.mxu0 0.0
    %1187 = vmatpush1.msra.mxu0 0.0
    %1188 = vmatprep.subr.mxu0 0.0
    %1189 = vmatpush1.msra.mxu0 0.0
    %1190 = vmatprep.subr.mxu0 0.0
    %1191 = vmatpush1.msra.mxu0 0.0
    %1192 = vmatprep.subr.mxu0 0.0
    %1193 = vmatpush1.msra.mxu0 0.0
    %1194 = vmatprep.subr.mxu0 0.0
    %1195 = vmatpush1.msra.mxu0 0.0
    %1196 = vmatprep.subr.mxu0 0.0
    %1197 = vmatpush1.msra.mxu0 0.0
    %1198 = vmatprep.subr.mxu0 0.0
    %1199 = vmatpush1.msra.mxu0 0.0
    %1200 = vmatprep.subr.mxu0 0.0
    %1201 = vmatpush1.msra.mxu0 0.0
    %1202 = vmatprep.subr.mxu0 0.0
    %1203 = vmatpush1.msra.mxu0 0.0
    %1204 = vmatprep.subr.mxu0 0.0
    %1205 = vmatpush1.msra.mxu0 0.0
    %1206 = vmatprep.subr.mxu0 0.0
    %1207 = vmatpush1.msra.mxu0 0.0
    %1208 = vmatprep.subr.mxu0 0.0
    %1209 = vmatpush1.msra.mxu0 0.0
    %1210 = vmatprep.subr.mxu0 0.0
    %1211 = vmatpush1.msra.mxu0 0.0
    %1212 = vmatprep.subr.mxu0 0.0
    %1213 = vmatpush1.msra.mxu0 0.0
    %1214 = vmatprep.subr.mxu0 0.0
    %1215 = vmatpush1.msra.mxu0 0.0
    %1216 = vmatprep.subr.mxu0 0.0
    %1217 = vmatpush1.msra.mxu0 0.0
    %1218 = vmatprep.subr.mxu0 0.0
    %1219 = vmatpush1.msra.mxu0 0.0
    %1220 = vmatprep.subr.mxu0 0.0
    %1221 = vmatpush1.msra.mxu0 0.0
    %1222 = vmatprep.subr.mxu0 0.0
    %1223 = vmatpush1.msra.mxu0 0.0
    %1224 = vmatprep.mubr.f32.mxu0 0.0
    %1225 = vmatmul.mubr.f32.gmra.mrb[0].mxu0 %v1158
    %v1226 = vpop.f32.mrb[0].mxu0
    %v1227 = vadd.f32 0.0, %v1226
    %v1228 = vpop.f32.mrb[0].mxu0
    %1229 = vdwg.mxu0
    %v1230 = vrcp.pop %v1156
    %v1231 = vmul.f32 %v1227, %v1230
    %1232 = vst.msk [vmem:[#allocation2 + $0x18] sm:$0xff] %vm43, %v1231
    %v1233 = vld [vmem:[%s0 + $0x38] sm:$0xff]
    %v1234 = vmul.f32 %v1233, 0.125
    %v1235 = vld [vmem:[%s0 + $0x48] sm:$0xff]
    %v1236 = vld [vmem:[%s0 + $0x58] sm:$0xff]
    %1238 = vrot.lane.b32.xlu0 %v1234, 64
    %v1239 = vpop.permute.xlu0 %1238
    %1241 = vrot.lane.b32.xlu0 %v1235, 64
    %v1242 = vpop.permute.xlu0 %1241
    %v1243 = vsel %vm43, %v1239, 0
    %v1245 = vsel %vm43, %v1242, 0
    %1247 = vmatprep.subr.mxu0 0.0
    %1248 = vmatpush1.xpose.msra.mxu0 %v1245
    %1249 = vmatprep.subr.mxu0 0.0
    %1250 = vmatpush1.xpose.msra.mxu0 0.0
    %1251 = vmatprep.subr.mxu0 0.0
    %1252 = vmatpush1.xpose.msra.mxu0 0.0
    %1253 = vmatprep.subr.mxu0 0.0
    %1254 = vmatpush1.xpose.msra.mxu0 0.0
    %1255 = vmatprep.subr.mxu0 0.0
    %1256 = vmatpush1.xpose.msra.mxu0 0.0
    %1257 = vmatprep.subr.mxu0 0.0
    %1258 = vmatpush1.xpose.msra.mxu0 0.0
    %1259 = vmatprep.subr.mxu0 0.0
    %1260 = vmatpush1.xpose.msra.mxu0 0.0
    %1261 = vmatprep.subr.mxu0 0.0
    %1262 = vmatpush1.xpose.msra.mxu0 0.0
    %1263 = vmatprep.subr.mxu0 0.0
    %1264 = vmatpush1.xpose.msra.mxu0 0.0
    %1265 = vmatprep.subr.mxu0 0.0
    %1266 = vmatpush1.xpose.msra.mxu0 0.0
    %1267 = vmatprep.subr.mxu0 0.0
    %1268 = vmatpush1.xpose.msra.mxu0 0.0
    %1269 = vmatprep.subr.mxu0 0.0
    %1270 = vmatpush1.xpose.msra.mxu0 0.0
    %1271 = vmatprep.subr.mxu0 0.0
    %1272 = vmatpush1.xpose.msra.mxu0 0.0
    %1273 = vmatprep.subr.mxu0 0.0
    %1274 = vmatpush1.xpose.msra.mxu0 0.0
    %1275 = vmatprep.subr.mxu0 0.0
    %1276 = vmatpush1.xpose.msra.mxu0 0.0
    %1277 = vmatprep.subr.mxu0 0.0
    %1278 = vmatpush1.xpose.msra.mxu0 0.0
    %1279 = vmatprep.subr.mxu0 0.0
    %1280 = vmatpush1.xpose.msra.mxu0 0.0
    %1281 = vmatprep.subr.mxu0 0.0
    %1282 = vmatpush1.xpose.msra.mxu0 0.0
    %1283 = vmatprep.subr.mxu0 0.0
    %1284 = vmatpush1.xpose.msra.mxu0 0.0
    %1285 = vmatprep.subr.mxu0 0.0
    %1286 = vmatpush1.xpose.msra.mxu0 0.0
    %1287 = vmatprep.subr.mxu0 0.0
    %1288 = vmatpush1.xpose.msra.mxu0 0.0
    %1289 = vmatprep.subr.mxu0 0.0
    %1290 = vmatpush1.xpose.msra.mxu0 0.0
    %1291 = vmatprep.subr.mxu0 0.0
    %1292 = vmatpush1.xpose.msra.mxu0 0.0
    %1293 = vmatprep.subr.mxu0 0.0
    %1294 = vmatpush1.xpose.msra.mxu0 0.0
    %1295 = vmatprep.subr.mxu0 0.0
    %1296 = vmatpush1.xpose.msra.mxu0 0.0
    %1297 = vmatprep.subr.mxu0 0.0
    %1298 = vmatpush1.xpose.msra.mxu0 0.0
    %1299 = vmatprep.subr.mxu0 0.0
    %1300 = vmatpush1.xpose.msra.mxu0 0.0
    %1301 = vmatprep.subr.mxu0 0.0
    %1302 = vmatpush1.xpose.msra.mxu0 0.0
    %1303 = vmatprep.subr.mxu0 0.0
    %1304 = vmatpush1.xpose.msra.mxu0 0.0
    %1305 = vmatprep.subr.mxu0 0.0
    %1306 = vmatpush1.xpose.msra.mxu0 0.0
    %1307 = vmatprep.subr.mxu0 0.0
    %1308 = vmatpush1.xpose.msra.mxu0 0.0
    %1309 = vmatprep.subr.mxu0 0.0
    %1310 = vmatpush1.xpose.msra.mxu0 0.0
    %1311 = vmatprep.mubr.f32.mxu0 0.0
    %1312 = vmatmul.mubr.f32.gmra.mrb[0].mxu0 %v1243
    %v1313 = vpop.f32.mrb[0].mxu0
    %v1314 = vadd.f32 0.0, %v1313
    %v1315 = vpop.f32.mrb[0].mxu0
    %1316 = vdwg.mxu0
    %v1317 = vsel %vm120, %v1314, -inf
    %1318 = vmax.xlane.f32.xlu0 %v1317
    %v1319 = vpop.xlane.xlu0 %1318
    %v1320 = vsub.f32 %v1314, %v1319
    %v1321 = vmul.f32 %v1320, 1.442695
    %v1322 = vpow.pop %v1321
    %v1323 = vsel %vm120, %v1322, 0.0
    %1324 = vadd.xlane.f32.xlu0 %v1323
    %v1325 = vpop.xlane.xlu0 %1324
    %1327 = vrot.lane.b32.xlu0 %v1236, 64
    %v1328 = vpop.permute.xlu0 %1327
    %v1331 = vsel %vm120, %v1322, 0
    %1333 = vmatprep.subr.mxu0 0.0
    %1334 = vmatpush1.msra.mxu0 %v1328
    %1335 = vmatprep.subr.mxu0 0.0
    %1336 = vmatpush1.msra.mxu0 0.0
    %1337 = vmatprep.subr.mxu0 0.0
    %1338 = vmatpush1.msra.mxu0 0.0
    %1339 = vmatprep.subr.mxu0 0.0
    %1340 = vmatpush1.msra.mxu0 0.0
    %1341 = vmatprep.subr.mxu0 0.0
    %1342 = vmatpush1.msra.mxu0 0.0
    %1343 = vmatprep.subr.mxu0 0.0
    %1344 = vmatpush1.msra.mxu0 0.0
    %1345 = vmatprep.subr.mxu0 0.0
    %1346 = vmatpush1.msra.mxu0 0.0
    %1347 = vmatprep.subr.mxu0 0.0
    %1348 = vmatpush1.msra.mxu0 0.0
    %1349 = vmatprep.subr.mxu0 0.0
    %1350 = vmatpush1.msra.mxu0 0.0
    %1351 = vmatprep.subr.mxu0 0.0
    %1352 = vmatpush1.msra.mxu0 0.0
    %1353 = vmatprep.subr.mxu0 0.0
    %1354 = vmatpush1.msra.mxu0 0.0
    %1355 = vmatprep.subr.mxu0 0.0
    %1356 = vmatpush1.msra.mxu0 0.0
    %1357 = vmatprep.subr.mxu0 0.0
    %1358 = vmatpush1.msra.mxu0 0.0
    %1359 = vmatprep.subr.mxu0 0.0
    %1360 = vmatpush1.msra.mxu0 0.0
    %1361 = vmatprep.subr.mxu0 0.0
    %1362 = vmatpush1.msra.mxu0 0.0
    %1363 = vmatprep.subr.mxu0 0.0
    %1364 = vmatpush1.msra.mxu0 0.0
    %1365 = vmatprep.subr.mxu0 0.0
    %1366 = vmatpush1.msra.mxu0 0.0
    %1367 = vmatprep.subr.mxu0 0.0
    %1368 = vmatpush1.msra.mxu0 0.0
    %1369 = vmatprep.subr.mxu0 0.0
    %1370 = vmatpush1.msra.mxu0 0.0
    %1371 = vmatprep.subr.mxu0 0.0
    %1372 = vmatpush1.msra.mxu0 0.0
    %1373 = vmatprep.subr.mxu0 0.0
    %1374 = vmatpush1.msra.mxu0 0.0
    %1375 = vmatprep.subr.mxu0 0.0
    %1376 = vmatpush1.msra.mxu0 0.0
    %1377 = vmatprep.subr.mxu0 0.0
    %1378 = vmatpush1.msra.mxu0 0.0
    %1379 = vmatprep.subr.mxu0 0.0
    %1380 = vmatpush1.msra.mxu0 0.0
    %1381 = vmatprep.subr.mxu0 0.0
    %1382 = vmatpush1.msra.mxu0 0.0
    %1383 = vmatprep.subr.mxu0 0.0
    %1384 = vmatpush1.msra.mxu0 0.0
    %1385 = vmatprep.subr.mxu0 0.0
    %1386 = vmatpush1.msra.mxu0 0.0
    %1387 = vmatprep.subr.mxu0 0.0
    %1388 = vmatpush1.msra.mxu0 0.0
    %1389 = vmatprep.subr.mxu0 0.0
    %1390 = vmatpush1.msra.mxu0 0.0
    %1391 = vmatprep.subr.mxu0 0.0
    %1392 = vmatpush1.msra.mxu0 0.0
    %1393 = vmatprep.subr.mxu0 0.0
    %1394 = vmatpush1.msra.mxu0 0.0
    %1395 = vmatprep.subr.mxu0 0.0
    %1396 = vmatpush1.msra.mxu0 0.0
    %1397 = vmatprep.mubr.f32.mxu0 0.0
    %1398 = vmatmul.mubr.f32.gmra.mrb[0].mxu0 %v1331
    %v1399 = vpop.f32.mrb[0].mxu0
    %v1400 = vadd.f32 0.0, %v1399
    %v1401 = vpop.f32.mrb[0].mxu0
    %1402 = vdwg.mxu0
    %v1403 = vrcp.pop %v1325
    %v1404 = vmul.f32 %v1400, %v1403
    %1406 = vrot.lane.b32.xlu0 %v1404, 64
    %v1407 = vpop.permute.xlu0 %1406
    %1409 = vst.msk [vmem:[#allocation2 + $0x18] sm:$0xff] %vm382, %v1407
    %v1410 = vld [vmem:[#allocation2] sm:$0xff]
    %v1411 = vld [vmem:[#allocation2 + $0x8] sm:$0xff]
    %v1412 = vld [vmem:[#allocation2 + $0x10] sm:$0xff]
    %v1413 = vld [vmem:[#allocation2 + $0x18] sm:$0xff]
    %v1414 = vld [vmem:[#allocation3] sm:$0xff]
    %v1415 = vld [vmem:[#allocation3 + $0x8] sm:$0xff]
    %v1416 = vld [vmem:[#allocation3 + $0x10] sm:$0xff]
    %v1417 = vld [vmem:[#allocation3 + $0x18] sm:$0xff]
    %v1418 = vld [vmem:[#allocation3 + $0x20] sm:$0xff]
    %v1419 = vld [vmem:[#allocation3 + $0x28] sm:$0xff]
    %v1420 = vld [vmem:[#allocation3 + $0x30] sm:$0xff]
    %v1421 = vld [vmem:[#allocation3 + $0x38] sm:$0xff]
    %v1422 = vld [vmem:[#allocation3 + $0x40] sm:$0xff]
    %v1423 = vld [vmem:[#allocation3 + $0x48] sm:$0xff]
    %v1424 = vld [vmem:[#allocation3 + $0x50] sm:$0xff]
    %v1425 = vld [vmem:[#allocation3 + $0x58] sm:$0xff]
    %v1426 = vld [vmem:[#allocation3 + $0x60] sm:$0xff]
    %v1427 = vld [vmem:[#allocation3 + $0x68] sm:$0xff]
    %v1428 = vld [vmem:[#allocation3 + $0x70] sm:$0xff]
    %v1429 = vld [vmem:[#allocation3 + $0x78] sm:$0xff]
    %v1430 = vld [vmem:[#allocation3 + $0x80] sm:$0xff]
    %v1431 = vld [vmem:[#allocation3 + $0x88] sm:$0xff]
    %v1432 = vld [vmem:[#allocation3 + $0x90] sm:$0xff]
    %v1433 = vld [vmem:[#allocation3 + $0x98] sm:$0xff]
    %v1434 = vld [vmem:[#allocation3 + $0xa0] sm:$0xff]
    %v1435 = vld [vmem:[#allocation3 + $0xa8] sm:$0xff]
    %v1436 = vld [vmem:[#allocation3 + $0xb0] sm:$0xff]
    %v1437 = vld [vmem:[#allocation3 + $0xb8] sm:$0xff]
    %v1438 = vld [vmem:[#allocation3 + $0xc0] sm:$0xff]
    %v1439 = vld [vmem:[#allocation3 + $0xc8] sm:$0xff]
    %v1440 = vld [vmem:[#allocation3 + $0xd0] sm:$0xff]
    %v1441 = vld [vmem:[#allocation3 + $0xd8] sm:$0xff]
    %v1442 = vld [vmem:[#allocation3 + $0xe0] sm:$0xff]
    %v1443 = vld [vmem:[#allocation3 + $0xe8] sm:$0xff]
    %v1444 = vld [vmem:[#allocation3 + $0xf0] sm:$0xff]
    %v1445 = vld [vmem:[#allocation3 + $0xf8] sm:$0xff]
    %v1446 = vld [vmem:[#allocation3 + $0x100] sm:$0xff]
    %v1447 = vld [vmem:[#allocation3 + $0x108] sm:$0xff]
    %v1448 = vld [vmem:[#allocation3 + $0x110] sm:$0xff]
    %v1449 = vld [vmem:[#allocation3 + $0x118] sm:$0xff]
    %v1450 = vld [vmem:[#allocation3 + $0x120] sm:$0xff]
    %v1451 = vld [vmem:[#allocation3 + $0x128] sm:$0xff]
    %v1452 = vld [vmem:[#allocation3 + $0x130] sm:$0xff]
    %v1453 = vld [vmem:[#allocation3 + $0x138] sm:$0xff]
    %v1454 = vld [vmem:[#allocation3 + $0x140] sm:$0xff]
    %v1455 = vld [vmem:[#allocation3 + $0x148] sm:$0xff]
    %v1456 = vld [vmem:[#allocation3 + $0x150] sm:$0xff]
    %v1457 = vld [vmem:[#allocation3 + $0x158] sm:$0xff]
    %v1458 = vld [vmem:[#allocation3 + $0x160] sm:$0xff]
    %v1459 = vld [vmem:[#allocation3 + $0x168] sm:$0xff]
    %v1460 = vld [vmem:[#allocation3 + $0x170] sm:$0xff]
    %v1461 = vld [vmem:[#allocation3 + $0x178] sm:$0xff]
    %v1462 = vld [vmem:[#allocation3 + $0x180] sm:$0xff]
    %v1463 = vld [vmem:[#allocation3 + $0x188] sm:$0xff]
    %v1464 = vld [vmem:[#allocation3 + $0x190] sm:$0xff]
    %v1465 = vld [vmem:[#allocation3 + $0x198] sm:$0xff]
    %v1466 = vld [vmem:[#allocation3 + $0x1a0] sm:$0xff]
    %v1467 = vld [vmem:[#allocation3 + $0x1a8] sm:$0xff]
    %v1468 = vld [vmem:[#allocation3 + $0x1b0] sm:$0xff]
    %v1469 = vld [vmem:[#allocation3 + $0x1b8] sm:$0xff]
    %v1470 = vld [vmem:[#allocation3 + $0x1c0] sm:$0xff]
    %v1471 = vld [vmem:[#allocation3 + $0x1c8] sm:$0xff]
    %v1472 = vld [vmem:[#allocation3 + $0x1d0] sm:$0xff]
    %v1473 = vld [vmem:[#allocation3 + $0x1d8] sm:$0xff]
    %v1474 = vld [vmem:[#allocation3 + $0x1e0] sm:$0xff]
    %v1475 = vld [vmem:[#allocation3 + $0x1e8] sm:$0xff]
    %v1476 = vld [vmem:[#allocation3 + $0x1f0] sm:$0xff]
    %v1477 = vld [vmem:[#allocation3 + $0x1f8] sm:$0xff]
    %v1478 = vld [vmem:[%s3] sm:$0x3]
    %v1480 = vlaneseq
    %v1481 = vshrl.u32 %v1480, 7
    %v1482 = vsub.s32 0, %v1481
    %v1483 = vrot.slane %v1478, %v1482
    %v1484 = vlaneseq
    %v1485 = vshrl.u32 %v1484, 7
    %v1486 = vsub.s32 1, %v1485
    %v1487 = vrot.slane %v1478, %v1486
    %1490 = vmatprep.subr.mxu0 %v1415
    %1491 = vmatpush1.msra.mxu0 %v1414
    %1492 = vmatprep.subr.mxu0 %v1417
    %1493 = vmatpush1.msra.mxu0 %v1416
    %1494 = vmatprep.subr.mxu0 %v1419
    %1495 = vmatpush1.msra.mxu0 %v1418
    %1496 = vmatprep.subr.mxu0 %v1421
    %1497 = vmatpush1.msra.mxu0 %v1420
    %1498 = vmatprep.subr.mxu0 %v1423
    %1499 = vmatpush1.msra.mxu0 %v1422
    %1500 = vmatprep.subr.mxu0 %v1425
    %1501 = vmatpush1.msra.mxu0 %v1424
    %1502 = vmatprep.subr.mxu0 %v1427
    %1503 = vmatpush1.msra.mxu0 %v1426
    %1504 = vmatprep.subr.mxu0 %v1429
    %1505 = vmatpush1.msra.mxu0 %v1428
    %1506 = vmatprep.subr.mxu0 %v1431
    %1507 = vmatpush1.msra.mxu0 %v1430
    %1508 = vmatprep.subr.mxu0 %v1433
    %1509 = vmatpush1.msra.mxu0 %v1432
    %1510 = vmatprep.subr.mxu0 %v1435
    %1511 = vmatpush1.msra.mxu0 %v1434
    %1512 = vmatprep.subr.mxu0 %v1437
    %1513 = vmatpush1.msra.mxu0 %v1436
    %1514 = vmatprep.subr.mxu0 %v1439
    %1515 = vmatpush1.msra.mxu0 %v1438
    %1516 = vmatprep.subr.mxu0 %v1441
    %1517 = vmatpush1.msra.mxu0 %v1440
    %1518 = vmatprep.subr.mxu0 %v1443
    %1519 = vmatpush1.msra.mxu0 %v1442
    %1520 = vmatprep.subr.mxu0 %v1445
    %1521 = vmatpush1.msra.mxu0 %v1444
    %1522 = vmatprep.subr.mxu0 %v1447
    %1523 = vmatpush1.msra.mxu0 %v1446
    %1524 = vmatprep.subr.mxu0 %v1449
    %1525 = vmatpush1.msra.mxu0 %v1448
    %1526 = vmatprep.subr.mxu0 %v1451
    %1527 = vmatpush1.msra.mxu0 %v1450
    %1528 = vmatprep.subr.mxu0 %v1453
    %1529 = vmatpush1.msra.mxu0 %v1452
    %1530 = vmatprep.subr.mxu0 %v1455
    %1531 = vmatpush1.msra.mxu0 %v1454
    %1532 = vmatprep.subr.mxu0 %v1457
    %1533 = vmatpush1.msra.mxu0 %v1456
    %1534 = vmatprep.subr.mxu0 %v1459
    %1535 = vmatpush1.msra.mxu0 %v1458
    %1536 = vmatprep.subr.mxu0 %v1461
    %1537 = vmatpush1.msra.mxu0 %v1460
    %1538 = vmatprep.subr.mxu0 %v1463
    %1539 = vmatpush1.msra.mxu0 %v1462
    %1540 = vmatprep.subr.mxu0 %v1465
    %1541 = vmatpush1.msra.mxu0 %v1464
    %1542 = vmatprep.subr.mxu0 %v1467
    %1543 = vmatpush1.msra.mxu0 %v1466
    %1544 = vmatprep.subr.mxu0 %v1469
    %1545 = vmatpush1.msra.mxu0 %v1468
    %1546 = vmatprep.subr.mxu0 %v1471
    %1547 = vmatpush1.msra.mxu0 %v1470
    %1548 = vmatprep.subr.mxu0 %v1473
    %1549 = vmatpush1.msra.mxu0 %v1472
    %1550 = vmatprep.subr.mxu0 %v1475
    %1551 = vmatpush1.msra.mxu0 %v1474
    %1552 = vmatprep.subr.mxu0 %v1477
    %1553 = vmatpush1.msra.mxu0 %v1476
    %1554 = vmatprep.mubr.f32.mxu0 %v1411
    %1555 = vmatmul.mubr.f32.gmra.mrb[0].mxu0 %v1410
    %v1556 = vpop.f32.mrb[0].mxu0
    %v1557 = vadd.f32 %v1483, %v1556
    %v1558 = vpop.f32.mrb[0].mxu0
    %v1559 = vadd.f32 %v1487, %v1558
    %1560 = vmatprep.mubr.f32.mxu0 %v1413
    %1561 = vmatmul.mubr.f32.gmra.mrb[0].mxu0 %v1412
    %v1562 = vpop.f32.mrb[0].mxu0
    %v1563 = vadd.f32 %v1483, %v1562
    %v1564 = vpop.f32.mrb[0].mxu0
    %v1565 = vadd.f32 %v1487, %v1564
    %1566 = vdwg.mxu0
    %1567 = vst [vmem:[%s6] sm:$0xff] %v1557
    %1568 = vst [vmem:[%s6 + $0x8] sm:$0xff] %v1559
    %1569 = vst [vmem:[%s6 + $0x10] sm:$0xff] %v1563
    %1570 = vst [vmem:[%s6 + $0x18] sm:$0xff] %v1565
    %v1571 = vld [vmem:[%s1] sm:$0xff]
    %v1572 = vld [vmem:[%s1 + $0x8] sm:$0xff]
    %v1573 = vld [vmem:[%s1 + $0x10] sm:$0xff]
    %v1574 = vld [vmem:[%s1 + $0x18] sm:$0xff]
    %v1575 = vadd.f32 %v1557, %v1571
    %v1576 = vadd.f32 %v1559, %v1572
    %v1577 = vadd.f32 %v1563, %v1573
    %v1578 = vadd.f32 %v1565, %v1574
    %v1579 = vadd.f32 %v1575, %v1576
    %1580 = vadd.xlane.f32.xlu0 %v1579
    %v1581 = vpop.xlane.xlu0 %1580
    %v1582 = vadd.f32 %v1577, %v1578
    %1583 = vadd.xlane.f32.xlu0 %v1582
    %v1584 = vpop.xlane.xlu0 %1583
    %v1585 = vrcp.pop 256.0
    %v1586 = vmul.f32 %v1581, %v1585
    %v1587 = vmul.f32 %v1584, %v1585
    %v1588 = vsub.f32 %v1575, %v1586
    %v1589 = vsub.f32 %v1576, %v1586
    %v1590 = vsub.f32 %v1577, %v1587
    %v1591 = vsub.f32 %v1578, %v1587
    %v1592 = vmul.f32 %v1588, %v1588
    %v1593 = vmul.f32 %v1589, %v1589
    %v1594 = vmul.f32 %v1590, %v1590
    %v1595 = vmul.f32 %v1591, %v1591
    %v1596 = vadd.f32 %v1592, %v1593
    %1597 = vadd.xlane.f32.xlu0 %v1596
    %v1598 = vpop.xlane.xlu0 %1597
    %v1599 = vadd.f32 %v1594, %v1595
    %1600 = vadd.xlane.f32.xlu0 %v1599
    %v1601 = vpop.xlane.xlu0 %1600
    %v1602 = vmul.f32 %v1598, %v1585
    %v1603 = vmul.f32 %v1601, %v1585
    %v1604 = vadd.f32 %v1602, 1e-05
    %v1605 = vadd.f32 %v1603, 1e-05
    %v1606 = vrsqrt.pop %v1604
    %v1607 = vrsqrt.pop %v1605
    %v1608 = vmul.f32 %v1588, %v1606
    %v1609 = vmul.f32 %v1589, %v1606
    %v1610 = vmul.f32 %v1590, %v1607
    %v1611 = vmul.f32 %v1591, %v1607
    %v1612 = vld [vmem:[%s4] sm:$0x3]
    %v1614 = vlaneseq
    %v1615 = vshrl.u32 %v1614, 7
    %v1616 = vsub.s32 0, %v1615
    %v1617 = vrot.slane %v1612, %v1616
    %v1618 = vlaneseq
    %v1619 = vshrl.u32 %v1618, 7
    %v1620 = vsub.s32 1, %v1619
    %v1621 = vrot.slane %v1612, %v1620
    %v1624 = vmul.f32 %v1608, %v1617
    %v1625 = vmul.f32 %v1609, %v1621
    %v1626 = vmul.f32 %v1610, %v1617
    %v1627 = vmul.f32 %v1611, %v1621
    %v1628 = vld [vmem:[%s5] sm:$0x3]
    %v1630 = vlaneseq
    %v1631 = vshrl.u32 %v1630, 7
    %v1632 = vsub.s32 0, %v1631
    %v1633 = vrot.slane %v1628, %v1632
    %v1634 = vlaneseq
    %v1635 = vshrl.u32 %v1634, 7
    %v1636 = vsub.s32 1, %v1635
    %v1637 = vrot.slane %v1628, %v1636
    %v1640 = vadd.f32 %v1624, %v1633
    %v1641 = vadd.f32 %v1625, %v1637
    %v1642 = vadd.f32 %v1626, %v1633
    %v1643 = vadd.f32 %v1627, %v1637
    %1644 = vst [vmem:[%s7] sm:$0xff] %v1640
    %1645 = vst [vmem:[%s7 + $0x8] sm:$0xff] %v1641
    %1646 = vst [vmem:[%s7 + $0x10] sm:$0xff] %v1642
    %1647 = vst [vmem:[%s7 + $0x18] sm:$0xff] %v1643
    // Predicated region
    $region30: #{sent_mha_attn.4} parent=1 // pred_check
      _
    $region31: #{sent_mha_attn.4} parent=1 // pred_check_branch
      %1649 = sbr.rel (0) target = $region33
    $region32: #{sent_mha_attn.4} parent=1 // pred_region
      _
    $region33: #{sent_mha_attn.4} parent=1 // pred_fallthru
      _
    // Predicated region
    $region34: #{sent_mha_attn.4} parent=1 // pred_check
      _
    $region35: #{sent_mha_attn.4} parent=1 // pred_check_branch
      %1651 = sbr.rel (0) target = $region37
    $region36: #{sent_mha_attn.4} parent=1 // pred_region
      _
    $region37: #{sent_mha_attn.4} parent=1 // pred_fallthru
      _
    // Predicated region
    $region38: #{sent_mha_attn.4} parent=1 // pred_check
      _
    $region39: #{sent_mha_attn.4} parent=1 // pred_check_branch
      %1653 = sbr.rel (0) target = $region41
    $region40: #{sent_mha_attn.4} parent=1 // pred_region
      _
    $region41: #{sent_mha_attn.4} parent=1 // pred_fallthru
      _
    // Predicated region
    $region42: #{sent_mha_attn.4} parent=1 // pred_check
      _
    $region43: #{sent_mha_attn.4} parent=1 // pred_check_branch
      %1655 = sbr.rel (0) target = $region45
    $region44: #{sent_mha_attn.4} parent=1 // pred_region
      _
    $region45: #{sent_mha_attn.4} parent=1 // pred_fallthru
      _
    %1656 = vsyncpa [#allocation4], 1

</llo_original>
